<compile_context>
chip_gen: v7x
topology: tpu7x:2x2x1
jax: 0.10.0
libtpu: 0.0.40
codegen_flags: <defaults>
</compile_context>

<pallas_src>
import functools

import numpy as np
import jax
import jax.numpy as jnp
from jax import lax
from jax.experimental import pallas as pl
from jax.experimental.pallas import tpu as pltpu

BN_EPS = 1e-5


# ---------------------------------------------------------------------------
# Small helpers
# ---------------------------------------------------------------------------
def _full_spec(a):
    """BlockSpec that delivers the whole (small) parameter array every grid step."""
    zeros = (0,) * a.ndim
    return pl.BlockSpec(a.shape, lambda g, _z=zeros: _z)


def _nearest_upsample_matrix(hf, wf, hc, wc):
    """0/1 matrix S with (S @ t_flat) == nearest-upsample(t), flattened row-major."""
    rows = np.arange(hf * wf)
    yf, xf = rows // wf, rows % wf
    cols = (yf * hc // hf) * wc + (xf * wc // wf)
    s = np.zeros((hf * wf, hc * wc), np.float32)
    s[rows, cols] = 1.0
    return jnp.asarray(s)


def _conv3x3_im2col(pad_val, w_ref, scale_ref, bias_ref, *,
                    out_h, out_w, cin, stride, relu):
    """3x3 conv over an already zero-padded (H+2, W+2, Cin) value as ONE im2col
    MXU dot (bf16 operands, f32 accumulate), fused with folded BN (+ ReLU).

    stride 1 or 2 is folded into the patch extraction.  Returns (out_h*out_w, Cout) f32.
    """
    wins = []
    for kh in range(3):
        for kw in range(3):
            if stride == 1:
                win = pad_val[kh:kh + out_h, kw:kw + out_w, :]
            else:
                win = pad_val[kh:kh + stride * out_h, kw:kw + stride * out_w, :]
                win = win.reshape(out_h, stride, out_w, stride, cin)[:, 0, :, 0, :]
            wins.append(win)
    patches = jnp.concatenate(wins, axis=-1).reshape(out_h * out_w, 9 * cin)
    y = jnp.dot(patches.astype(jnp.bfloat16), w_ref[...],
                preferred_element_type=jnp.float32)
    y = y * scale_ref[0] + bias_ref[0]            # folded BatchNorm (inference)
    if relu:
        y = jnp.maximum(y, 0.0)
    return y


# ---------------------------------------------------------------------------
# Kernel 1: fused branch block  conv3x3-BN-ReLU-conv3x3-BN   (grid over batch)
# ---------------------------------------------------------------------------
def _branch_kernel(x_ref, w1_ref, s1_ref, b1_ref, w2_ref, s2_ref, b2_ref,
                   o_ref, pad_ref, *, H, W, C):
    # zero-filled halo scratch; interior <- input (no host-side jnp.pad)
    pad_ref[...] = jnp.zeros_like(pad_ref)
    pad_ref[1:H + 1, 1:W + 1, :] = x_ref[0]
    h1 = _conv3x3_im2col(pad_ref[...], w1_ref, s1_ref, b1_ref,
                         out_h=H, out_w=W, cin=C, stride=1, relu=True)
    # intermediate stays in VMEM: re-use the (still zero-bordered) pad scratch
    pad_ref[1:H + 1, 1:W + 1, :] = h1.reshape(H, W, C)
    h2 = _conv3x3_im2col(pad_ref[...], w2_ref, s2_ref, b2_ref,
                         out_h=H, out_w=W, cin=C, stride=1, relu=False)
    o_ref[...] = h2.reshape(1, H, W, C)


def branch_block(x, w1f, s1, b1, w2f, s2, b2):
    n, h, w, c = x.shape
    kernel = functools.partial(_branch_kernel, H=h, W=w, C=c)
    return pl.pallas_call(
        kernel,
        out_shape=jax.ShapeDtypeStruct((n, h, w, c), jnp.float32),
        grid=(n,),
        in_specs=[pl.BlockSpec((1, h, w, c), lambda g: (g, 0, 0, 0)),
                  _full_spec(w1f), _full_spec(s1), _full_spec(b1),
                  _full_spec(w2f), _full_spec(s2), _full_spec(b2)],
        out_specs=pl.BlockSpec((1, h, w, c), lambda g: (g, 0, 0, 0)),
        scratch_shapes=[pltpu.VMEM((h + 2, w + 2, c), jnp.float32)],
        compiler_params=pltpu.CompilerParams(dimension_semantics=("parallel",)),
    )(x, w1f, s1, b1, w2f, s2, b2)


# ---------------------------------------------------------------------------
# Kernel 2: fused output i = ReLU( sum_j fuse_ij(y_j) )   (grid over batch)
#   j == i : identity
#   j  > i : conv1x1 + BN at coarse res, then nearest upsample via 0/1 matmul
#   j  < i : chain of stride-2 conv3x3 + BN (+ReLU), stride folded into im2col
# ---------------------------------------------------------------------------
def _fused_output(ys, terms):
    nb = len(terms)
    n = ys[0].shape[0]
    i_out = next(j for j, t in enumerate(terms) if t[0] == 'identity')
    Hi, Wi, Ci = ys[i_out].shape[1:]

    in_arrays = list(ys)
    in_specs = [pl.BlockSpec((1,) + y.shape[1:], lambda g: (g, 0, 0, 0)) for y in ys]
    scratch_shapes = []
    plan = []
    for j, t in enumerate(terms):
        if t[0] == 'identity':
            plan.append(('identity',))
        elif t[0] == 'up':
            _, w, s, b = t
            hc, wc, cc = ys[j].shape[1:]
            S = _nearest_upsample_matrix(Hi, Wi, hc, wc)
            p0 = len(in_arrays)
            in_arrays += [w, s, b, S]
            in_specs += [_full_spec(w), _full_spec(s), _full_spec(b), _full_spec(S)]
            plan.append(('up', p0, hc, wc, cc))
        else:                                   # 'down'
            st_plan = []
            hin, win, cin = ys[j].shape[1:]
            for (w, s, b, relu) in t[1]:
                cout = w.shape[1]
                p0 = len(in_arrays)
                in_arrays += [w, s, b]
                in_specs += [_full_spec(w), _full_spec(s), _full_spec(b)]
                sidx = len(scratch_shapes)
                scratch_shapes.append(pltpu.VMEM((hin + 2, win + 2, cin), jnp.float32))
                st_plan.append((p0, sidx, hin, win, cin, cout, relu))
                hin, win, cin = hin // 2, win // 2, cout
            plan.append(('down', tuple(st_plan)))
    n_in = len(in_arrays)

    def kernel(*refs):
        out_ref = refs[n_in]
        scratches = refs[n_in + 1:]
        acc = jnp.zeros((Hi * Wi, Ci), jnp.float32)
        for j, entry in enumerate(plan):
            y_ref = refs[j]
            if entry[0] == 'identity':
                acc = acc + y_ref[0].reshape(Hi * Wi, Ci)
            elif entry[0] == 'up':
                _, p0, hc, wc, cc = entry
                w_ref, s_ref, b_ref, S_ref = (refs[p0], refs[p0 + 1],
                                              refs[p0 + 2], refs[p0 + 3])
                t = jnp.dot(y_ref[0].reshape(hc * wc, cc).astype(jnp.bfloat16),
                            w_ref[...], preferred_element_type=jnp.float32)
                t = t * s_ref[0] + b_ref[0]
                # nearest upsample as a 0/1 selection matmul (MXU, no relayout)
                acc = acc + jnp.dot(S_ref[...], t, preferred_element_type=jnp.float32)
            else:                               # 'down'
                cur = y_ref[0]
                for (p0, sidx, hin, win, cin, cout, relu) in entry[1]:
                    w_ref, s_ref, b_ref = refs[p0], refs[p0 + 1], refs[p0 + 2]
                    pad = scratches[sidx]
                    pad[...] = jnp.zeros_like(pad)
                    pad[1:hin + 1, 1:win + 1, :] = cur
                    cur = _conv3x3_im2col(pad[...], w_ref, s_ref, b_ref,
                                          out_h=hin // 2, out_w=win // 2, cin=cin,
                                          stride=2, relu=relu)
                    cur = cur.reshape(hin // 2, win // 2, cout)
                acc = acc + cur.reshape(Hi * Wi, Ci)
        out_ref[...] = jnp.maximum(acc, 0.0).reshape(1, Hi, Wi, Ci)

    return pl.pallas_call(
        kernel,
        out_shape=jax.ShapeDtypeStruct((n, Hi, Wi, Ci), jnp.float32),
        grid=(n,),
        in_specs=in_specs,
        out_specs=pl.BlockSpec((1, Hi, Wi, Ci), lambda g: (g, 0, 0, 0)),
        scratch_shapes=scratch_shapes,
        compiler_params=pltpu.CompilerParams(dimension_semantics=("parallel",)),
    )(*in_arrays)


# ---------------------------------------------------------------------------
# Deterministic parameter construction (mirrors torch module's __init__ shapes)
# ---------------------------------------------------------------------------
def _init_conv(key, k, cin, cout):
    fan_in = k * k * cin
    return (jax.random.normal(key, (k, k, cin, cout), jnp.float32)
            * np.sqrt(2.0 / fan_in)).astype(jnp.float32)


def _init_bn(key, c):
    k1, k2, k3, k4 = jax.random.split(key, 4)
    gamma = 1.0 + 0.1 * jax.random.normal(k1, (c,), jnp.float32)
    beta = 0.1 * jax.random.normal(k2, (c,), jnp.float32)
    mean = 0.1 * jax.random.normal(k3, (c,), jnp.float32)
    var = 1.0 + 0.1 * jnp.abs(jax.random.normal(k4, (c,), jnp.float32))
    scale = gamma / jnp.sqrt(var + BN_EPS)
    bias = beta - mean * scale
    return scale.reshape(1, c), bias.reshape(1, c)


class HighResolutionModulePallas:
    def __init__(self, channels, num_branches=3, multi_scale_output=True, *, key):
        self.channels = channels
        self.num_branches = num_branches
        self.multi_scale_output = multi_scale_output
        keys = iter(jax.random.split(key, 256))

        # branches: conv3x3 -> BN -> ReLU -> conv3x3 -> BN
        self.branches = []
        for i in range(num_branches):
            c = channels[i]
            w1 = _init_conv(next(keys), 3, c, c)
            s1, b1 = _init_bn(next(keys), c)
            w2 = _init_conv(next(keys), 3, c, c)
            s2, b2 = _init_bn(next(keys), c)
            self.branches.append(dict(
                w1=w1, s1=s1, b1=b1, w2=w2, s2=s2, b2=b2,
                w1f=w1.reshape(9 * c, c).astype(jnp.bfloat16),
                w2f=w2.reshape(9 * c, c).astype(jnp.bfloat16)))

        # fuse layers
        self.fuse = {}
        if num_branches > 1:
            n_out = num_branches if multi_scale_output else 1
            for i in range(n_out):
                for j in range(num_branches):
                    if j > i:
                        w = _init_conv(next(keys), 1, channels[j], channels[i])
                        s, b = _init_bn(next(keys), channels[i])
                        self.fuse[(i, j)] = dict(
                            kind='up', w=w, s=s, b=b, factor=2 ** (j - i),
                            wf=w.reshape(channels[j], channels[i]).astype(jnp.bfloat16))
                    elif j < i:
                        stages = []
                        cin = channels[j]
                        for _ in range(i - j - 1):
                            w = _init_conv(next(keys), 3, cin, cin)
                            s, b = _init_bn(next(keys), cin)
                            stages.append(dict(
                                w=w, s=s, b=b, relu=True,
                                wf=w.reshape(9 * cin, cin).astype(jnp.bfloat16)))
                        w = _init_conv(next(keys), 3, cin, channels[i])
                        s, b = _init_bn(next(keys), channels[i])
                        stages.append(dict(
                            w=w, s=s, b=b, relu=False,
                            wf=w.reshape(9 * cin, channels[i]).astype(jnp.bfloat16)))
                        self.fuse[(i, j)] = dict(kind='down', stages=stages)

    def __call__(self, xs_nchw):
        nb = self.num_branches
        xs = [jnp.transpose(x, (0, 2, 3, 1)).astype(jnp.float32) for x in xs_nchw]

        # per-branch fused conv-BN-ReLU-conv-BN (one pallas_call each)
        ys = []
        for i in range(nb):
            p = self.branches[i]
            ys.append(branch_block(xs[i], p['w1f'], p['s1'], p['b1'],
                                   p['w2f'], p['s2'], p['b2']))

        if nb == 1:
            return [jnp.transpose(ys[0], (0, 3, 1, 2))]

        n_out = nb if self.multi_scale_output else 1
        outs = []
        for i in range(n_out):
            terms = []
            for j in range(nb):
                if j == i:
                    terms.append(('identity',))
                elif j > i:
                    f = self.fuse[(i, j)]
                    terms.append(('up', f['wf'], f['s'], f['b']))
                else:
                    f = self.fuse[(i, j)]
                    terms.append(('down', [(st['wf'], st['s'], st['b'], st['relu'])
                                           for st in f['stages']]))
            outs.append(_fused_output(ys, terms))
        return [jnp.transpose(o, (0, 3, 1, 2)) for o in outs]


# ---------------------------------------------------------------------------
# Pure-JAX reference (XLA conv, same bf16-operand/f32-accumulate quantization)
# ---------------------------------------------------------------------------
def _ref_conv_bn(x, w_hwio, scale, bias, *, stride, relu):
    k = w_hwio.shape[0]
    pad = (k - 1) // 2
    y = lax.conv_general_dilated(
        x.astype(jnp.bfloat16), w_hwio.astype(jnp.bfloat16),
        window_strides=(stride, stride), padding=[(pad, pad), (pad, pad)],
        dimension_numbers=('NHWC', 'HWIO', 'NHWC'),
        preferred_element_type=jnp.float32)
    y = y * scale + bias
    return jnp.maximum(y, 0.0) if relu else y


def upsample_nearest(x, factor):
    return jnp.repeat(jnp.repeat(x, factor, axis=1), factor, axis=2)


def reference_forward(module, xs_nchw):
    nb = module.num_branches
    xs = [jnp.transpose(x, (0, 2, 3, 1)).astype(jnp.float32) for x in xs_nchw]
    ys = []
    for i in range(nb):
        p = module.branches[i]
        h = _ref_conv_bn(xs[i], p['w1'], p['s1'], p['b1'], stride=1, relu=True)
        h = _ref_conv_bn(h, p['w2'], p['s2'], p['b2'], stride=1, relu=False)
        ys.append(h)
    if nb == 1:
        return [jnp.transpose(ys[0], (0, 3, 1, 2))]
    n_out = nb if module.multi_scale_output else 1
    outs = []
    for i in range(n_out):
        acc = None
        for j in range(nb):
            if j == i:
                t = ys[j]
            elif j > i:
                f = module.fuse[(i, j)]
                t = _ref_conv_bn(ys[j], f['w'], f['s'], f['b'], stride=1, relu=False)
                t = upsample_nearest(t, f['factor'])
            else:
                f = module.fuse[(i, j)]
                t = ys[j]
                for st in f['stages']:
                    t = _ref_conv_bn(t, st['w'], st['s'], st['b'],
                                     stride=2, relu=st['relu'])
            acc = t if acc is None else acc + t
        outs.append(jnp.maximum(acc, 0.0))
    return [jnp.transpose(o, (0, 3, 1, 2)) for o in outs]


if __name__ == "__main__":
    channels = [4, 8, 16]
    num_branches = 3

    key = jax.random.PRNGKey(0)
    kx0, kx1, kx2 = jax.random.split(key, 3)
    # NCHW inputs, HRNet-style pyramid: spatial halves, channels double.
    x0 = jax.random.normal(kx0, (2, 4, 16, 16), jnp.float32)
    x1 = jax.random.normal(kx1, (2, 8, 8, 8), jnp.float32)
    x2 = jax.random.normal(kx2, (2, 16, 4, 4), jnp.float32)
    xs = [x0, x1, x2]

    module = HighResolutionModulePallas(channels, num_branches, True,
                                        key=jax.random.PRNGKey(1234))

    outs = jax.block_until_ready(module(xs))
    refs = jax.block_until_ready(reference_forward(module, xs))

    assert [tuple(o.shape) for o in outs] == [(2, 4, 16, 16), (2, 8, 8, 8), (2, 16, 4, 4)]
    for o, r in zip(outs, refs):
        np.testing.assert_allclose(np.asarray(o), np.asarray(r),
                                   rtol=2e-2, atol=2e-2)

    print("KERNEL_OK")
</pallas_src>

<mosaic_0001>
module attributes {stable_mosaic.version = 11 : i64} {
  func.func @_branch_kernel(%arg0: i32, %arg1: memref<1x16x16x4xf32, #tpu.memory_space<vmem>>, %arg2: memref<36x4xbf16, #tpu.memory_space<vmem>>, %arg3: memref<1x4xf32, #tpu.memory_space<vmem>>, %arg4: memref<1x4xf32, #tpu.memory_space<vmem>>, %arg5: memref<36x4xbf16, #tpu.memory_space<vmem>>, %arg6: memref<1x4xf32, #tpu.memory_space<vmem>>, %arg7: memref<1x4xf32, #tpu.memory_space<vmem>>, %arg8: memref<1x16x16x4xf32, #tpu.memory_space<vmem>>, %arg9: memref<18x18x4xf32, #tpu.memory_space<vmem>>) attributes {dimension_semantics = [#tpu.dimension_semantics<parallel>], iteration_bounds = array<i64: 2>, scalar_prefetch = 0 : i64, scratch_operands = 1 : i64, tpu.core_type = #tpu.core_type<tc>, window_params = [{transform_indices = @transform_0, window_bounds = array<i64: 1, 16, 16, 4>}, {pipeline_mode = #tpu.pipeline_mode<synchronous>, transform_indices = @transform_1, window_bounds = array<i64: 36, 4>}, {pipeline_mode = #tpu.pipeline_mode<synchronous>, transform_indices = @transform_2, window_bounds = array<i64: 1, 4>}, {pipeline_mode = #tpu.pipeline_mode<synchronous>, transform_indices = @transform_3, window_bounds = array<i64: 1, 4>}, {pipeline_mode = #tpu.pipeline_mode<synchronous>, transform_indices = @transform_4, window_bounds = array<i64: 36, 4>}, {pipeline_mode = #tpu.pipeline_mode<synchronous>, transform_indices = @transform_5, window_bounds = array<i64: 1, 4>}, {pipeline_mode = #tpu.pipeline_mode<synchronous>, transform_indices = @transform_6, window_bounds = array<i64: 1, 4>}, {transform_indices = @transform_7, window_bounds = array<i64: 1, 16, 16, 4>}]} {
    %cst = arith.constant 0.000000e+00 : f32
    %0 = vector.broadcast %cst : f32 to vector<18x18x4xf32>
    %c0 = arith.constant 0 : index
    %c0_0 = arith.constant 0 : index
    %c0_1 = arith.constant 0 : index
    %1 = vector.load %arg9[%c0, %c0_0, %c0_1] : memref<18x18x4xf32, #tpu.memory_space<vmem>>, vector<18x18x4xf32>
    tpu.vector_store %arg9[%c0, %c0_0, %c0_1], %0 {strides = array<i32>} : memref<18x18x4xf32, #tpu.memory_space<vmem>>, vector<18x18x4xf32>,
    %c0_2 = arith.constant 0 : index
    %c0_3 = arith.constant 0 : index
    %c0_4 = arith.constant 0 : index
    %c0_5 = arith.constant 0 : index
    %2 = vector.load %arg1[%c0_2, %c0_3, %c0_4, %c0_5] : memref<1x16x16x4xf32, #tpu.memory_space<vmem>>, vector<1x16x16x4xf32>
    %3 = vector.shape_cast %2 : vector<1x16x16x4xf32> to vector<16x16x4xf32>
    %c1 = arith.constant 1 : index
    %c1_6 = arith.constant 1 : index
    %c0_7 = arith.constant 0 : index
    %4 = vector.load %arg9[%c1, %c1_6, %c0_7] : memref<18x18x4xf32, #tpu.memory_space<vmem>>, vector<16x16x4xf32>
    tpu.vector_store %arg9[%c1, %c1_6, %c0_7], %3 {strides = array<i32>} : memref<18x18x4xf32, #tpu.memory_space<vmem>>, vector<16x16x4xf32>,
    %c0_8 = arith.constant 0 : index
    %c0_9 = arith.constant 0 : index
    %c0_10 = arith.constant 0 : index
    %5 = vector.load %arg9[%c0_8, %c0_9, %c0_10] : memref<18x18x4xf32, #tpu.memory_space<vmem>>, vector<18x18x4xf32>
    %6 = vector.extract_strided_slice %5 {offsets = [0, 0, 0], sizes = [16, 16, 4], strides = [1, 1, 1]} : vector<18x18x4xf32> to vector<16x16x4xf32>
    %7 = vector.extract_strided_slice %5 {offsets = [0, 1, 0], sizes = [16, 16, 4], strides = [1, 1, 1]} : vector<18x18x4xf32> to vector<16x16x4xf32>
    %8 = vector.extract_strided_slice %5 {offsets = [0, 2, 0], sizes = [16, 16, 4], strides = [1, 1, 1]} : vector<18x18x4xf32> to vector<16x16x4xf32>
    %9 = vector.extract_strided_slice %5 {offsets = [1, 0, 0], sizes = [16, 16, 4], strides = [1, 1, 1]} : vector<18x18x4xf32> to vector<16x16x4xf32>
    %10 = vector.extract_strided_slice %5 {offsets = [1, 1, 0], sizes = [16, 16, 4], strides = [1, 1, 1]} : vector<18x18x4xf32> to vector<16x16x4xf32>
    %11 = vector.extract_strided_slice %5 {offsets = [1, 2, 0], sizes = [16, 16, 4], strides = [1, 1, 1]} : vector<18x18x4xf32> to vector<16x16x4xf32>
    %12 = vector.extract_strided_slice %5 {offsets = [2, 0, 0], sizes = [16, 16, 4], strides = [1, 1, 1]} : vector<18x18x4xf32> to vector<16x16x4xf32>
    %13 = vector.extract_strided_slice %5 {offsets = [2, 1, 0], sizes = [16, 16, 4], strides = [1, 1, 1]} : vector<18x18x4xf32> to vector<16x16x4xf32>
    %14 = vector.extract_strided_slice %5 {offsets = [2, 2, 0], sizes = [16, 16, 4], strides = [1, 1, 1]} : vector<18x18x4xf32> to vector<16x16x4xf32>
    %15 = tpu.concatenate %6, %7, %8, %9, %10, %11, %12, %13, %14 in 2 : vector<16x16x4xf32>, vector<16x16x4xf32>, vector<16x16x4xf32>, vector<16x16x4xf32>, vector<16x16x4xf32>, vector<16x16x4xf32>, vector<16x16x4xf32>, vector<16x16x4xf32>, vector<16x16x4xf32> -> vector<16x16x36xf32>
    %16 = vector.shape_cast %15 : vector<16x16x36xf32> to vector<256x36xf32>
    %17 = arith.truncf %16 : vector<256x36xf32> to vector<256x36xbf16>
    %c0_11 = arith.constant 0 : index
    %c0_12 = arith.constant 0 : index
    %18 = vector.load %arg2[%c0_11, %c0_12] : memref<36x4xbf16, #tpu.memory_space<vmem>>, vector<36x4xbf16>
    %cst_13 = arith.constant dense<0.000000e+00> : vector<256x4xf32>
    %19 = tpu.matmul %17, %18, %cst_13 {dimension_numbers = #tpu.dot_dimension_numbers<[1], [0], [0], [1], [0, 0, 1, 1], [], []>} : vector<256x36xbf16>, vector<36x4xbf16>, vector<256x4xf32> -> vector<256x4xf32>
    %c0_14 = arith.constant 0 : index
    %c0_15 = arith.constant 0 : index
    %20 = vector.load %arg3[%c0_14, %c0_15] : memref<1x4xf32, #tpu.memory_space<vmem>>, vector<1x4xf32>
    %21 = vector.shape_cast %20 : vector<1x4xf32> to vector<4xf32>
    %22 = vector.shape_cast %21 : vector<4xf32> to vector<1x4xf32>
    %23 = vector.broadcast %22 : vector<1x4xf32> to vector<256x4xf32>
    %24 = arith.mulf %19, %23 : vector<256x4xf32>
    %c0_16 = arith.constant 0 : index
    %c0_17 = arith.constant 0 : index
    %25 = vector.load %arg4[%c0_16, %c0_17] : memref<1x4xf32, #tpu.memory_space<vmem>>, vector<1x4xf32>
    %26 = vector.shape_cast %25 : vector<1x4xf32> to vector<4xf32>
    %27 = vector.shape_cast %26 : vector<4xf32> to vector<1x4xf32>
    %28 = vector.broadcast %27 : vector<1x4xf32> to vector<256x4xf32>
    %29 = arith.addf %24, %28 : vector<256x4xf32>
    %cst_18 = arith.constant 0.000000e+00 : f32
    %30 = vector.broadcast %cst_18 : f32 to vector<256x4xf32>
    %31 = arith.maximumf %29, %30 : vector<256x4xf32>
    %32 = vector.shape_cast %31 : vector<256x4xf32> to vector<16x16x4xf32>
    %c1_19 = arith.constant 1 : index
    %c1_20 = arith.constant 1 : index
    %c0_21 = arith.constant 0 : index
    %33 = vector.load %arg9[%c1_19, %c1_20, %c0_21] : memref<18x18x4xf32, #tpu.memory_space<vmem>>, vector<16x16x4xf32>
    tpu.vector_store %arg9[%c1_19, %c1_20, %c0_21], %32 {strides = array<i32>} : memref<18x18x4xf32, #tpu.memory_space<vmem>>, vector<16x16x4xf32>,
    %c0_22 = arith.constant 0 : index
    %c0_23 = arith.constant 0 : index
    %c0_24 = arith.constant 0 : index
    %34 = vector.load %arg9[%c0_22, %c0_23, %c0_24] : memref<18x18x4xf32, #tpu.memory_space<vmem>>, vector<18x18x4xf32>
    %35 = vector.extract_strided_slice %34 {offsets = [0, 0, 0], sizes = [16, 16, 4], strides = [1, 1, 1]} : vector<18x18x4xf32> to vector<16x16x4xf32>
    %36 = vector.extract_strided_slice %34 {offsets = [0, 1, 0], sizes = [16, 16, 4], strides = [1, 1, 1]} : vector<18x18x4xf32> to vector<16x16x4xf32>
    %37 = vector.extract_strided_slice %34 {offsets = [0, 2, 0], sizes = [16, 16, 4], strides = [1, 1, 1]} : vector<18x18x4xf32> to vector<16x16x4xf32>
    %38 = vector.extract_strided_slice %34 {offsets = [1, 0, 0], sizes = [16, 16, 4], strides = [1, 1, 1]} : vector<18x18x4xf32> to vector<16x16x4xf32>
    %39 = vector.extract_strided_slice %34 {offsets = [1, 1, 0], sizes = [16, 16, 4], strides = [1, 1, 1]} : vector<18x18x4xf32> to vector<16x16x4xf32>
    %40 = vector.extract_strided_slice %34 {offsets = [1, 2, 0], sizes = [16, 16, 4], strides = [1, 1, 1]} : vector<18x18x4xf32> to vector<16x16x4xf32>
    %41 = vector.extract_strided_slice %34 {offsets = [2, 0, 0], sizes = [16, 16, 4], strides = [1, 1, 1]} : vector<18x18x4xf32> to vector<16x16x4xf32>
    %42 = vector.extract_strided_slice %34 {offsets = [2, 1, 0], sizes = [16, 16, 4], strides = [1, 1, 1]} : vector<18x18x4xf32> to vector<16x16x4xf32>
    %43 = vector.extract_strided_slice %34 {offsets = [2, 2, 0], sizes = [16, 16, 4], strides = [1, 1, 1]} : vector<18x18x4xf32> to vector<16x16x4xf32>
    %44 = tpu.concatenate %35, %36, %37, %38, %39, %40, %41, %42, %43 in 2 : vector<16x16x4xf32>, vector<16x16x4xf32>, vector<16x16x4xf32>, vector<16x16x4xf32>, vector<16x16x4xf32>, vector<16x16x4xf32>, vector<16x16x4xf32>, vector<16x16x4xf32>, vector<16x16x4xf32> -> vector<16x16x36xf32>
    %45 = vector.shape_cast %44 : vector<16x16x36xf32> to vector<256x36xf32>
    %46 = arith.truncf %45 : vector<256x36xf32> to vector<256x36xbf16>
    %c0_25 = arith.constant 0 : index
    %c0_26 = arith.constant 0 : index
    %47 = vector.load %arg5[%c0_25, %c0_26] : memref<36x4xbf16, #tpu.memory_space<vmem>>, vector<36x4xbf16>
    %cst_27 = arith.constant dense<0.000000e+00> : vector<256x4xf32>
    %48 = tpu.matmul %46, %47, %cst_27 {dimension_numbers = #tpu.dot_dimension_numbers<[1], [0], [0], [1], [0, 0, 1, 1], [], []>} : vector<256x36xbf16>, vector<36x4xbf16>, vector<256x4xf32> -> vector<256x4xf32>
    %c0_28 = arith.constant 0 : index
    %c0_29 = arith.constant 0 : index
    %49 = vector.load %arg6[%c0_28, %c0_29] : memref<1x4xf32, #tpu.memory_space<vmem>>, vector<1x4xf32>
    %50 = vector.shape_cast %49 : vector<1x4xf32> to vector<4xf32>
    %51 = vector.shape_cast %50 : vector<4xf32> to vector<1x4xf32>
    %52 = vector.broadcast %51 : vector<1x4xf32> to vector<256x4xf32>
    %53 = arith.mulf %48, %52 : vector<256x4xf32>
    %c0_30 = arith.constant 0 : index
    %c0_31 = arith.constant 0 : index
    %54 = vector.load %arg7[%c0_30, %c0_31] : memref<1x4xf32, #tpu.memory_space<vmem>>, vector<1x4xf32>
    %55 = vector.shape_cast %54 : vector<1x4xf32> to vector<4xf32>
    %56 = vector.shape_cast %55 : vector<4xf32> to vector<1x4xf32>
    %57 = vector.broadcast %56 : vector<1x4xf32> to vector<256x4xf32>
    %58 = arith.addf %53, %57 : vector<256x4xf32>
    %59 = vector.shape_cast %58 : vector<256x4xf32> to vector<1x16x16x4xf32>
    %c0_32 = arith.constant 0 : index
    %c0_33 = arith.constant 0 : index
    %c0_34 = arith.constant 0 : index
    %c0_35 = arith.constant 0 : index
    %60 = vector.load %arg8[%c0_32, %c0_33, %c0_34, %c0_35] : memref<1x16x16x4xf32, #tpu.memory_space<vmem>>, vector<1x16x16x4xf32>
    tpu.vector_store %arg8[%c0_32, %c0_33, %c0_34, %c0_35], %59 {strides = array<i32>} : memref<1x16x16x4xf32, #tpu.memory_space<vmem>>, vector<1x16x16x4xf32>,
    return
  }
  func.func @transform_0(%arg0: i32) -> (i32, i32, i32, i32) {
    %c0_i32 = arith.constant 0 : i32
    %c0_i32_0 = arith.constant 0 : i32
    %c0_i32_1 = arith.constant 0 : i32
    %c0_i32_2 = arith.constant 0 : i32
    return %arg0, %c0_i32, %c0_i32_0, %c0_i32_1 : i32, i32, i32, i32
  }
  func.func @transform_1(%arg0: i32) -> (i32, i32) {
    %c0_i32 = arith.constant 0 : i32
    %c0_i32_0 = arith.constant 0 : i32
    %c0_i32_1 = arith.constant 0 : i32
    return %c0_i32, %c0_i32_0 : i32, i32
  }
  func.func @transform_2(%arg0: i32) -> (i32, i32) {
    %c0_i32 = arith.constant 0 : i32
    %c0_i32_0 = arith.constant 0 : i32
    %c0_i32_1 = arith.constant 0 : i32
    return %c0_i32, %c0_i32_0 : i32, i32
  }
  func.func @transform_3(%arg0: i32) -> (i32, i32) {
    %c0_i32 = arith.constant 0 : i32
    %c0_i32_0 = arith.constant 0 : i32
    %c0_i32_1 = arith.constant 0 : i32
    return %c0_i32, %c0_i32_0 : i32, i32
  }
  func.func @transform_4(%arg0: i32) -> (i32, i32) {
    %c0_i32 = arith.constant 0 : i32
    %c0_i32_0 = arith.constant 0 : i32
    %c0_i32_1 = arith.constant 0 : i32
    return %c0_i32, %c0_i32_0 : i32, i32
  }
  func.func @transform_5(%arg0: i32) -> (i32, i32) {
    %c0_i32 = arith.constant 0 : i32
    %c0_i32_0 = arith.constant 0 : i32
    %c0_i32_1 = arith.constant 0 : i32
    return %c0_i32, %c0_i32_0 : i32, i32
  }
  func.func @transform_6(%arg0: i32) -> (i32, i32) {
    %c0_i32 = arith.constant 0 : i32
    %c0_i32_0 = arith.constant 0 : i32
    %c0_i32_1 = arith.constant 0 : i32
    return %c0_i32, %c0_i32_0 : i32, i32
  }
  func.func @transform_7(%arg0: i32) -> (i32, i32, i32, i32) {
    %c0_i32 = arith.constant 0 : i32
    %c0_i32_0 = arith.constant 0 : i32
    %c0_i32_1 = arith.constant 0 : i32
    %c0_i32_2 = arith.constant 0 : i32
    return %arg0, %c0_i32, %c0_i32_0, %c0_i32_1 : i32, i32, i32, i32
  }
}

</mosaic_0001>

<llo_original>
// kernel: tpu_custom_call.1
$region0: #{tpu_custom_call.1}
  #allocation0 [shape = 'u32[]', space=smem, size = 0x4, offset = 0x4, fixed_abs, tag = 'smem constant byte address 0x4 - core index']
  #allocation1 [shape = 'u32[144,128]{1,0:T(1,128)}', space=vmem, size = 0x12000, scoped, tag = 'internal scratch']
  #allocation2 [shape = 'f32[18,18,4]{2,1,0:T(8,128)}', space=vmem, size = 0x36000, scoped, tag = 'scratch operand']
  %s0 = inlined_call_operand.vmem [shape: f32[2,16,16,4], index: 0, kind: input, shape index: {}]
  %s1 = inlined_call_operand.vmem [shape: bf16[36,4], index: 1, kind: input, shape index: {}]
  %s2 = inlined_call_operand.vmem [shape: f32[1,4], index: 2, kind: input, shape index: {}]
  %s3 = inlined_call_operand.vmem [shape: f32[1,4], index: 3, kind: input, shape index: {}]
  %s4 = inlined_call_operand.vmem [shape: bf16[36,4], index: 4, kind: input, shape index: {}]
  %s5 = inlined_call_operand.vmem [shape: f32[1,4], index: 5, kind: input, shape index: {}]
  %s6 = inlined_call_operand.vmem [shape: f32[1,4], index: 6, kind: input, shape index: {}]
  %s7 = inlined_call_operand.vmem [shape: f32[2,16,16,4], index: 7, kind: output, shape index: {}]
  %s8 = sld [smem:[#allocation0]]
  $region61: #{tpu_custom_call.1} parent=0
    _
  %s10 = ssub.s32 1, %s8
  %s11 = scalar_select 0, %s10, %s8
  loop: start=0, step=1, limit=4
  $region2: #{tpu_custom_call.1} parent=0 // loop_pre_header
    _
  $region3: #{tpu_custom_call.1} parent=0 // loop_header
    %s13 = sphi 0, %s17
    %p14 = scmp.ge.s32.totalorder %s13, 4
    %s23 = sphi 0, %s25
    %s26 = sphi 0, %s23
    %s27 = sphi 0, %s26
    %s43 = sphi 0, %s27
    %s47 = sphi 0, %s47
    %s49 = sphi 0, %s47
    %s50 = sphi 0, %s49
    %s64 = sphi 0, %s50
    %s68 = sphi 0, %s68
    %s70 = sphi 0, %s68
    %s71 = sphi 0, %s70
    %s85 = sphi 0, %s71
    %s89 = sphi 0, %s89
    %s91 = sphi 0, %s89
    %s92 = sphi 0, %s91
    %s106 = sphi 0, %s92
    %s110 = sphi 0, %s110
    %s112 = sphi 0, %s110
    %s113 = sphi 0, %s112
    %s127 = sphi 0, %s113
    %s131 = sphi 0, %s131
    %s133 = sphi 0, %s131
    %s134 = sphi 0, %s133
    %s148 = sphi 0, %s134
    %s152 = sphi 0, %s152
    %s154 = sphi 0, %s152
    %s155 = sphi 0, %s154
    %s169 = sphi 0, %s155
    %s175 = sphi 0, %s177
    %s178 = sphi 0, %s175
    %s179 = sphi 0, %s178
    %s195 = sphi 0, %s179
  $region4: #{tpu_custom_call.1} parent=0 // loop_header_branch
    %16 = sbr.rel (%p14) target = $region8
  $region5: #{tpu_custom_call.1} parent=0 // loop_body
    %s18 = ssub.s32 %s13, 1
    %s19 = ssub.s32 %s13, 2
    %s20 = sadd.s32 %s13, 1
    %s21 = ssub.s32 %s13, %s20
    %p22 = scmp.eq.s32.totalorder %s21, 0
    %s24 = sadd.s32 %s23, 1
    %s25 = scalar_select %p22, %s23, %s24
    %p28 = pneg %p22
    %p29 = scmp.eq.s32.totalorder %s13, 1
    %p30 = por %p28, %p29
    %p31 = scmp.ne.s32.totalorder %s23, %s26
    %p32 = scmp.eq.s32.totalorder %s13, 0
    %p33 = por %p31, %p32
    %p34 = scmp.ne.s32.totalorder %s23, %s26
    %p35 = scmp.eq.s32.totalorder %s18, 1
    %p36 = por %p34, %p35
    %p37 = scmp.ne.s32.totalorder %s26, %s27
    %p38 = scmp.eq.s32.totalorder %s18, 0
    %p39 = por %p37, %p38
    %p40 = scmp.ne.s32.totalorder %s26, %s27
    %p41 = scmp.eq.s32.totalorder %s19, 1
    %p42 = por %p40, %p41
    %p44 = scmp.ne.s32.totalorder %s27, %s43
    %p45 = scmp.eq.s32.totalorder %s19, 0
    %p46 = por %p44, %p45
    %s48 = sadd.s32 %s47, 1
    %p51 = scmp.eq.s32.totalorder %s13, 1
    %p52 = scmp.ne.s32.totalorder %s47, %s49
    %p53 = scmp.eq.s32.totalorder %s13, 0
    %p54 = por %p52, %p53
    %p55 = scmp.ne.s32.totalorder %s47, %s49
    %p56 = scmp.eq.s32.totalorder %s18, 1
    %p57 = por %p55, %p56
    %p58 = scmp.ne.s32.totalorder %s49, %s50
    %p59 = scmp.eq.s32.totalorder %s18, 0
    %p60 = por %p58, %p59
    %p61 = scmp.ne.s32.totalorder %s49, %s50
    %p62 = scmp.eq.s32.totalorder %s19, 1
    %p63 = por %p61, %p62
    %p65 = scmp.ne.s32.totalorder %s50, %s64
    %p66 = scmp.eq.s32.totalorder %s19, 0
    %p67 = por %p65, %p66
    %s69 = sadd.s32 %s68, 1
    %p72 = scmp.eq.s32.totalorder %s13, 1
    %p73 = scmp.ne.s32.totalorder %s68, %s70
    %p74 = scmp.eq.s32.totalorder %s13, 0
    %p75 = por %p73, %p74
    %p76 = scmp.ne.s32.totalorder %s68, %s70
    %p77 = scmp.eq.s32.totalorder %s18, 1
    %p78 = por %p76, %p77
    %p79 = scmp.ne.s32.totalorder %s70, %s71
    %p80 = scmp.eq.s32.totalorder %s18, 0
    %p81 = por %p79, %p80
    %p82 = scmp.ne.s32.totalorder %s70, %s71
    %p83 = scmp.eq.s32.totalorder %s19, 1
    %p84 = por %p82, %p83
    %p86 = scmp.ne.s32.totalorder %s71, %s85
    %p87 = scmp.eq.s32.totalorder %s19, 0
    %p88 = por %p86, %p87
    %s90 = sadd.s32 %s89, 1
    %p93 = scmp.eq.s32.totalorder %s13, 1
    %p94 = scmp.ne.s32.totalorder %s89, %s91
    %p95 = scmp.eq.s32.totalorder %s13, 0
    %p96 = por %p94, %p95
    %p97 = scmp.ne.s32.totalorder %s89, %s91
    %p98 = scmp.eq.s32.totalorder %s18, 1
    %p99 = por %p97, %p98
    %p100 = scmp.ne.s32.totalorder %s91, %s92
    %p101 = scmp.eq.s32.totalorder %s18, 0
    %p102 = por %p100, %p101
    %p103 = scmp.ne.s32.totalorder %s91, %s92
    %p104 = scmp.eq.s32.totalorder %s19, 1
    %p105 = por %p103, %p104
    %p107 = scmp.ne.s32.totalorder %s92, %s106
    %p108 = scmp.eq.s32.totalorder %s19, 0
    %p109 = por %p107, %p108
    %s111 = sadd.s32 %s110, 1
    %p114 = scmp.eq.s32.totalorder %s13, 1
    %p115 = scmp.ne.s32.totalorder %s110, %s112
    %p116 = scmp.eq.s32.totalorder %s13, 0
    %p117 = por %p115, %p116
    %p118 = scmp.ne.s32.totalorder %s110, %s112
    %p119 = scmp.eq.s32.totalorder %s18, 1
    %p120 = por %p118, %p119
    %p121 = scmp.ne.s32.totalorder %s112, %s113
    %p122 = scmp.eq.s32.totalorder %s18, 0
    %p123 = por %p121, %p122
    %p124 = scmp.ne.s32.totalorder %s112, %s113
    %p125 = scmp.eq.s32.totalorder %s19, 1
    %p126 = por %p124, %p125
    %p128 = scmp.ne.s32.totalorder %s113, %s127
    %p129 = scmp.eq.s32.totalorder %s19, 0
    %p130 = por %p128, %p129
    %s132 = sadd.s32 %s131, 1
    %p135 = scmp.eq.s32.totalorder %s13, 1
    %p136 = scmp.ne.s32.totalorder %s131, %s133
    %p137 = scmp.eq.s32.totalorder %s13, 0
    %p138 = por %p136, %p137
    %p139 = scmp.ne.s32.totalorder %s131, %s133
    %p140 = scmp.eq.s32.totalorder %s18, 1
    %p141 = por %p139, %p140
    %p142 = scmp.ne.s32.totalorder %s133, %s134
    %p143 = scmp.eq.s32.totalorder %s18, 0
    %p144 = por %p142, %p143
    %p145 = scmp.ne.s32.totalorder %s133, %s134
    %p146 = scmp.eq.s32.totalorder %s19, 1
    %p147 = por %p145, %p146
    %p149 = scmp.ne.s32.totalorder %s134, %s148
    %p150 = scmp.eq.s32.totalorder %s19, 0
    %p151 = por %p149, %p150
    %s153 = sadd.s32 %s152, 1
    %p156 = scmp.eq.s32.totalorder %s13, 1
    %p157 = scmp.ne.s32.totalorder %s152, %s154
    %p158 = scmp.eq.s32.totalorder %s13, 0
    %p159 = por %p157, %p158
    %p160 = scmp.ne.s32.totalorder %s152, %s154
    %p161 = scmp.eq.s32.totalorder %s18, 1
    %p162 = por %p160, %p161
    %p163 = scmp.ne.s32.totalorder %s154, %s155
    %p164 = scmp.eq.s32.totalorder %s18, 0
    %p165 = por %p163, %p164
    %p166 = scmp.ne.s32.totalorder %s154, %s155
    %p167 = scmp.eq.s32.totalorder %s19, 1
    %p168 = por %p166, %p167
    %p170 = scmp.ne.s32.totalorder %s155, %s169
    %p171 = scmp.eq.s32.totalorder %s19, 0
    %p172 = por %p170, %p171
    %s173 = ssub.s32 %s13, %s20
    %p174 = scmp.eq.s32.totalorder %s173, 0
    %s176 = sadd.s32 %s175, 1
    %s177 = scalar_select %p174, %s175, %s176
    %p180 = pneg %p174
    %p181 = scmp.eq.s32.totalorder %s13, 1
    %p182 = por %p180, %p181
    %p183 = scmp.ne.s32.totalorder %s175, %s178
    %p184 = scmp.eq.s32.totalorder %s13, 0
    %p185 = por %p183, %p184
    %p186 = scmp.ne.s32.totalorder %s175, %s178
    %p187 = scmp.eq.s32.totalorder %s18, 1
    %p188 = por %p186, %p187
    %p189 = scmp.ne.s32.totalorder %s178, %s179
    %p190 = scmp.eq.s32.totalorder %s18, 0
    %p191 = por %p189, %p190
    %p192 = scmp.ne.s32.totalorder %s178, %s179
    %p193 = scmp.eq.s32.totalorder %s19, 1
    %p194 = por %p192, %p193
    %p196 = scmp.ne.s32.totalorder %s179, %s195
    %p197 = scmp.eq.s32.totalorder %s19, 0
    %p198 = por %p196, %p197
    %p199 = scmp.le.s32.totalorder 1, %s13
    %p200 = scmp.lt.s32.totalorder %s13, 3
    %p201 = pnand %p199, %p200
    %p202 = pneg %p201
    // Predicated region
    $region9: #{tpu_custom_call.1} parent=5 // pred_check
      _
    $region10: #{tpu_custom_call.1} parent=5 // pred_check_branch
      %204 = sbr.rel (%p201) target = $region12
    $region11: #{tpu_custom_call.1} parent=5 // pred_region
      %s205 = ssub.s32 %s13, 1
      // Predicated region
      $region13: #{tpu_custom_call.1} parent=11 // pred_check
        %p206 = pneg %p60
      $region14: #{tpu_custom_call.1} parent=11 // pred_check_branch
        %208 = sbr.rel (%p206) target = $region16
      $region15: #{tpu_custom_call.1} parent=11 // pred_region
        _
      $region16: #{tpu_custom_call.1} parent=11 // pred_fallthru
        _
      // Predicated region
      $region17: #{tpu_custom_call.1} parent=11 // pred_check
        %p209 = pneg %p81
      $region18: #{tpu_custom_call.1} parent=11 // pred_check_branch
        %211 = sbr.rel (%p209) target = $region20
      $region19: #{tpu_custom_call.1} parent=11 // pred_region
        _
      $region20: #{tpu_custom_call.1} parent=11 // pred_fallthru
        _
      // Predicated region
      $region21: #{tpu_custom_call.1} parent=11 // pred_check
        %p212 = pneg %p102
      $region22: #{tpu_custom_call.1} parent=11 // pred_check_branch
        %214 = sbr.rel (%p212) target = $region24
      $region23: #{tpu_custom_call.1} parent=11 // pred_region
        _
      $region24: #{tpu_custom_call.1} parent=11 // pred_fallthru
        _
      // Predicated region
      $region25: #{tpu_custom_call.1} parent=11 // pred_check
        %p215 = pneg %p123
      $region26: #{tpu_custom_call.1} parent=11 // pred_check_branch
        %217 = sbr.rel (%p215) target = $region28
      $region27: #{tpu_custom_call.1} parent=11 // pred_region
        _
      $region28: #{tpu_custom_call.1} parent=11 // pred_fallthru
        _
      // Predicated region
      $region29: #{tpu_custom_call.1} parent=11 // pred_check
        %p218 = pneg %p144
      $region30: #{tpu_custom_call.1} parent=11 // pred_check_branch
        %220 = sbr.rel (%p218) target = $region32
      $region31: #{tpu_custom_call.1} parent=11 // pred_region
        _
      $region32: #{tpu_custom_call.1} parent=11 // pred_fallthru
        _
      // Predicated region
      $region33: #{tpu_custom_call.1} parent=11 // pred_check
        %p221 = pneg %p165
      $region34: #{tpu_custom_call.1} parent=11 // pred_check_branch
        %223 = sbr.rel (%p221) target = $region36
      $region35: #{tpu_custom_call.1} parent=11 // pred_region
        _
      $region36: #{tpu_custom_call.1} parent=11 // pred_fallthru
        _
    $region12: #{tpu_custom_call.1} parent=5 // pred_fallthru
      _
    %p224 = scmp.lt.s32.totalorder %s13, 2
    // Predicated region
    $region37: #{tpu_custom_call.1} parent=5 // pred_check
      %p225 = pneg %p224
    $region38: #{tpu_custom_call.1} parent=5 // pred_check_branch
      %227 = sbr.rel (%p225) target = $region40
    $region39: #{tpu_custom_call.1} parent=5 // pred_region
      // Predicated region
      $region41: #{tpu_custom_call.1} parent=39 // pred_check
        %p228 = pneg %p33
      $region42: #{tpu_custom_call.1} parent=39 // pred_check_branch
        %230 = sbr.rel (%p228) target = $region44
      $region43: #{tpu_custom_call.1} parent=39 // pred_region
        %p231 = scmp.lt.s32.totalorder %s13, 1
        %s232 = scalar_select %p231, %s13, 1
        %s233 = smul.addr %s232, 32
        %s234 = smul.addr %s233, 8
        %s235 = scalar_lea.vmem %s0, %s234
      $region44: #{tpu_custom_call.1} parent=39 // pred_fallthru
        _
    $region40: #{tpu_custom_call.1} parent=5 // pred_fallthru
      _
    %p236 = scmp.le.s32.totalorder 1, %s13
    %p237 = scmp.lt.s32.totalorder %s13, 3
    %p238 = pnand %p236, %p237
    %p239 = pneg %p238
    // Predicated region
    $region45: #{tpu_custom_call.1} parent=5 // pred_check
      _
    $region46: #{tpu_custom_call.1} parent=5 // pred_check_branch
      %241 = sbr.rel (%p238) target = $region48
    $region47: #{tpu_custom_call.1} parent=5 // pred_region
      %s242 = ssub.s32 %s13, 1
      %p243 = scmp.lt.s32.totalorder %s18, 1
      %s244 = scalar_select %p243, %s18, 1
      %s245 = smul.addr %s244, 32
      %s246 = smul.addr %s245, 8
      %s247 = scalar_lea.vmem %s0, %s246
      %p248 = pneg %p39
      %p249 = pneg %p36
      %p250 = pneg %p60
      %p251 = pneg %p57
      %p252 = pneg %p81
      %p253 = pneg %p78
      %p254 = pneg %p102
      %p255 = pneg %p99
      %p256 = pneg %p123
      %p257 = pneg %p120
      %p258 = pneg %p144
      %p259 = pneg %p141
      %p260 = pneg %p165
      %p261 = pneg %p162
      %p262 = pneg %p191
      %p263 = pneg %p188
      %p264 = scmp.lt.s32.totalorder %s18, 1
      %s265 = scalar_select %p264, %s18, 1
      %s266 = smul.addr %s265, 32
      %s267 = smul.addr %s266, 8
      %s268 = scalar_lea.vmem %s7, %s267
      %p269 = scmp.lt.s32.totalorder %s18, 1
      %s270 = scalar_select %p269, %s18, 1
      %s271 = smul.addr %s270, 32
      %s272 = smul.addr %s271, 8
      %s273 = scalar_lea.vmem %s0, %s272
      %p274 = scmp.lt.s32.totalorder %s18, 1
      %s275 = scalar_select %p274, %s18, 1
      %s276 = smul.addr %s275, 32
      %s277 = smul.addr %s276, 8
      %s278 = scalar_lea.vmem %s7, %s277
      %vm280 = vcmask 31744
      %281 = vst.msk [vmem:[#allocation2] sm:$0xff] %vm280, 0.0
      %282 = vst.msk [vmem:[#allocation2 + $0x8] sm:$0xff] %vm280, 0.0
      %vm283 = vcmask 25600
      %284 = vst.msk [vmem:[#allocation2 + $0x10] sm:$0x3] %vm283, 0.0
      %285 = vst.msk [vmem:[#allocation2 + $0x18] sm:$0xff] %vm280, 0.0
      %286 = vst.msk [vmem:[#allocation2 + $0x20] sm:$0xff] %vm280, 0.0
      %287 = vst.msk [vmem:[#allocation2 + $0x28] sm:$0x3] %vm283, 0.0
      %288 = vst.msk [vmem:[#allocation2 + $0x30] sm:$0xff] %vm280, 0.0
      %289 = vst.msk [vmem:[#allocation2 + $0x38] sm:$0xff] %vm280, 0.0
      %290 = vst.msk [vmem:[#allocation2 + $0x40] sm:$0x3] %vm283, 0.0
      %291 = vst.msk [vmem:[#allocation2 + $0x48] sm:$0xff] %vm280, 0.0
      %292 = vst.msk [vmem:[#allocation2 + $0x50] sm:$0xff] %vm280, 0.0
      %293 = vst.msk [vmem:[#allocation2 + $0x58] sm:$0x3] %vm283, 0.0
      %294 = vst.msk [vmem:[#allocation2 + $0x60] sm:$0xff] %vm280, 0.0
      %295 = vst.msk [vmem:[#allocation2 + $0x68] sm:$0xff] %vm280, 0.0
      %296 = vst.msk [vmem:[#allocation2 + $0x70] sm:$0x3] %vm283, 0.0
      %297 = vst.msk [vmem:[#allocation2 + $0x78] sm:$0xff] %vm280, 0.0
      %298 = vst.msk [vmem:[#allocation2 + $0x80] sm:$0xff] %vm280, 0.0
      %299 = vst.msk [vmem:[#allocation2 + $0x88] sm:$0x3] %vm283, 0.0
      %300 = vst.msk [vmem:[#allocation2 + $0x90] sm:$0xff] %vm280, 0.0
      %301 = vst.msk [vmem:[#allocation2 + $0x98] sm:$0xff] %vm280, 0.0
      %302 = vst.msk [vmem:[#allocation2 + $0xa0] sm:$0x3] %vm283, 0.0
      %303 = vst.msk [vmem:[#allocation2 + $0xa8] sm:$0xff] %vm280, 0.0
      %304 = vst.msk [vmem:[#allocation2 + $0xb0] sm:$0xff] %vm280, 0.0
      %305 = vst.msk [vmem:[#allocation2 + $0xb8] sm:$0x3] %vm283, 0.0
      %306 = vst.msk [vmem:[#allocation2 + $0xc0] sm:$0xff] %vm280, 0.0
      %307 = vst.msk [vmem:[#allocation2 + $0xc8] sm:$0xff] %vm280, 0.0
      %308 = vst.msk [vmem:[#allocation2 + $0xd0] sm:$0x3] %vm283, 0.0
      %309 = vst.msk [vmem:[#allocation2 + $0xd8] sm:$0xff] %vm280, 0.0
      %310 = vst.msk [vmem:[#allocation2 + $0xe0] sm:$0xff] %vm280, 0.0
      %311 = vst.msk [vmem:[#allocation2 + $0xe8] sm:$0x3] %vm283, 0.0
      %312 = vst.msk [vmem:[#allocation2 + $0xf0] sm:$0xff] %vm280, 0.0
      %313 = vst.msk [vmem:[#allocation2 + $0xf8] sm:$0xff] %vm280, 0.0
      %314 = vst.msk [vmem:[#allocation2 + $0x100] sm:$0x3] %vm283, 0.0
      %315 = vst.msk [vmem:[#allocation2 + $0x108] sm:$0xff] %vm280, 0.0
      %316 = vst.msk [vmem:[#allocation2 + $0x110] sm:$0xff] %vm280, 0.0
      %317 = vst.msk [vmem:[#allocation2 + $0x118] sm:$0x3] %vm283, 0.0
      %318 = vst.msk [vmem:[#allocation2 + $0x120] sm:$0xff] %vm280, 0.0
      %319 = vst.msk [vmem:[#allocation2 + $0x128] sm:$0xff] %vm280, 0.0
      %320 = vst.msk [vmem:[#allocation2 + $0x130] sm:$0x3] %vm283, 0.0
      %321 = vst.msk [vmem:[#allocation2 + $0x138] sm:$0xff] %vm280, 0.0
      %322 = vst.msk [vmem:[#allocation2 + $0x140] sm:$0xff] %vm280, 0.0
      %323 = vst.msk [vmem:[#allocation2 + $0x148] sm:$0x3] %vm283, 0.0
      %324 = vst.msk [vmem:[#allocation2 + $0x150] sm:$0xff] %vm280, 0.0
      %325 = vst.msk [vmem:[#allocation2 + $0x158] sm:$0xff] %vm280, 0.0
      %326 = vst.msk [vmem:[#allocation2 + $0x160] sm:$0x3] %vm283, 0.0
      %327 = vst.msk [vmem:[#allocation2 + $0x168] sm:$0xff] %vm280, 0.0
      %328 = vst.msk [vmem:[#allocation2 + $0x170] sm:$0xff] %vm280, 0.0
      %329 = vst.msk [vmem:[#allocation2 + $0x178] sm:$0x3] %vm283, 0.0
      %330 = vst.msk [vmem:[#allocation2 + $0x180] sm:$0xff] %vm280, 0.0
      %331 = vst.msk [vmem:[#allocation2 + $0x188] sm:$0xff] %vm280, 0.0
      %332 = vst.msk [vmem:[#allocation2 + $0x190] sm:$0x3] %vm283, 0.0
      %333 = vst.msk [vmem:[#allocation2 + $0x198] sm:$0xff] %vm280, 0.0
      %334 = vst.msk [vmem:[#allocation2 + $0x1a0] sm:$0xff] %vm280, 0.0
      %335 = vst.msk [vmem:[#allocation2 + $0x1a8] sm:$0x3] %vm283, 0.0
      %v336 = vld [vmem:[%s273] sm:$0xff]
      %v337 = vld [vmem:[%s273 + $0x8] sm:$0xff]
      %v338 = vld [vmem:[%s273 + $0x10] sm:$0xff]
      %v339 = vld [vmem:[%s273 + $0x18] sm:$0xff]
      %v340 = vld [vmem:[%s273 + $0x20] sm:$0xff]
      %v341 = vld [vmem:[%s273 + $0x28] sm:$0xff]
      %v342 = vld [vmem:[%s273 + $0x30] sm:$0xff]
      %v343 = vld [vmem:[%s273 + $0x38] sm:$0xff]
      %v344 = vld [vmem:[%s273 + $0x40] sm:$0xff]
      %v345 = vld [vmem:[%s273 + $0x48] sm:$0xff]
      %v346 = vld [vmem:[%s273 + $0x50] sm:$0xff]
      %v347 = vld [vmem:[%s273 + $0x58] sm:$0xff]
      %v348 = vld [vmem:[%s273 + $0x60] sm:$0xff]
      %v349 = vld [vmem:[%s273 + $0x68] sm:$0xff]
      %v350 = vld [vmem:[%s273 + $0x70] sm:$0xff]
      %v351 = vld [vmem:[%s273 + $0x78] sm:$0xff]
      %v352 = vld [vmem:[%s273 + $0x80] sm:$0xff]
      %v353 = vld [vmem:[%s273 + $0x88] sm:$0xff]
      %v354 = vld [vmem:[%s273 + $0x90] sm:$0xff]
      %v355 = vld [vmem:[%s273 + $0x98] sm:$0xff]
      %v356 = vld [vmem:[%s273 + $0xa0] sm:$0xff]
      %v357 = vld [vmem:[%s273 + $0xa8] sm:$0xff]
      %v358 = vld [vmem:[%s273 + $0xb0] sm:$0xff]
      %v359 = vld [vmem:[%s273 + $0xb8] sm:$0xff]
      %v360 = vld [vmem:[%s273 + $0xc0] sm:$0xff]
      %v361 = vld [vmem:[%s273 + $0xc8] sm:$0xff]
      %v362 = vld [vmem:[%s273 + $0xd0] sm:$0xff]
      %v363 = vld [vmem:[%s273 + $0xd8] sm:$0xff]
      %v364 = vld [vmem:[%s273 + $0xe0] sm:$0xff]
      %v365 = vld [vmem:[%s273 + $0xe8] sm:$0xff]
      %v366 = vld [vmem:[%s273 + $0xf0] sm:$0xff]
      %v367 = vld [vmem:[%s273 + $0xf8] sm:$0xff]
      %s368 = scalar_lea.vmem [#allocation2], 24
      %369 = vst.msk [vmem:[%s368 + $0x1] sm:$0xff] %vm280, %v336
      %370 = vst.msk [vmem:[%s368 + $0x9] sm:$0xff] %vm280, %v337
      %371 = vst.msk [vmem:[%s368 + $0x19] sm:$0xff] %vm280, %v338
      %372 = vst.msk [vmem:[%s368 + $0x21] sm:$0xff] %vm280, %v339
      %373 = vst.msk [vmem:[%s368 + $0x31] sm:$0xff] %vm280, %v340
      %374 = vst.msk [vmem:[%s368 + $0x39] sm:$0xff] %vm280, %v341
      %375 = vst.msk [vmem:[%s368 + $0x49] sm:$0xff] %vm280, %v342
      %376 = vst.msk [vmem:[%s368 + $0x51] sm:$0xff] %vm280, %v343
      %377 = vst.msk [vmem:[%s368 + $0x61] sm:$0xff] %vm280, %v344
      %378 = vst.msk [vmem:[%s368 + $0x69] sm:$0xff] %vm280, %v345
      %379 = vst.msk [vmem:[%s368 + $0x79] sm:$0xff] %vm280, %v346
      %380 = vst.msk [vmem:[%s368 + $0x81] sm:$0xff] %vm280, %v347
      %381 = vst.msk [vmem:[%s368 + $0x91] sm:$0xff] %vm280, %v348
      %382 = vst.msk [vmem:[%s368 + $0x99] sm:$0xff] %vm280, %v349
      %383 = vst.msk [vmem:[%s368 + $0xa9] sm:$0xff] %vm280, %v350
      %384 = vst.msk [vmem:[%s368 + $0xb1] sm:$0xff] %vm280, %v351
      %385 = vst.msk [vmem:[%s368 + $0xc1] sm:$0xff] %vm280, %v352
      %386 = vst.msk [vmem:[%s368 + $0xc9] sm:$0xff] %vm280, %v353
      %387 = vst.msk [vmem:[%s368 + $0xd9] sm:$0xff] %vm280, %v354
      %388 = vst.msk [vmem:[%s368 + $0xe1] sm:$0xff] %vm280, %v355
      %389 = vst.msk [vmem:[%s368 + $0xf1] sm:$0xff] %vm280, %v356
      %390 = vst.msk [vmem:[%s368 + $0xf9] sm:$0xff] %vm280, %v357
      %391 = vst.msk [vmem:[%s368 + $0x109] sm:$0xff] %vm280, %v358
      %392 = vst.msk [vmem:[%s368 + $0x111] sm:$0xff] %vm280, %v359
      %393 = vst.msk [vmem:[%s368 + $0x121] sm:$0xff] %vm280, %v360
      %394 = vst.msk [vmem:[%s368 + $0x129] sm:$0xff] %vm280, %v361
      %395 = vst.msk [vmem:[%s368 + $0x139] sm:$0xff] %vm280, %v362
      %396 = vst.msk [vmem:[%s368 + $0x141] sm:$0xff] %vm280, %v363
      %397 = vst.msk [vmem:[%s368 + $0x151] sm:$0xff] %vm280, %v364
      %398 = vst.msk [vmem:[%s368 + $0x159] sm:$0xff] %vm280, %v365
      %399 = vst.msk [vmem:[%s368 + $0x169] sm:$0xff] %vm280, %v366
      %400 = vst.msk [vmem:[%s368 + $0x171] sm:$0xff] %vm280, %v367
      %v401 = vld [vmem:[#allocation2] sm:$0xff]
      %v402 = vld [vmem:[#allocation2 + $0x8] sm:$0xff]
      %v403 = vld [vmem:[#allocation2 + $0x10] sm:$0x3]
      %v404 = vld [vmem:[#allocation2 + $0x18] sm:$0xff]
      %v405 = vld [vmem:[#allocation2 + $0x20] sm:$0xff]
      %v406 = vld [vmem:[#allocation2 + $0x28] sm:$0x3]
      %v407 = vld [vmem:[#allocation2 + $0x30] sm:$0xff]
      %v408 = vld [vmem:[#allocation2 + $0x38] sm:$0xff]
      %v409 = vld [vmem:[#allocation2 + $0x40] sm:$0x3]
      %v410 = vld [vmem:[#allocation2 + $0x48] sm:$0xff]
      %v411 = vld [vmem:[#allocation2 + $0x50] sm:$0xff]
      %v412 = vld [vmem:[#allocation2 + $0x58] sm:$0x3]
      %v413 = vld [vmem:[#allocation2 + $0x60] sm:$0xff]
      %v414 = vld [vmem:[#allocation2 + $0x68] sm:$0xff]
      %v415 = vld [vmem:[#allocation2 + $0x70] sm:$0x3]
      %v416 = vld [vmem:[#allocation2 + $0x78] sm:$0xff]
      %v417 = vld [vmem:[#allocation2 + $0x80] sm:$0xff]
      %v418 = vld [vmem:[#allocation2 + $0x88] sm:$0x3]
      %v419 = vld [vmem:[#allocation2 + $0x90] sm:$0xff]
      %v420 = vld [vmem:[#allocation2 + $0x98] sm:$0xff]
      %v421 = vld [vmem:[#allocation2 + $0xa0] sm:$0x3]
      %v422 = vld [vmem:[#allocation2 + $0xa8] sm:$0xff]
      %v423 = vld [vmem:[#allocation2 + $0xb0] sm:$0xff]
      %v424 = vld [vmem:[#allocation2 + $0xb8] sm:$0x3]
      %v425 = vld [vmem:[#allocation2 + $0xc0] sm:$0xff]
      %v426 = vld [vmem:[#allocation2 + $0xc8] sm:$0xff]
      %v427 = vld [vmem:[#allocation2 + $0xd0] sm:$0x3]
      %v428 = vld [vmem:[#allocation2 + $0xd8] sm:$0xff]
      %v429 = vld [vmem:[#allocation2 + $0xe0] sm:$0xff]
      %v430 = vld [vmem:[#allocation2 + $0xe8] sm:$0x3]
      %v431 = vld [vmem:[#allocation2 + $0xf0] sm:$0xff]
      %v432 = vld [vmem:[#allocation2 + $0xf8] sm:$0xff]
      %v433 = vld [vmem:[#allocation2 + $0x100] sm:$0x3]
      %v434 = vld [vmem:[#allocation2 + $0x108] sm:$0xff]
      %v435 = vld [vmem:[#allocation2 + $0x110] sm:$0xff]
      %v436 = vld [vmem:[#allocation2 + $0x118] sm:$0x3]
      %v437 = vld [vmem:[#allocation2 + $0x120] sm:$0xff]
      %v438 = vld [vmem:[#allocation2 + $0x128] sm:$0xff]
      %v439 = vld [vmem:[#allocation2 + $0x130] sm:$0x3]
      %v440 = vld [vmem:[#allocation2 + $0x138] sm:$0xff]
      %v441 = vld [vmem:[#allocation2 + $0x140] sm:$0xff]
      %v442 = vld [vmem:[#allocation2 + $0x148] sm:$0x3]
      %v443 = vld [vmem:[#allocation2 + $0x150] sm:$0xff]
      %v444 = vld [vmem:[#allocation2 + $0x158] sm:$0xff]
      %v445 = vld [vmem:[#allocation2 + $0x160] sm:$0x3]
      %v446 = vld [vmem:[#allocation2 + $0x168] sm:$0xff]
      %v447 = vld [vmem:[#allocation2 + $0x170] sm:$0xff]
      %v448 = vld [vmem:[#allocation2 + $0x178] sm:$0x3]
      %v449 = vld [vmem:[#allocation2 + $0x180] sm:$0xff]
      %v450 = vld [vmem:[#allocation2 + $0x188] sm:$0xff]
      %v451 = vld [vmem:[#allocation2 + $0x190] sm:$0x3]
      %v452 = vld [vmem:[#allocation2 + $0x198] sm:$0xff]
      %v453 = vld [vmem:[#allocation2 + $0x1a0] sm:$0xff]
      %v454 = vld [vmem:[#allocation2 + $0x1a8] sm:$0x3]
      %vm503 = vcmask 1046528
      %v504 = vrot.slane %v401, 1
      %v505 = vrot.slane %v402, 1
      %v506 = vsel %vm503, %v504, %v505
      %v507 = vrot.slane %v403, 1
      %v508 = vsel %vm503, %v505, %v507
      %v509 = vrot.slane %v404, 1
      %v510 = vrot.slane %v405, 1
      %v511 = vsel %vm503, %v509, %v510
      %v512 = vrot.slane %v406, 1
      %v513 = vsel %vm503, %v510, %v512
      %v514 = vrot.slane %v407, 1
      %v515 = vrot.slane %v408, 1
      %v516 = vsel %vm503, %v514, %v515
      %v517 = vrot.slane %v409, 1
      %v518 = vsel %vm503, %v515, %v517
      %v519 = vrot.slane %v410, 1
      %v520 = vrot.slane %v411, 1
      %v521 = vsel %vm503, %v519, %v520
      %v522 = vrot.slane %v412, 1
      %v523 = vsel %vm503, %v520, %v522
      %v524 = vrot.slane %v413, 1
      %v525 = vrot.slane %v414, 1
      %v526 = vsel %vm503, %v524, %v525
      %v527 = vrot.slane %v415, 1
      %v528 = vsel %vm503, %v525, %v527
      %v529 = vrot.slane %v416, 1
      %v530 = vrot.slane %v417, 1
      %v531 = vsel %vm503, %v529, %v530
      %v532 = vrot.slane %v418, 1
      %v533 = vsel %vm503, %v530, %v532
      %v534 = vrot.slane %v419, 1
      %v535 = vrot.slane %v420, 1
      %v536 = vsel %vm503, %v534, %v535
      %v537 = vrot.slane %v421, 1
      %v538 = vsel %vm503, %v535, %v537
      %v539 = vrot.slane %v422, 1
      %v540 = vrot.slane %v423, 1
      %v541 = vsel %vm503, %v539, %v540
      %v542 = vrot.slane %v424, 1
      %v543 = vsel %vm503, %v540, %v542
      %v544 = vrot.slane %v425, 1
      %v545 = vrot.slane %v426, 1
      %v546 = vsel %vm503, %v544, %v545
      %v547 = vrot.slane %v427, 1
      %v548 = vsel %vm503, %v545, %v547
      %v549 = vrot.slane %v428, 1
      %v550 = vrot.slane %v429, 1
      %v551 = vsel %vm503, %v549, %v550
      %v552 = vrot.slane %v430, 1
      %v553 = vsel %vm503, %v550, %v552
      %v554 = vrot.slane %v431, 1
      %v555 = vrot.slane %v432, 1
      %v556 = vsel %vm503, %v554, %v555
      %v557 = vrot.slane %v433, 1
      %v558 = vsel %vm503, %v555, %v557
      %v559 = vrot.slane %v434, 1
      %v560 = vrot.slane %v435, 1
      %v561 = vsel %vm503, %v559, %v560
      %v562 = vrot.slane %v436, 1
      %v563 = vsel %vm503, %v560, %v562
      %v564 = vrot.slane %v437, 1
      %v565 = vrot.slane %v438, 1
      %v566 = vsel %vm503, %v564, %v565
      %v567 = vrot.slane %v439, 1
      %v568 = vsel %vm503, %v565, %v567
      %v569 = vrot.slane %v440, 1
      %v570 = vrot.slane %v441, 1
      %v571 = vsel %vm503, %v569, %v570
      %v572 = vrot.slane %v442, 1
      %v573 = vsel %vm503, %v570, %v572
      %v574 = vrot.slane %v443, 1
      %v575 = vrot.slane %v444, 1
      %v576 = vsel %vm503, %v574, %v575
      %v577 = vrot.slane %v445, 1
      %v578 = vsel %vm503, %v575, %v577
      %v579 = vrot.slane %v446, 1
      %v580 = vrot.slane %v447, 1
      %v581 = vsel %vm503, %v579, %v580
      %v582 = vrot.slane %v448, 1
      %v583 = vsel %vm503, %v580, %v582
      %584 = vrot.lane.b32.xlu0 %v506, 4
      %v585 = vpop.permute.xlu0 %584
      %586 = vrot.lane.b32.xlu0 %v508, 4
      %v587 = vpop.permute.xlu0 %586
      %588 = vrot.lane.b32.xlu0 %v511, 4
      %v589 = vpop.permute.xlu0 %588
      %590 = vrot.lane.b32.xlu0 %v513, 4
      %v591 = vpop.permute.xlu0 %590
      %592 = vrot.lane.b32.xlu0 %v516, 4
      %v593 = vpop.permute.xlu0 %592
      %594 = vrot.lane.b32.xlu0 %v518, 4
      %v595 = vpop.permute.xlu0 %594
      %596 = vrot.lane.b32.xlu0 %v521, 4
      %v597 = vpop.permute.xlu0 %596
      %598 = vrot.lane.b32.xlu0 %v523, 4
      %v599 = vpop.permute.xlu0 %598
      %600 = vrot.lane.b32.xlu0 %v526, 4
      %v601 = vpop.permute.xlu0 %600
      %602 = vrot.lane.b32.xlu0 %v528, 4
      %v603 = vpop.permute.xlu0 %602
      %604 = vrot.lane.b32.xlu0 %v531, 4
      %v605 = vpop.permute.xlu0 %604
      %606 = vrot.lane.b32.xlu0 %v533, 4
      %v607 = vpop.permute.xlu0 %606
      %608 = vrot.lane.b32.xlu0 %v536, 4
      %v609 = vpop.permute.xlu0 %608
      %610 = vrot.lane.b32.xlu0 %v538, 4
      %v611 = vpop.permute.xlu0 %610
      %612 = vrot.lane.b32.xlu0 %v541, 4
      %v613 = vpop.permute.xlu0 %612
      %614 = vrot.lane.b32.xlu0 %v543, 4
      %v615 = vpop.permute.xlu0 %614
      %616 = vrot.lane.b32.xlu0 %v546, 4
      %v617 = vpop.permute.xlu0 %616
      %618 = vrot.lane.b32.xlu0 %v548, 4
      %v619 = vpop.permute.xlu0 %618
      %620 = vrot.lane.b32.xlu0 %v551, 4
      %v621 = vpop.permute.xlu0 %620
      %622 = vrot.lane.b32.xlu0 %v553, 4
      %v623 = vpop.permute.xlu0 %622
      %624 = vrot.lane.b32.xlu0 %v556, 4
      %v625 = vpop.permute.xlu0 %624
      %626 = vrot.lane.b32.xlu0 %v558, 4
      %v627 = vpop.permute.xlu0 %626
      %628 = vrot.lane.b32.xlu0 %v561, 4
      %v629 = vpop.permute.xlu0 %628
      %630 = vrot.lane.b32.xlu0 %v563, 4
      %v631 = vpop.permute.xlu0 %630
      %632 = vrot.lane.b32.xlu0 %v566, 4
      %v633 = vpop.permute.xlu0 %632
      %634 = vrot.lane.b32.xlu0 %v568, 4
      %v635 = vpop.permute.xlu0 %634
      %636 = vrot.lane.b32.xlu0 %v571, 4
      %v637 = vpop.permute.xlu0 %636
      %638 = vrot.lane.b32.xlu0 %v573, 4
      %v639 = vpop.permute.xlu0 %638
      %640 = vrot.lane.b32.xlu0 %v576, 4
      %v641 = vpop.permute.xlu0 %640
      %642 = vrot.lane.b32.xlu0 %v578, 4
      %v643 = vpop.permute.xlu0 %642
      %644 = vrot.lane.b32.xlu0 %v581, 4
      %v645 = vpop.permute.xlu0 %644
      %646 = vrot.lane.b32.xlu0 %v583, 4
      %v647 = vpop.permute.xlu0 %646
      %vm680 = vcmask 1045504
      %v681 = vrot.slane %v401, 2
      %v682 = vrot.slane %v402, 2
      %v683 = vsel %vm680, %v681, %v682
      %v684 = vrot.slane %v403, 2
      %v685 = vsel %vm680, %v682, %v684
      %v686 = vrot.slane %v404, 2
      %v687 = vrot.slane %v405, 2
      %v688 = vsel %vm680, %v686, %v687
      %v689 = vrot.slane %v406, 2
      %v690 = vsel %vm680, %v687, %v689
      %v691 = vrot.slane %v407, 2
      %v692 = vrot.slane %v408, 2
      %v693 = vsel %vm680, %v691, %v692
      %v694 = vrot.slane %v409, 2
      %v695 = vsel %vm680, %v692, %v694
      %v696 = vrot.slane %v410, 2
      %v697 = vrot.slane %v411, 2
      %v698 = vsel %vm680, %v696, %v697
      %v699 = vrot.slane %v412, 2
      %v700 = vsel %vm680, %v697, %v699
      %v701 = vrot.slane %v413, 2
      %v702 = vrot.slane %v414, 2
      %v703 = vsel %vm680, %v701, %v702
      %v704 = vrot.slane %v415, 2
      %v705 = vsel %vm680, %v702, %v704
      %v706 = vrot.slane %v416, 2
      %v707 = vrot.slane %v417, 2
      %v708 = vsel %vm680, %v706, %v707
      %v709 = vrot.slane %v418, 2
      %v710 = vsel %vm680, %v707, %v709
      %v711 = vrot.slane %v419, 2
      %v712 = vrot.slane %v420, 2
      %v713 = vsel %vm680, %v711, %v712
      %v714 = vrot.slane %v421, 2
      %v715 = vsel %vm680, %v712, %v714
      %v716 = vrot.slane %v422, 2
      %v717 = vrot.slane %v423, 2
      %v718 = vsel %vm680, %v716, %v717
      %v719 = vrot.slane %v424, 2
      %v720 = vsel %vm680, %v717, %v719
      %v721 = vrot.slane %v425, 2
      %v722 = vrot.slane %v426, 2
      %v723 = vsel %vm680, %v721, %v722
      %v724 = vrot.slane %v427, 2
      %v725 = vsel %vm680, %v722, %v724
      %v726 = vrot.slane %v428, 2
      %v727 = vrot.slane %v429, 2
      %v728 = vsel %vm680, %v726, %v727
      %v729 = vrot.slane %v430, 2
      %v730 = vsel %vm680, %v727, %v729
      %v731 = vrot.slane %v431, 2
      %v732 = vrot.slane %v432, 2
      %v733 = vsel %vm680, %v731, %v732
      %v734 = vrot.slane %v433, 2
      %v735 = vsel %vm680, %v732, %v734
      %v736 = vrot.slane %v434, 2
      %v737 = vrot.slane %v435, 2
      %v738 = vsel %vm680, %v736, %v737
      %v739 = vrot.slane %v436, 2
      %v740 = vsel %vm680, %v737, %v739
      %v741 = vrot.slane %v437, 2
      %v742 = vrot.slane %v438, 2
      %v743 = vsel %vm680, %v741, %v742
      %v744 = vrot.slane %v439, 2
      %v745 = vsel %vm680, %v742, %v744
      %v746 = vrot.slane %v440, 2
      %v747 = vrot.slane %v441, 2
      %v748 = vsel %vm680, %v746, %v747
      %v749 = vrot.slane %v442, 2
      %v750 = vsel %vm680, %v747, %v749
      %v751 = vrot.slane %v443, 2
      %v752 = vrot.slane %v444, 2
      %v753 = vsel %vm680, %v751, %v752
      %v754 = vrot.slane %v445, 2
      %v755 = vsel %vm680, %v752, %v754
      %v756 = vrot.slane %v446, 2
      %v757 = vrot.slane %v447, 2
      %v758 = vsel %vm680, %v756, %v757
      %v759 = vrot.slane %v448, 2
      %v760 = vsel %vm680, %v757, %v759
      %761 = vrot.lane.b32.xlu0 %v683, 8
      %v762 = vpop.permute.xlu0 %761
      %763 = vrot.lane.b32.xlu0 %v685, 8
      %v764 = vpop.permute.xlu0 %763
      %765 = vrot.lane.b32.xlu0 %v688, 8
      %v766 = vpop.permute.xlu0 %765
      %767 = vrot.lane.b32.xlu0 %v690, 8
      %v768 = vpop.permute.xlu0 %767
      %769 = vrot.lane.b32.xlu0 %v693, 8
      %v770 = vpop.permute.xlu0 %769
      %771 = vrot.lane.b32.xlu0 %v695, 8
      %v772 = vpop.permute.xlu0 %771
      %773 = vrot.lane.b32.xlu0 %v698, 8
      %v774 = vpop.permute.xlu0 %773
      %775 = vrot.lane.b32.xlu0 %v700, 8
      %v776 = vpop.permute.xlu0 %775
      %777 = vrot.lane.b32.xlu0 %v703, 8
      %v778 = vpop.permute.xlu0 %777
      %779 = vrot.lane.b32.xlu0 %v705, 8
      %v780 = vpop.permute.xlu0 %779
      %781 = vrot.lane.b32.xlu0 %v708, 8
      %v782 = vpop.permute.xlu0 %781
      %783 = vrot.lane.b32.xlu0 %v710, 8
      %v784 = vpop.permute.xlu0 %783
      %785 = vrot.lane.b32.xlu0 %v713, 8
      %v786 = vpop.permute.xlu0 %785
      %787 = vrot.lane.b32.xlu0 %v715, 8
      %v788 = vpop.permute.xlu0 %787
      %789 = vrot.lane.b32.xlu0 %v718, 8
      %v790 = vpop.permute.xlu0 %789
      %791 = vrot.lane.b32.xlu0 %v720, 8
      %v792 = vpop.permute.xlu0 %791
      %793 = vrot.lane.b32.xlu0 %v723, 8
      %v794 = vpop.permute.xlu0 %793
      %795 = vrot.lane.b32.xlu0 %v725, 8
      %v796 = vpop.permute.xlu0 %795
      %797 = vrot.lane.b32.xlu0 %v728, 8
      %v798 = vpop.permute.xlu0 %797
      %799 = vrot.lane.b32.xlu0 %v730, 8
      %v800 = vpop.permute.xlu0 %799
      %801 = vrot.lane.b32.xlu0 %v733, 8
      %v802 = vpop.permute.xlu0 %801
      %803 = vrot.lane.b32.xlu0 %v735, 8
      %v804 = vpop.permute.xlu0 %803
      %805 = vrot.lane.b32.xlu0 %v738, 8
      %v806 = vpop.permute.xlu0 %805
      %807 = vrot.lane.b32.xlu0 %v740, 8
      %v808 = vpop.permute.xlu0 %807
      %809 = vrot.lane.b32.xlu0 %v743, 8
      %v810 = vpop.permute.xlu0 %809
      %811 = vrot.lane.b32.xlu0 %v745, 8
      %v812 = vpop.permute.xlu0 %811
      %813 = vrot.lane.b32.xlu0 %v748, 8
      %v814 = vpop.permute.xlu0 %813
      %815 = vrot.lane.b32.xlu0 %v750, 8
      %v816 = vpop.permute.xlu0 %815
      %817 = vrot.lane.b32.xlu0 %v753, 8
      %v818 = vpop.permute.xlu0 %817
      %819 = vrot.lane.b32.xlu0 %v755, 8
      %v820 = vpop.permute.xlu0 %819
      %821 = vrot.lane.b32.xlu0 %v758, 8
      %v822 = vpop.permute.xlu0 %821
      %823 = vrot.lane.b32.xlu0 %v760, 8
      %v824 = vpop.permute.xlu0 %823
      %859 = vrot.lane.b32.xlu0 %v404, 12
      %v860 = vpop.permute.xlu0 %859
      %861 = vrot.lane.b32.xlu0 %v405, 12
      %v862 = vpop.permute.xlu0 %861
      %863 = vrot.lane.b32.xlu0 %v407, 12
      %v864 = vpop.permute.xlu0 %863
      %865 = vrot.lane.b32.xlu0 %v408, 12
      %v866 = vpop.permute.xlu0 %865
      %867 = vrot.lane.b32.xlu0 %v410, 12
      %v868 = vpop.permute.xlu0 %867
      %869 = vrot.lane.b32.xlu0 %v411, 12
      %v870 = vpop.permute.xlu0 %869
      %871 = vrot.lane.b32.xlu0 %v413, 12
      %v872 = vpop.permute.xlu0 %871
      %873 = vrot.lane.b32.xlu0 %v414, 12
      %v874 = vpop.permute.xlu0 %873
      %875 = vrot.lane.b32.xlu0 %v416, 12
      %v876 = vpop.permute.xlu0 %875
      %877 = vrot.lane.b32.xlu0 %v417, 12
      %v878 = vpop.permute.xlu0 %877
      %879 = vrot.lane.b32.xlu0 %v419, 12
      %v880 = vpop.permute.xlu0 %879
      %881 = vrot.lane.b32.xlu0 %v420, 12
      %v882 = vpop.permute.xlu0 %881
      %883 = vrot.lane.b32.xlu0 %v422, 12
      %v884 = vpop.permute.xlu0 %883
      %885 = vrot.lane.b32.xlu0 %v423, 12
      %v886 = vpop.permute.xlu0 %885
      %887 = vrot.lane.b32.xlu0 %v425, 12
      %v888 = vpop.permute.xlu0 %887
      %889 = vrot.lane.b32.xlu0 %v426, 12
      %v890 = vpop.permute.xlu0 %889
      %891 = vrot.lane.b32.xlu0 %v428, 12
      %v892 = vpop.permute.xlu0 %891
      %893 = vrot.lane.b32.xlu0 %v429, 12
      %v894 = vpop.permute.xlu0 %893
      %895 = vrot.lane.b32.xlu0 %v431, 12
      %v896 = vpop.permute.xlu0 %895
      %897 = vrot.lane.b32.xlu0 %v432, 12
      %v898 = vpop.permute.xlu0 %897
      %899 = vrot.lane.b32.xlu0 %v434, 12
      %v900 = vpop.permute.xlu0 %899
      %901 = vrot.lane.b32.xlu0 %v435, 12
      %v902 = vpop.permute.xlu0 %901
      %903 = vrot.lane.b32.xlu0 %v437, 12
      %v904 = vpop.permute.xlu0 %903
      %905 = vrot.lane.b32.xlu0 %v438, 12
      %v906 = vpop.permute.xlu0 %905
      %907 = vrot.lane.b32.xlu0 %v440, 12
      %v908 = vpop.permute.xlu0 %907
      %909 = vrot.lane.b32.xlu0 %v441, 12
      %v910 = vpop.permute.xlu0 %909
      %911 = vrot.lane.b32.xlu0 %v443, 12
      %v912 = vpop.permute.xlu0 %911
      %913 = vrot.lane.b32.xlu0 %v444, 12
      %v914 = vpop.permute.xlu0 %913
      %915 = vrot.lane.b32.xlu0 %v446, 12
      %v916 = vpop.permute.xlu0 %915
      %917 = vrot.lane.b32.xlu0 %v447, 12
      %v918 = vpop.permute.xlu0 %917
      %919 = vrot.lane.b32.xlu0 %v449, 12
      %v920 = vpop.permute.xlu0 %919
      %921 = vrot.lane.b32.xlu0 %v450, 12
      %v922 = vpop.permute.xlu0 %921
      %v956 = vrot.slane %v449, 1
      %v957 = vrot.slane %v450, 1
      %v958 = vsel %vm503, %v956, %v957
      %v959 = vrot.slane %v451, 1
      %v960 = vsel %vm503, %v957, %v959
      %961 = vrot.lane.b32.xlu0 %v511, 16
      %v962 = vpop.permute.xlu0 %961
      %963 = vrot.lane.b32.xlu0 %v513, 16
      %v964 = vpop.permute.xlu0 %963
      %965 = vrot.lane.b32.xlu0 %v516, 16
      %v966 = vpop.permute.xlu0 %965
      %967 = vrot.lane.b32.xlu0 %v518, 16
      %v968 = vpop.permute.xlu0 %967
      %969 = vrot.lane.b32.xlu0 %v521, 16
      %v970 = vpop.permute.xlu0 %969
      %971 = vrot.lane.b32.xlu0 %v523, 16
      %v972 = vpop.permute.xlu0 %971
      %973 = vrot.lane.b32.xlu0 %v526, 16
      %v974 = vpop.permute.xlu0 %973
      %975 = vrot.lane.b32.xlu0 %v528, 16
      %v976 = vpop.permute.xlu0 %975
      %977 = vrot.lane.b32.xlu0 %v531, 16
      %v978 = vpop.permute.xlu0 %977
      %979 = vrot.lane.b32.xlu0 %v533, 16
      %v980 = vpop.permute.xlu0 %979
      %981 = vrot.lane.b32.xlu0 %v536, 16
      %v982 = vpop.permute.xlu0 %981
      %983 = vrot.lane.b32.xlu0 %v538, 16
      %v984 = vpop.permute.xlu0 %983
      %985 = vrot.lane.b32.xlu0 %v541, 16
      %v986 = vpop.permute.xlu0 %985
      %987 = vrot.lane.b32.xlu0 %v543, 16
      %v988 = vpop.permute.xlu0 %987
      %989 = vrot.lane.b32.xlu0 %v546, 16
      %v990 = vpop.permute.xlu0 %989
      %991 = vrot.lane.b32.xlu0 %v548, 16
      %v992 = vpop.permute.xlu0 %991
      %993 = vrot.lane.b32.xlu0 %v551, 16
      %v994 = vpop.permute.xlu0 %993
      %995 = vrot.lane.b32.xlu0 %v553, 16
      %v996 = vpop.permute.xlu0 %995
      %997 = vrot.lane.b32.xlu0 %v556, 16
      %v998 = vpop.permute.xlu0 %997
      %999 = vrot.lane.b32.xlu0 %v558, 16
      %v1000 = vpop.permute.xlu0 %999
      %1001 = vrot.lane.b32.xlu0 %v561, 16
      %v1002 = vpop.permute.xlu0 %1001
      %1003 = vrot.lane.b32.xlu0 %v563, 16
      %v1004 = vpop.permute.xlu0 %1003
      %1005 = vrot.lane.b32.xlu0 %v566, 16
      %v1006 = vpop.permute.xlu0 %1005
      %1007 = vrot.lane.b32.xlu0 %v568, 16
      %v1008 = vpop.permute.xlu0 %1007
      %1009 = vrot.lane.b32.xlu0 %v571, 16
      %v1010 = vpop.permute.xlu0 %1009
      %1011 = vrot.lane.b32.xlu0 %v573, 16
      %v1012 = vpop.permute.xlu0 %1011
      %1013 = vrot.lane.b32.xlu0 %v576, 16
      %v1014 = vpop.permute.xlu0 %1013
      %1015 = vrot.lane.b32.xlu0 %v578, 16
      %v1016 = vpop.permute.xlu0 %1015
      %1017 = vrot.lane.b32.xlu0 %v581, 16
      %v1018 = vpop.permute.xlu0 %1017
      %1019 = vrot.lane.b32.xlu0 %v583, 16
      %v1020 = vpop.permute.xlu0 %1019
      %1021 = vrot.lane.b32.xlu0 %v958, 16
      %v1022 = vpop.permute.xlu0 %1021
      %1023 = vrot.lane.b32.xlu0 %v960, 16
      %v1024 = vpop.permute.xlu0 %1023
      %v1057 = vrot.slane %v449, 2
      %v1058 = vrot.slane %v450, 2
      %v1059 = vsel %vm680, %v1057, %v1058
      %v1060 = vrot.slane %v451, 2
      %v1061 = vsel %vm680, %v1058, %v1060
      %1062 = vrot.lane.b32.xlu0 %v688, 20
      %v1063 = vpop.permute.xlu0 %1062
      %1064 = vrot.lane.b32.xlu0 %v690, 20
      %v1065 = vpop.permute.xlu0 %1064
      %1066 = vrot.lane.b32.xlu0 %v693, 20
      %v1067 = vpop.permute.xlu0 %1066
      %1068 = vrot.lane.b32.xlu0 %v695, 20
      %v1069 = vpop.permute.xlu0 %1068
      %1070 = vrot.lane.b32.xlu0 %v698, 20
      %v1071 = vpop.permute.xlu0 %1070
      %1072 = vrot.lane.b32.xlu0 %v700, 20
      %v1073 = vpop.permute.xlu0 %1072
      %1074 = vrot.lane.b32.xlu0 %v703, 20
      %v1075 = vpop.permute.xlu0 %1074
      %1076 = vrot.lane.b32.xlu0 %v705, 20
      %v1077 = vpop.permute.xlu0 %1076
      %1078 = vrot.lane.b32.xlu0 %v708, 20
      %v1079 = vpop.permute.xlu0 %1078
      %1080 = vrot.lane.b32.xlu0 %v710, 20
      %v1081 = vpop.permute.xlu0 %1080
      %1082 = vrot.lane.b32.xlu0 %v713, 20
      %v1083 = vpop.permute.xlu0 %1082
      %1084 = vrot.lane.b32.xlu0 %v715, 20
      %v1085 = vpop.permute.xlu0 %1084
      %1086 = vrot.lane.b32.xlu0 %v718, 20
      %v1087 = vpop.permute.xlu0 %1086
      %1088 = vrot.lane.b32.xlu0 %v720, 20
      %v1089 = vpop.permute.xlu0 %1088
      %1090 = vrot.lane.b32.xlu0 %v723, 20
      %v1091 = vpop.permute.xlu0 %1090
      %1092 = vrot.lane.b32.xlu0 %v725, 20
      %v1093 = vpop.permute.xlu0 %1092
      %1094 = vrot.lane.b32.xlu0 %v728, 20
      %v1095 = vpop.permute.xlu0 %1094
      %1096 = vrot.lane.b32.xlu0 %v730, 20
      %v1097 = vpop.permute.xlu0 %1096
      %1098 = vrot.lane.b32.xlu0 %v733, 20
      %v1099 = vpop.permute.xlu0 %1098
      %1100 = vrot.lane.b32.xlu0 %v735, 20
      %v1101 = vpop.permute.xlu0 %1100
      %1102 = vrot.lane.b32.xlu0 %v738, 20
      %v1103 = vpop.permute.xlu0 %1102
      %1104 = vrot.lane.b32.xlu0 %v740, 20
      %v1105 = vpop.permute.xlu0 %1104
      %1106 = vrot.lane.b32.xlu0 %v743, 20
      %v1107 = vpop.permute.xlu0 %1106
      %1108 = vrot.lane.b32.xlu0 %v745, 20
      %v1109 = vpop.permute.xlu0 %1108
      %1110 = vrot.lane.b32.xlu0 %v748, 20
      %v1111 = vpop.permute.xlu0 %1110
      %1112 = vrot.lane.b32.xlu0 %v750, 20
      %v1113 = vpop.permute.xlu0 %1112
      %1114 = vrot.lane.b32.xlu0 %v753, 20
      %v1115 = vpop.permute.xlu0 %1114
      %1116 = vrot.lane.b32.xlu0 %v755, 20
      %v1117 = vpop.permute.xlu0 %1116
      %1118 = vrot.lane.b32.xlu0 %v758, 20
      %v1119 = vpop.permute.xlu0 %1118
      %1120 = vrot.lane.b32.xlu0 %v760, 20
      %v1121 = vpop.permute.xlu0 %1120
      %1122 = vrot.lane.b32.xlu0 %v1059, 20
      %v1123 = vpop.permute.xlu0 %1122
      %1124 = vrot.lane.b32.xlu0 %v1061, 20
      %v1125 = vpop.permute.xlu0 %1124
      %1160 = vrot.lane.b32.xlu0 %v407, 24
      %v1161 = vpop.permute.xlu0 %1160
      %1162 = vrot.lane.b32.xlu0 %v408, 24
      %v1163 = vpop.permute.xlu0 %1162
      %1164 = vrot.lane.b32.xlu0 %v410, 24
      %v1165 = vpop.permute.xlu0 %1164
      %1166 = vrot.lane.b32.xlu0 %v411, 24
      %v1167 = vpop.permute.xlu0 %1166
      %1168 = vrot.lane.b32.xlu0 %v413, 24
      %v1169 = vpop.permute.xlu0 %1168
      %1170 = vrot.lane.b32.xlu0 %v414, 24
      %v1171 = vpop.permute.xlu0 %1170
      %1172 = vrot.lane.b32.xlu0 %v416, 24
      %v1173 = vpop.permute.xlu0 %1172
      %1174 = vrot.lane.b32.xlu0 %v417, 24
      %v1175 = vpop.permute.xlu0 %1174
      %1176 = vrot.lane.b32.xlu0 %v419, 24
      %v1177 = vpop.permute.xlu0 %1176
      %1178 = vrot.lane.b32.xlu0 %v420, 24
      %v1179 = vpop.permute.xlu0 %1178
      %1180 = vrot.lane.b32.xlu0 %v422, 24
      %v1181 = vpop.permute.xlu0 %1180
      %1182 = vrot.lane.b32.xlu0 %v423, 24
      %v1183 = vpop.permute.xlu0 %1182
      %1184 = vrot.lane.b32.xlu0 %v425, 24
      %v1185 = vpop.permute.xlu0 %1184
      %1186 = vrot.lane.b32.xlu0 %v426, 24
      %v1187 = vpop.permute.xlu0 %1186
      %1188 = vrot.lane.b32.xlu0 %v428, 24
      %v1189 = vpop.permute.xlu0 %1188
      %1190 = vrot.lane.b32.xlu0 %v429, 24
      %v1191 = vpop.permute.xlu0 %1190
      %1192 = vrot.lane.b32.xlu0 %v431, 24
      %v1193 = vpop.permute.xlu0 %1192
      %1194 = vrot.lane.b32.xlu0 %v432, 24
      %v1195 = vpop.permute.xlu0 %1194
      %1196 = vrot.lane.b32.xlu0 %v434, 24
      %v1197 = vpop.permute.xlu0 %1196
      %1198 = vrot.lane.b32.xlu0 %v435, 24
      %v1199 = vpop.permute.xlu0 %1198
      %1200 = vrot.lane.b32.xlu0 %v437, 24
      %v1201 = vpop.permute.xlu0 %1200
      %1202 = vrot.lane.b32.xlu0 %v438, 24
      %v1203 = vpop.permute.xlu0 %1202
      %1204 = vrot.lane.b32.xlu0 %v440, 24
      %v1205 = vpop.permute.xlu0 %1204
      %1206 = vrot.lane.b32.xlu0 %v441, 24
      %v1207 = vpop.permute.xlu0 %1206
      %1208 = vrot.lane.b32.xlu0 %v443, 24
      %v1209 = vpop.permute.xlu0 %1208
      %1210 = vrot.lane.b32.xlu0 %v444, 24
      %v1211 = vpop.permute.xlu0 %1210
      %1212 = vrot.lane.b32.xlu0 %v446, 24
      %v1213 = vpop.permute.xlu0 %1212
      %1214 = vrot.lane.b32.xlu0 %v447, 24
      %v1215 = vpop.permute.xlu0 %1214
      %1216 = vrot.lane.b32.xlu0 %v449, 24
      %v1217 = vpop.permute.xlu0 %1216
      %1218 = vrot.lane.b32.xlu0 %v450, 24
      %v1219 = vpop.permute.xlu0 %1218
      %1220 = vrot.lane.b32.xlu0 %v452, 24
      %v1221 = vpop.permute.xlu0 %1220
      %1222 = vrot.lane.b32.xlu0 %v453, 24
      %v1223 = vpop.permute.xlu0 %1222
      %v1257 = vrot.slane %v452, 1
      %v1258 = vrot.slane %v453, 1
      %v1259 = vsel %vm503, %v1257, %v1258
      %v1260 = vrot.slane %v454, 1
      %v1261 = vsel %vm503, %v1258, %v1260
      %1262 = vrot.lane.b32.xlu0 %v516, 28
      %v1263 = vpop.permute.xlu0 %1262
      %1264 = vrot.lane.b32.xlu0 %v518, 28
      %v1265 = vpop.permute.xlu0 %1264
      %1266 = vrot.lane.b32.xlu0 %v521, 28
      %v1267 = vpop.permute.xlu0 %1266
      %1268 = vrot.lane.b32.xlu0 %v523, 28
      %v1269 = vpop.permute.xlu0 %1268
      %1270 = vrot.lane.b32.xlu0 %v526, 28
      %v1271 = vpop.permute.xlu0 %1270
      %1272 = vrot.lane.b32.xlu0 %v528, 28
      %v1273 = vpop.permute.xlu0 %1272
      %1274 = vrot.lane.b32.xlu0 %v531, 28
      %v1275 = vpop.permute.xlu0 %1274
      %1276 = vrot.lane.b32.xlu0 %v533, 28
      %v1277 = vpop.permute.xlu0 %1276
      %1278 = vrot.lane.b32.xlu0 %v536, 28
      %v1279 = vpop.permute.xlu0 %1278
      %1280 = vrot.lane.b32.xlu0 %v538, 28
      %v1281 = vpop.permute.xlu0 %1280
      %1282 = vrot.lane.b32.xlu0 %v541, 28
      %v1283 = vpop.permute.xlu0 %1282
      %1284 = vrot.lane.b32.xlu0 %v543, 28
      %v1285 = vpop.permute.xlu0 %1284
      %1286 = vrot.lane.b32.xlu0 %v546, 28
      %v1287 = vpop.permute.xlu0 %1286
      %1288 = vrot.lane.b32.xlu0 %v548, 28
      %v1289 = vpop.permute.xlu0 %1288
      %1290 = vrot.lane.b32.xlu0 %v551, 28
      %v1291 = vpop.permute.xlu0 %1290
      %1292 = vrot.lane.b32.xlu0 %v553, 28
      %v1293 = vpop.permute.xlu0 %1292
      %1294 = vrot.lane.b32.xlu0 %v556, 28
      %v1295 = vpop.permute.xlu0 %1294
      %1296 = vrot.lane.b32.xlu0 %v558, 28
      %v1297 = vpop.permute.xlu0 %1296
      %1298 = vrot.lane.b32.xlu0 %v561, 28
      %v1299 = vpop.permute.xlu0 %1298
      %1300 = vrot.lane.b32.xlu0 %v563, 28
      %v1301 = vpop.permute.xlu0 %1300
      %1302 = vrot.lane.b32.xlu0 %v566, 28
      %v1303 = vpop.permute.xlu0 %1302
      %1304 = vrot.lane.b32.xlu0 %v568, 28
      %v1305 = vpop.permute.xlu0 %1304
      %1306 = vrot.lane.b32.xlu0 %v571, 28
      %v1307 = vpop.permute.xlu0 %1306
      %1308 = vrot.lane.b32.xlu0 %v573, 28
      %v1309 = vpop.permute.xlu0 %1308
      %1310 = vrot.lane.b32.xlu0 %v576, 28
      %v1311 = vpop.permute.xlu0 %1310
      %1312 = vrot.lane.b32.xlu0 %v578, 28
      %v1313 = vpop.permute.xlu0 %1312
      %1314 = vrot.lane.b32.xlu0 %v581, 28
      %v1315 = vpop.permute.xlu0 %1314
      %1316 = vrot.lane.b32.xlu0 %v583, 28
      %v1317 = vpop.permute.xlu0 %1316
      %1318 = vrot.lane.b32.xlu0 %v958, 28
      %v1319 = vpop.permute.xlu0 %1318
      %1320 = vrot.lane.b32.xlu0 %v960, 28
      %v1321 = vpop.permute.xlu0 %1320
      %1322 = vrot.lane.b32.xlu0 %v1259, 28
      %v1323 = vpop.permute.xlu0 %1322
      %1324 = vrot.lane.b32.xlu0 %v1261, 28
      %v1325 = vpop.permute.xlu0 %1324
      %v1358 = vrot.slane %v452, 2
      %v1359 = vrot.slane %v453, 2
      %v1360 = vsel %vm680, %v1358, %v1359
      %v1361 = vrot.slane %v454, 2
      %v1362 = vsel %vm680, %v1359, %v1361
      %1363 = vrot.lane.b32.xlu0 %v693, 32
      %v1364 = vpop.permute.xlu0 %1363
      %1365 = vrot.lane.b32.xlu0 %v695, 32
      %v1366 = vpop.permute.xlu0 %1365
      %1367 = vrot.lane.b32.xlu0 %v698, 32
      %v1368 = vpop.permute.xlu0 %1367
      %1369 = vrot.lane.b32.xlu0 %v700, 32
      %v1370 = vpop.permute.xlu0 %1369
      %1371 = vrot.lane.b32.xlu0 %v703, 32
      %v1372 = vpop.permute.xlu0 %1371
      %1373 = vrot.lane.b32.xlu0 %v705, 32
      %v1374 = vpop.permute.xlu0 %1373
      %1375 = vrot.lane.b32.xlu0 %v708, 32
      %v1376 = vpop.permute.xlu0 %1375
      %1377 = vrot.lane.b32.xlu0 %v710, 32
      %v1378 = vpop.permute.xlu0 %1377
      %1379 = vrot.lane.b32.xlu0 %v713, 32
      %v1380 = vpop.permute.xlu0 %1379
      %1381 = vrot.lane.b32.xlu0 %v715, 32
      %v1382 = vpop.permute.xlu0 %1381
      %1383 = vrot.lane.b32.xlu0 %v718, 32
      %v1384 = vpop.permute.xlu0 %1383
      %1385 = vrot.lane.b32.xlu0 %v720, 32
      %v1386 = vpop.permute.xlu0 %1385
      %1387 = vrot.lane.b32.xlu0 %v723, 32
      %v1388 = vpop.permute.xlu0 %1387
      %1389 = vrot.lane.b32.xlu0 %v725, 32
      %v1390 = vpop.permute.xlu0 %1389
      %1391 = vrot.lane.b32.xlu0 %v728, 32
      %v1392 = vpop.permute.xlu0 %1391
      %1393 = vrot.lane.b32.xlu0 %v730, 32
      %v1394 = vpop.permute.xlu0 %1393
      %1395 = vrot.lane.b32.xlu0 %v733, 32
      %v1396 = vpop.permute.xlu0 %1395
      %1397 = vrot.lane.b32.xlu0 %v735, 32
      %v1398 = vpop.permute.xlu0 %1397
      %1399 = vrot.lane.b32.xlu0 %v738, 32
      %v1400 = vpop.permute.xlu0 %1399
      %1401 = vrot.lane.b32.xlu0 %v740, 32
      %v1402 = vpop.permute.xlu0 %1401
      %1403 = vrot.lane.b32.xlu0 %v743, 32
      %v1404 = vpop.permute.xlu0 %1403
      %1405 = vrot.lane.b32.xlu0 %v745, 32
      %v1406 = vpop.permute.xlu0 %1405
      %1407 = vrot.lane.b32.xlu0 %v748, 32
      %v1408 = vpop.permute.xlu0 %1407
      %1409 = vrot.lane.b32.xlu0 %v750, 32
      %v1410 = vpop.permute.xlu0 %1409
      %1411 = vrot.lane.b32.xlu0 %v753, 32
      %v1412 = vpop.permute.xlu0 %1411
      %1413 = vrot.lane.b32.xlu0 %v755, 32
      %v1414 = vpop.permute.xlu0 %1413
      %1415 = vrot.lane.b32.xlu0 %v758, 32
      %v1416 = vpop.permute.xlu0 %1415
      %1417 = vrot.lane.b32.xlu0 %v760, 32
      %v1418 = vpop.permute.xlu0 %1417
      %1419 = vrot.lane.b32.xlu0 %v1059, 32
      %v1420 = vpop.permute.xlu0 %1419
      %1421 = vrot.lane.b32.xlu0 %v1061, 32
      %v1422 = vpop.permute.xlu0 %1421
      %1423 = vrot.lane.b32.xlu0 %v1360, 32
      %v1424 = vpop.permute.xlu0 %1423
      %1425 = vrot.lane.b32.xlu0 %v1362, 32
      %v1426 = vpop.permute.xlu0 %1425
      %v1459 = vsel %vm280, %v401, %v585
      %v1460 = vsel %vm280, %v402, %v587
      %v1461 = vsel %vm280, %v404, %v589
      %v1462 = vsel %vm280, %v405, %v591
      %v1463 = vsel %vm280, %v407, %v593
      %v1464 = vsel %vm280, %v408, %v595
      %v1465 = vsel %vm280, %v410, %v597
      %v1466 = vsel %vm280, %v411, %v599
      %v1467 = vsel %vm280, %v413, %v601
      %v1468 = vsel %vm280, %v414, %v603
      %v1469 = vsel %vm280, %v416, %v605
      %v1470 = vsel %vm280, %v417, %v607
      %v1471 = vsel %vm280, %v419, %v609
      %v1472 = vsel %vm280, %v420, %v611
      %v1473 = vsel %vm280, %v422, %v613
      %v1474 = vsel %vm280, %v423, %v615
      %v1475 = vsel %vm280, %v425, %v617
      %v1476 = vsel %vm280, %v426, %v619
      %v1477 = vsel %vm280, %v428, %v621
      %v1478 = vsel %vm280, %v429, %v623
      %v1479 = vsel %vm280, %v431, %v625
      %v1480 = vsel %vm280, %v432, %v627
      %v1481 = vsel %vm280, %v434, %v629
      %v1482 = vsel %vm280, %v435, %v631
      %v1483 = vsel %vm280, %v437, %v633
      %v1484 = vsel %vm280, %v438, %v635
      %v1485 = vsel %vm280, %v440, %v637
      %v1486 = vsel %vm280, %v441, %v639
      %v1487 = vsel %vm280, %v443, %v641
      %v1488 = vsel %vm280, %v444, %v643
      %v1489 = vsel %vm280, %v446, %v645
      %v1490 = vsel %vm280, %v447, %v647
      %vm1491 = vcmask 64512
      %v1492 = vsel %vm1491, %v1459, %v762
      %v1493 = vsel %vm1491, %v1460, %v764
      %v1494 = vsel %vm1491, %v1461, %v766
      %v1495 = vsel %vm1491, %v1462, %v768
      %v1496 = vsel %vm1491, %v1463, %v770
      %v1497 = vsel %vm1491, %v1464, %v772
      %v1498 = vsel %vm1491, %v1465, %v774
      %v1499 = vsel %vm1491, %v1466, %v776
      %v1500 = vsel %vm1491, %v1467, %v778
      %v1501 = vsel %vm1491, %v1468, %v780
      %v1502 = vsel %vm1491, %v1469, %v782
      %v1503 = vsel %vm1491, %v1470, %v784
      %v1504 = vsel %vm1491, %v1471, %v786
      %v1505 = vsel %vm1491, %v1472, %v788
      %v1506 = vsel %vm1491, %v1473, %v790
      %v1507 = vsel %vm1491, %v1474, %v792
      %v1508 = vsel %vm1491, %v1475, %v794
      %v1509 = vsel %vm1491, %v1476, %v796
      %v1510 = vsel %vm1491, %v1477, %v798
      %v1511 = vsel %vm1491, %v1478, %v800
      %v1512 = vsel %vm1491, %v1479, %v802
      %v1513 = vsel %vm1491, %v1480, %v804
      %v1514 = vsel %vm1491, %v1481, %v806
      %v1515 = vsel %vm1491, %v1482, %v808
      %v1516 = vsel %vm1491, %v1483, %v810
      %v1517 = vsel %vm1491, %v1484, %v812
      %v1518 = vsel %vm1491, %v1485, %v814
      %v1519 = vsel %vm1491, %v1486, %v816
      %v1520 = vsel %vm1491, %v1487, %v818
      %v1521 = vsel %vm1491, %v1488, %v820
      %v1522 = vsel %vm1491, %v1489, %v822
      %v1523 = vsel %vm1491, %v1490, %v824
      %vm1524 = vcmask 97280
      %v1525 = vsel %vm1524, %v1492, %v860
      %v1526 = vsel %vm1524, %v1493, %v862
      %v1527 = vsel %vm1524, %v1494, %v864
      %v1528 = vsel %vm1524, %v1495, %v866
      %v1529 = vsel %vm1524, %v1496, %v868
      %v1530 = vsel %vm1524, %v1497, %v870
      %v1531 = vsel %vm1524, %v1498, %v872
      %v1532 = vsel %vm1524, %v1499, %v874
      %v1533 = vsel %vm1524, %v1500, %v876
      %v1534 = vsel %vm1524, %v1501, %v878
      %v1535 = vsel %vm1524, %v1502, %v880
      %v1536 = vsel %vm1524, %v1503, %v882
      %v1537 = vsel %vm1524, %v1504, %v884
      %v1538 = vsel %vm1524, %v1505, %v886
      %v1539 = vsel %vm1524, %v1506, %v888
      %v1540 = vsel %vm1524, %v1507, %v890
      %v1541 = vsel %vm1524, %v1508, %v892
      %v1542 = vsel %vm1524, %v1509, %v894
      %v1543 = vsel %vm1524, %v1510, %v896
      %v1544 = vsel %vm1524, %v1511, %v898
      %v1545 = vsel %vm1524, %v1512, %v900
      %v1546 = vsel %vm1524, %v1513, %v902
      %v1547 = vsel %vm1524, %v1514, %v904
      %v1548 = vsel %vm1524, %v1515, %v906
      %v1549 = vsel %vm1524, %v1516, %v908
      %v1550 = vsel %vm1524, %v1517, %v910
      %v1551 = vsel %vm1524, %v1518, %v912
      %v1552 = vsel %vm1524, %v1519, %v914
      %v1553 = vsel %vm1524, %v1520, %v916
      %v1554 = vsel %vm1524, %v1521, %v918
      %v1555 = vsel %vm1524, %v1522, %v920
      %v1556 = vsel %vm1524, %v1523, %v922
      %vm1557 = vcmask 130048
      %v1558 = vsel %vm1557, %v1525, %v962
      %v1559 = vsel %vm1557, %v1526, %v964
      %v1560 = vsel %vm1557, %v1527, %v966
      %v1561 = vsel %vm1557, %v1528, %v968
      %v1562 = vsel %vm1557, %v1529, %v970
      %v1563 = vsel %vm1557, %v1530, %v972
      %v1564 = vsel %vm1557, %v1531, %v974
      %v1565 = vsel %vm1557, %v1532, %v976
      %v1566 = vsel %vm1557, %v1533, %v978
      %v1567 = vsel %vm1557, %v1534, %v980
      %v1568 = vsel %vm1557, %v1535, %v982
      %v1569 = vsel %vm1557, %v1536, %v984
      %v1570 = vsel %vm1557, %v1537, %v986
      %v1571 = vsel %vm1557, %v1538, %v988
      %v1572 = vsel %vm1557, %v1539, %v990
      %v1573 = vsel %vm1557, %v1540, %v992
      %v1574 = vsel %vm1557, %v1541, %v994
      %v1575 = vsel %vm1557, %v1542, %v996
      %v1576 = vsel %vm1557, %v1543, %v998
      %v1577 = vsel %vm1557, %v1544, %v1000
      %v1578 = vsel %vm1557, %v1545, %v1002
      %v1579 = vsel %vm1557, %v1546, %v1004
      %v1580 = vsel %vm1557, %v1547, %v1006
      %v1581 = vsel %vm1557, %v1548, %v1008
      %v1582 = vsel %vm1557, %v1549, %v1010
      %v1583 = vsel %vm1557, %v1550, %v1012
      %v1584 = vsel %vm1557, %v1551, %v1014
      %v1585 = vsel %vm1557, %v1552, %v1016
      %v1586 = vsel %vm1557, %v1553, %v1018
      %v1587 = vsel %vm1557, %v1554, %v1020
      %v1588 = vsel %vm1557, %v1555, %v1022
      %v1589 = vsel %vm1557, %v1556, %v1024
      %vm1590 = vcmask 162816
      %v1591 = vsel %vm1590, %v1558, %v1063
      %v1592 = vsel %vm1590, %v1559, %v1065
      %v1593 = vsel %vm1590, %v1560, %v1067
      %v1594 = vsel %vm1590, %v1561, %v1069
      %v1595 = vsel %vm1590, %v1562, %v1071
      %v1596 = vsel %vm1590, %v1563, %v1073
      %v1597 = vsel %vm1590, %v1564, %v1075
      %v1598 = vsel %vm1590, %v1565, %v1077
      %v1599 = vsel %vm1590, %v1566, %v1079
      %v1600 = vsel %vm1590, %v1567, %v1081
      %v1601 = vsel %vm1590, %v1568, %v1083
      %v1602 = vsel %vm1590, %v1569, %v1085
      %v1603 = vsel %vm1590, %v1570, %v1087
      %v1604 = vsel %vm1590, %v1571, %v1089
      %v1605 = vsel %vm1590, %v1572, %v1091
      %v1606 = vsel %vm1590, %v1573, %v1093
      %v1607 = vsel %vm1590, %v1574, %v1095
      %v1608 = vsel %vm1590, %v1575, %v1097
      %v1609 = vsel %vm1590, %v1576, %v1099
      %v1610 = vsel %vm1590, %v1577, %v1101
      %v1611 = vsel %vm1590, %v1578, %v1103
      %v1612 = vsel %vm1590, %v1579, %v1105
      %v1613 = vsel %vm1590, %v1580, %v1107
      %v1614 = vsel %vm1590, %v1581, %v1109
      %v1615 = vsel %vm1590, %v1582, %v1111
      %v1616 = vsel %vm1590, %v1583, %v1113
      %v1617 = vsel %vm1590, %v1584, %v1115
      %v1618 = vsel %vm1590, %v1585, %v1117
      %v1619 = vsel %vm1590, %v1586, %v1119
      %v1620 = vsel %vm1590, %v1587, %v1121
      %v1621 = vsel %vm1590, %v1588, %v1123
      %v1622 = vsel %vm1590, %v1589, %v1125
      %vm1623 = vcmask 195584
      %v1624 = vsel %vm1623, %v1591, %v1161
      %v1625 = vsel %vm1623, %v1592, %v1163
      %v1626 = vsel %vm1623, %v1593, %v1165
      %v1627 = vsel %vm1623, %v1594, %v1167
      %v1628 = vsel %vm1623, %v1595, %v1169
      %v1629 = vsel %vm1623, %v1596, %v1171
      %v1630 = vsel %vm1623, %v1597, %v1173
      %v1631 = vsel %vm1623, %v1598, %v1175
      %v1632 = vsel %vm1623, %v1599, %v1177
      %v1633 = vsel %vm1623, %v1600, %v1179
      %v1634 = vsel %vm1623, %v1601, %v1181
      %v1635 = vsel %vm1623, %v1602, %v1183
      %v1636 = vsel %vm1623, %v1603, %v1185
      %v1637 = vsel %vm1623, %v1604, %v1187
      %v1638 = vsel %vm1623, %v1605, %v1189
      %v1639 = vsel %vm1623, %v1606, %v1191
      %v1640 = vsel %vm1623, %v1607, %v1193
      %v1641 = vsel %vm1623, %v1608, %v1195
      %v1642 = vsel %vm1623, %v1609, %v1197
      %v1643 = vsel %vm1623, %v1610, %v1199
      %v1644 = vsel %vm1623, %v1611, %v1201
      %v1645 = vsel %vm1623, %v1612, %v1203
      %v1646 = vsel %vm1623, %v1613, %v1205
      %v1647 = vsel %vm1623, %v1614, %v1207
      %v1648 = vsel %vm1623, %v1615, %v1209
      %v1649 = vsel %vm1623, %v1616, %v1211
      %v1650 = vsel %vm1623, %v1617, %v1213
      %v1651 = vsel %vm1623, %v1618, %v1215
      %v1652 = vsel %vm1623, %v1619, %v1217
      %v1653 = vsel %vm1623, %v1620, %v1219
      %v1654 = vsel %vm1623, %v1621, %v1221
      %v1655 = vsel %vm1623, %v1622, %v1223
      %vm1656 = vcmask 228352
      %v1657 = vsel %vm1656, %v1624, %v1263
      %v1658 = vsel %vm1656, %v1625, %v1265
      %v1659 = vsel %vm1656, %v1626, %v1267
      %v1660 = vsel %vm1656, %v1627, %v1269
      %v1661 = vsel %vm1656, %v1628, %v1271
      %v1662 = vsel %vm1656, %v1629, %v1273
      %v1663 = vsel %vm1656, %v1630, %v1275
      %v1664 = vsel %vm1656, %v1631, %v1277
      %v1665 = vsel %vm1656, %v1632, %v1279
      %v1666 = vsel %vm1656, %v1633, %v1281
      %v1667 = vsel %vm1656, %v1634, %v1283
      %v1668 = vsel %vm1656, %v1635, %v1285
      %v1669 = vsel %vm1656, %v1636, %v1287
      %v1670 = vsel %vm1656, %v1637, %v1289
      %v1671 = vsel %vm1656, %v1638, %v1291
      %v1672 = vsel %vm1656, %v1639, %v1293
      %v1673 = vsel %vm1656, %v1640, %v1295
      %v1674 = vsel %vm1656, %v1641, %v1297
      %v1675 = vsel %vm1656, %v1642, %v1299
      %v1676 = vsel %vm1656, %v1643, %v1301
      %v1677 = vsel %vm1656, %v1644, %v1303
      %v1678 = vsel %vm1656, %v1645, %v1305
      %v1679 = vsel %vm1656, %v1646, %v1307
      %v1680 = vsel %vm1656, %v1647, %v1309
      %v1681 = vsel %vm1656, %v1648, %v1311
      %v1682 = vsel %vm1656, %v1649, %v1313
      %v1683 = vsel %vm1656, %v1650, %v1315
      %v1684 = vsel %vm1656, %v1651, %v1317
      %v1685 = vsel %vm1656, %v1652, %v1319
      %v1686 = vsel %vm1656, %v1653, %v1321
      %v1687 = vsel %vm1656, %v1654, %v1323
      %v1688 = vsel %vm1656, %v1655, %v1325
      %vm1689 = vcmask 261120
      %v1690 = vsel %vm1689, %v1657, %v1364
      %v1691 = vsel %vm1689, %v1658, %v1366
      %v1692 = vsel %vm1689, %v1659, %v1368
      %v1693 = vsel %vm1689, %v1660, %v1370
      %v1694 = vsel %vm1689, %v1661, %v1372
      %v1695 = vsel %vm1689, %v1662, %v1374
      %v1696 = vsel %vm1689, %v1663, %v1376
      %v1697 = vsel %vm1689, %v1664, %v1378
      %v1698 = vsel %vm1689, %v1665, %v1380
      %v1699 = vsel %vm1689, %v1666, %v1382
      %v1700 = vsel %vm1689, %v1667, %v1384
      %v1701 = vsel %vm1689, %v1668, %v1386
      %v1702 = vsel %vm1689, %v1669, %v1388
      %v1703 = vsel %vm1689, %v1670, %v1390
      %v1704 = vsel %vm1689, %v1671, %v1392
      %v1705 = vsel %vm1689, %v1672, %v1394
      %v1706 = vsel %vm1689, %v1673, %v1396
      %v1707 = vsel %vm1689, %v1674, %v1398
      %v1708 = vsel %vm1689, %v1675, %v1400
      %v1709 = vsel %vm1689, %v1676, %v1402
      %v1710 = vsel %vm1689, %v1677, %v1404
      %v1711 = vsel %vm1689, %v1678, %v1406
      %v1712 = vsel %vm1689, %v1679, %v1408
      %v1713 = vsel %vm1689, %v1680, %v1410
      %v1714 = vsel %vm1689, %v1681, %v1412
      %v1715 = vsel %vm1689, %v1682, %v1414
      %v1716 = vsel %vm1689, %v1683, %v1416
      %v1717 = vsel %vm1689, %v1684, %v1418
      %v1718 = vsel %vm1689, %v1685, %v1420
      %v1719 = vsel %vm1689, %v1686, %v1422
      %v1720 = vsel %vm1689, %v1687, %v1424
      %v1721 = vsel %vm1689, %v1688, %v1426
      %v1722 = vpack.c.bf16 %v1691, %v1690
      %v1723 = vpack.c.bf16 %v1693, %v1692
      %v1724 = vpack.c.bf16 %v1695, %v1694
      %v1725 = vpack.c.bf16 %v1697, %v1696
      %v1726 = vpack.c.bf16 %v1699, %v1698
      %v1727 = vpack.c.bf16 %v1701, %v1700
      %v1728 = vpack.c.bf16 %v1703, %v1702
      %v1729 = vpack.c.bf16 %v1705, %v1704
      %v1730 = vpack.c.bf16 %v1707, %v1706
      %v1731 = vpack.c.bf16 %v1709, %v1708
      %v1732 = vpack.c.bf16 %v1711, %v1710
      %v1733 = vpack.c.bf16 %v1713, %v1712
      %v1734 = vpack.c.bf16 %v1715, %v1714
      %v1735 = vpack.c.bf16 %v1717, %v1716
      %v1736 = vpack.c.bf16 %v1719, %v1718
      %v1737 = vpack.c.bf16 %v1721, %v1720
      %v1738 = vld [vmem:[%s1] sm:$0xf]
      %v1739 = vld [vmem:[%s1 + $0x4] sm:$0xf]
      %v1740 = vld [vmem:[%s1 + $0x8] sm:$0xf]
      %v1741 = vld [vmem:[%s1 + $0xc] sm:$0xf]
      %v1742 = vld [vmem:[%s1 + $0x10] sm:$0x3]
      %v1748 = vunpack.c.l.b16 %v1738
      %v1749 = vunpack.c.l.b16 %v1739
      %v1750 = vunpack.c.l.b16 %v1740
      %v1751 = vunpack.c.l.b16 %v1741
      %v1752 = vunpack.c.l.b16 %v1742
      %v1753 = vpack.c.b16 %v1749, %v1748
      %v1754 = vpack.c.b16 %v1751, %v1750
      %v1755 = vpack.c.b16 %v1752, %v1752
      %vm1758 = vcmask 293888
      %v1760 = vsel %vm1758, %v1722, 0
      %v1763 = vsel %vm1758, %v1723, 0
      %v1766 = vsel %vm1758, %v1724, 0
      %v1769 = vsel %vm1758, %v1725, 0
      %v1772 = vsel %vm1758, %v1726, 0
      %v1775 = vsel %vm1758, %v1727, 0
      %v1778 = vsel %vm1758, %v1728, 0
      %v1781 = vsel %vm1758, %v1729, 0
      %v1784 = vsel %vm1758, %v1730, 0
      %v1787 = vsel %vm1758, %v1731, 0
      %v1790 = vsel %vm1758, %v1732, 0
      %v1793 = vsel %vm1758, %v1733, 0
      %v1796 = vsel %vm1758, %v1734, 0
      %v1799 = vsel %vm1758, %v1735, 0
      %v1802 = vsel %vm1758, %v1736, 0
      %v1805 = vsel %vm1758, %v1737, 0
      %vm1807 = vcmask 1041408
      %v1809 = vsel %vm1807, %v1755, 0
      %1811 = vmatprep.subr.bf16.mxu0 0
      %1812 = vmatpush1.bf16.msra.mxu0 %v1753
      %1813 = vmatprep.subr.bf16.mxu0 0
      %1814 = vmatpush1.bf16.msra.mxu0 %v1754
      %1815 = vmatprep.subr.bf16.mxu0 0
      %1816 = vmatpush1.bf16.msra.mxu0 %v1809
      %1817 = vmatprep.subr.bf16.mxu0 0
      %1818 = vmatpush1.bf16.msra.mxu0 0
      %1819 = vmatprep.subr.bf16.mxu0 0
      %1820 = vmatpush1.bf16.msra.mxu0 0
      %1821 = vmatprep.subr.bf16.mxu0 0
      %1822 = vmatpush1.bf16.msra.mxu0 0
      %1823 = vmatprep.subr.bf16.mxu0 0
      %1824 = vmatpush1.bf16.msra.mxu0 0
      %1825 = vmatprep.subr.bf16.mxu0 0
      %1826 = vmatpush1.bf16.msra.mxu0 0
      %1827 = vmatprep.subr.bf16.mxu0 0
      %1828 = vmatpush1.bf16.msra.mxu0 0
      %1829 = vmatprep.subr.bf16.mxu0 0
      %1830 = vmatpush1.bf16.msra.mxu0 0
      %1831 = vmatprep.subr.bf16.mxu0 0
      %1832 = vmatpush1.bf16.msra.mxu0 0
      %1833 = vmatprep.subr.bf16.mxu0 0
      %1834 = vmatpush1.bf16.msra.mxu0 0
      %1835 = vmatprep.subr.bf16.mxu0 0
      %1836 = vmatpush1.bf16.msra.mxu0 0
      %1837 = vmatprep.subr.bf16.mxu0 0
      %1838 = vmatpush1.bf16.msra.mxu0 0
      %1839 = vmatprep.subr.bf16.mxu0 0
      %1840 = vmatpush1.bf16.msra.mxu0 0
      %1841 = vmatprep.subr.bf16.mxu0 0
      %1842 = vmatpush1.bf16.msra.mxu0 0
      %1843 = vmatprep.mubr.bf16.mxu0 0
      %1844 = vmatmul.mubr.bf16.gmra.mrb[0].mxu0 %v1760
      %v1845 = vpop.f32.mrb[0].mxu0
      %v1846 = vadd.f32 0.0, %v1845
      %v1847 = vpop.f32.mrb[0].mxu0
      %v1848 = vpop.f32.mrb[0].mxu0
      %v1849 = vadd.f32 0.0, %v1848
      %v1850 = vpop.f32.mrb[0].mxu0
      %1851 = vmatprep.mubr.bf16.mxu0 0
      %1852 = vmatmul.mubr.bf16.gmra.mrb[0].mxu0 %v1763
      %v1853 = vpop.f32.mrb[0].mxu0
      %v1854 = vadd.f32 0.0, %v1853
      %v1855 = vpop.f32.mrb[0].mxu0
      %v1856 = vpop.f32.mrb[0].mxu0
      %v1857 = vadd.f32 0.0, %v1856
      %v1858 = vpop.f32.mrb[0].mxu0
      %1859 = vmatprep.mubr.bf16.mxu0 0
      %1860 = vmatmul.mubr.bf16.gmra.mrb[0].mxu0 %v1766
      %v1861 = vpop.f32.mrb[0].mxu0
      %v1862 = vadd.f32 0.0, %v1861
      %v1863 = vpop.f32.mrb[0].mxu0
      %v1864 = vpop.f32.mrb[0].mxu0
      %v1865 = vadd.f32 0.0, %v1864
      %v1866 = vpop.f32.mrb[0].mxu0
      %1867 = vmatprep.mubr.bf16.mxu0 0
      %1868 = vmatmul.mubr.bf16.gmra.mrb[0].mxu0 %v1769
      %v1869 = vpop.f32.mrb[0].mxu0
      %v1870 = vadd.f32 0.0, %v1869
      %v1871 = vpop.f32.mrb[0].mxu0
      %v1872 = vpop.f32.mrb[0].mxu0
      %v1873 = vadd.f32 0.0, %v1872
      %v1874 = vpop.f32.mrb[0].mxu0
      %1875 = vmatprep.mubr.bf16.mxu0 0
      %1876 = vmatmul.mubr.bf16.gmra.mrb[0].mxu0 %v1772
      %v1877 = vpop.f32.mrb[0].mxu0
      %v1878 = vadd.f32 0.0, %v1877
      %v1879 = vpop.f32.mrb[0].mxu0
      %v1880 = vpop.f32.mrb[0].mxu0
      %v1881 = vadd.f32 0.0, %v1880
      %v1882 = vpop.f32.mrb[0].mxu0
      %1883 = vmatprep.mubr.bf16.mxu0 0
      %1884 = vmatmul.mubr.bf16.gmra.mrb[0].mxu0 %v1775
      %v1885 = vpop.f32.mrb[0].mxu0
      %v1886 = vadd.f32 0.0, %v1885
      %v1887 = vpop.f32.mrb[0].mxu0
      %v1888 = vpop.f32.mrb[0].mxu0
      %v1889 = vadd.f32 0.0, %v1888
      %v1890 = vpop.f32.mrb[0].mxu0
      %1891 = vmatprep.mubr.bf16.mxu0 0
      %1892 = vmatmul.mubr.bf16.gmra.mrb[0].mxu0 %v1778
      %v1893 = vpop.f32.mrb[0].mxu0
      %v1894 = vadd.f32 0.0, %v1893
      %v1895 = vpop.f32.mrb[0].mxu0
      %v1896 = vpop.f32.mrb[0].mxu0
      %v1897 = vadd.f32 0.0, %v1896
      %v1898 = vpop.f32.mrb[0].mxu0
      %1899 = vmatprep.mubr.bf16.mxu0 0
      %1900 = vmatmul.mubr.bf16.gmra.mrb[0].mxu0 %v1781
      %v1901 = vpop.f32.mrb[0].mxu0
      %v1902 = vadd.f32 0.0, %v1901
      %v1903 = vpop.f32.mrb[0].mxu0
      %v1904 = vpop.f32.mrb[0].mxu0
      %v1905 = vadd.f32 0.0, %v1904
      %v1906 = vpop.f32.mrb[0].mxu0
      %1907 = vmatprep.mubr.bf16.mxu0 0
      %1908 = vmatmul.mubr.bf16.gmra.mrb[0].mxu0 %v1784
      %v1909 = vpop.f32.mrb[0].mxu0
      %v1910 = vadd.f32 0.0, %v1909
      %v1911 = vpop.f32.mrb[0].mxu0
      %v1912 = vpop.f32.mrb[0].mxu0
      %v1913 = vadd.f32 0.0, %v1912
      %v1914 = vpop.f32.mrb[0].mxu0
      %1915 = vmatprep.mubr.bf16.mxu0 0
      %1916 = vmatmul.mubr.bf16.gmra.mrb[0].mxu0 %v1787
      %v1917 = vpop.f32.mrb[0].mxu0
      %v1918 = vadd.f32 0.0, %v1917
      %v1919 = vpop.f32.mrb[0].mxu0
      %v1920 = vpop.f32.mrb[0].mxu0
      %v1921 = vadd.f32 0.0, %v1920
      %v1922 = vpop.f32.mrb[0].mxu0
      %1923 = vmatprep.mubr.bf16.mxu0 0
      %1924 = vmatmul.mubr.bf16.gmra.mrb[0].mxu0 %v1790
      %v1925 = vpop.f32.mrb[0].mxu0
      %v1926 = vadd.f32 0.0, %v1925
      %v1927 = vpop.f32.mrb[0].mxu0
      %v1928 = vpop.f32.mrb[0].mxu0
      %v1929 = vadd.f32 0.0, %v1928
      %v1930 = vpop.f32.mrb[0].mxu0
      %1931 = vmatprep.mubr.bf16.mxu0 0
      %1932 = vmatmul.mubr.bf16.gmra.mrb[0].mxu0 %v1793
      %v1933 = vpop.f32.mrb[0].mxu0
      %v1934 = vadd.f32 0.0, %v1933
      %v1935 = vpop.f32.mrb[0].mxu0
      %v1936 = vpop.f32.mrb[0].mxu0
      %v1937 = vadd.f32 0.0, %v1936
      %v1938 = vpop.f32.mrb[0].mxu0
      %1939 = vmatprep.mubr.bf16.mxu0 0
      %1940 = vmatmul.mubr.bf16.gmra.mrb[0].mxu0 %v1796
      %v1941 = vpop.f32.mrb[0].mxu0
      %v1942 = vadd.f32 0.0, %v1941
      %v1943 = vpop.f32.mrb[0].mxu0
      %v1944 = vpop.f32.mrb[0].mxu0
      %v1945 = vadd.f32 0.0, %v1944
      %v1946 = vpop.f32.mrb[0].mxu0
      %1947 = vmatprep.mubr.bf16.mxu0 0
      %1948 = vmatmul.mubr.bf16.gmra.mrb[0].mxu0 %v1799
      %v1949 = vpop.f32.mrb[0].mxu0
      %v1950 = vadd.f32 0.0, %v1949
      %v1951 = vpop.f32.mrb[0].mxu0
      %v1952 = vpop.f32.mrb[0].mxu0
      %v1953 = vadd.f32 0.0, %v1952
      %v1954 = vpop.f32.mrb[0].mxu0
      %1955 = vmatprep.mubr.bf16.mxu0 0
      %1956 = vmatmul.mubr.bf16.gmra.mrb[0].mxu0 %v1802
      %v1957 = vpop.f32.mrb[0].mxu0
      %v1958 = vadd.f32 0.0, %v1957
      %v1959 = vpop.f32.mrb[0].mxu0
      %v1960 = vpop.f32.mrb[0].mxu0
      %v1961 = vadd.f32 0.0, %v1960
      %v1962 = vpop.f32.mrb[0].mxu0
      %1963 = vmatprep.mubr.bf16.mxu0 0
      %1964 = vmatmul.mubr.bf16.gmra.mrb[0].mxu0 %v1805
      %v1965 = vpop.f32.mrb[0].mxu0
      %v1966 = vadd.f32 0.0, %v1965
      %v1967 = vpop.f32.mrb[0].mxu0
      %v1968 = vpop.f32.mrb[0].mxu0
      %v1969 = vadd.f32 0.0, %v1968
      %v1970 = vpop.f32.mrb[0].mxu0
      %1971 = vdwg.mxu0
      %v1972 = vld [vmem:[%s2] sm:$0x1]
      %v1974 = vlaneseq
      %v1975 = vshrl.u32 %v1974, 7
      %v1976 = vsub.s32 0, %v1975
      %v1977 = vrot.slane %v1972, %v1976
      %v1979 = vmul.f32 %v1846, %v1977
      %v1980 = vmul.f32 %v1849, %v1977
      %v1981 = vmul.f32 %v1854, %v1977
      %v1982 = vmul.f32 %v1857, %v1977
      %v1983 = vmul.f32 %v1862, %v1977
      %v1984 = vmul.f32 %v1865, %v1977
      %v1985 = vmul.f32 %v1870, %v1977
      %v1986 = vmul.f32 %v1873, %v1977
      %v1987 = vmul.f32 %v1878, %v1977
      %v1988 = vmul.f32 %v1881, %v1977
      %v1989 = vmul.f32 %v1886, %v1977
      %v1990 = vmul.f32 %v1889, %v1977
      %v1991 = vmul.f32 %v1894, %v1977
      %v1992 = vmul.f32 %v1897, %v1977
      %v1993 = vmul.f32 %v1902, %v1977
      %v1994 = vmul.f32 %v1905, %v1977
      %v1995 = vmul.f32 %v1910, %v1977
      %v1996 = vmul.f32 %v1913, %v1977
      %v1997 = vmul.f32 %v1918, %v1977
      %v1998 = vmul.f32 %v1921, %v1977
      %v1999 = vmul.f32 %v1926, %v1977
      %v2000 = vmul.f32 %v1929, %v1977
      %v2001 = vmul.f32 %v1934, %v1977
      %v2002 = vmul.f32 %v1937, %v1977
      %v2003 = vmul.f32 %v1942, %v1977
      %v2004 = vmul.f32 %v1945, %v1977
      %v2005 = vmul.f32 %v1950, %v1977
      %v2006 = vmul.f32 %v1953, %v1977
      %v2007 = vmul.f32 %v1958, %v1977
      %v2008 = vmul.f32 %v1961, %v1977
      %v2009 = vmul.f32 %v1966, %v1977
      %v2010 = vmul.f32 %v1969, %v1977
      %v2011 = vld [vmem:[%s3] sm:$0x1]
      %v2013 = vlaneseq
      %v2014 = vshrl.u32 %v2013, 7
      %v2015 = vsub.s32 0, %v2014
      %v2016 = vrot.slane %v2011, %v2015
      %v2018 = vadd.f32 %v1979, %v2016
      %v2019 = vadd.f32 %v1980, %v2016
      %v2020 = vadd.f32 %v1981, %v2016
      %v2021 = vadd.f32 %v1982, %v2016
      %v2022 = vadd.f32 %v1983, %v2016
      %v2023 = vadd.f32 %v1984, %v2016
      %v2024 = vadd.f32 %v1985, %v2016
      %v2025 = vadd.f32 %v1986, %v2016
      %v2026 = vadd.f32 %v1987, %v2016
      %v2027 = vadd.f32 %v1988, %v2016
      %v2028 = vadd.f32 %v1989, %v2016
      %v2029 = vadd.f32 %v1990, %v2016
      %v2030 = vadd.f32 %v1991, %v2016
      %v2031 = vadd.f32 %v1992, %v2016
      %v2032 = vadd.f32 %v1993, %v2016
      %v2033 = vadd.f32 %v1994, %v2016
      %v2034 = vadd.f32 %v1995, %v2016
      %v2035 = vadd.f32 %v1996, %v2016
      %v2036 = vadd.f32 %v1997, %v2016
      %v2037 = vadd.f32 %v1998, %v2016
      %v2038 = vadd.f32 %v1999, %v2016
      %v2039 = vadd.f32 %v2000, %v2016
      %v2040 = vadd.f32 %v2001, %v2016
      %v2041 = vadd.f32 %v2002, %v2016
      %v2042 = vadd.f32 %v2003, %v2016
      %v2043 = vadd.f32 %v2004, %v2016
      %v2044 = vadd.f32 %v2005, %v2016
      %v2045 = vadd.f32 %v2006, %v2016
      %v2046 = vadd.f32 %v2007, %v2016
      %v2047 = vadd.f32 %v2008, %v2016
      %v2048 = vadd.f32 %v2009, %v2016
      %v2049 = vadd.f32 %v2010, %v2016
      %v2050 = vmax.f32 %v2018, 0.0
      %v2051 = vmax.f32 %v2019, 0.0
      %v2052 = vmax.f32 %v2020, 0.0
      %v2053 = vmax.f32 %v2021, 0.0
      %v2054 = vmax.f32 %v2022, 0.0
      %v2055 = vmax.f32 %v2023, 0.0
      %v2056 = vmax.f32 %v2024, 0.0
      %v2057 = vmax.f32 %v2025, 0.0
      %v2058 = vmax.f32 %v2026, 0.0
      %v2059 = vmax.f32 %v2027, 0.0
      %v2060 = vmax.f32 %v2028, 0.0
      %v2061 = vmax.f32 %v2029, 0.0
      %v2062 = vmax.f32 %v2030, 0.0
      %v2063 = vmax.f32 %v2031, 0.0
      %v2064 = vmax.f32 %v2032, 0.0
      %v2065 = vmax.f32 %v2033, 0.0
      %v2066 = vmax.f32 %v2034, 0.0
      %v2067 = vmax.f32 %v2035, 0.0
      %v2068 = vmax.f32 %v2036, 0.0
      %v2069 = vmax.f32 %v2037, 0.0
      %v2070 = vmax.f32 %v2038, 0.0
      %v2071 = vmax.f32 %v2039, 0.0
      %v2072 = vmax.f32 %v2040, 0.0
      %v2073 = vmax.f32 %v2041, 0.0
      %v2074 = vmax.f32 %v2042, 0.0
      %v2075 = vmax.f32 %v2043, 0.0
      %v2076 = vmax.f32 %v2044, 0.0
      %v2077 = vmax.f32 %v2045, 0.0
      %v2078 = vmax.f32 %v2046, 0.0
      %v2079 = vmax.f32 %v2047, 0.0
      %v2080 = vmax.f32 %v2048, 0.0
      %v2081 = vmax.f32 %v2049, 0.0
      %2082 = vst.msk [vmem:[%s368 + $0x1] sm:$0xff] %vm280, %v2050
      %2083 = vst.msk [vmem:[%s368 + $0x9] sm:$0xff] %vm280, %v2051
      %2084 = vst.msk [vmem:[%s368 + $0x19] sm:$0xff] %vm280, %v2052
      %2085 = vst.msk [vmem:[%s368 + $0x21] sm:$0xff] %vm280, %v2053
      %2086 = vst.msk [vmem:[%s368 + $0x31] sm:$0xff] %vm280, %v2054
      %2087 = vst.msk [vmem:[%s368 + $0x39] sm:$0xff] %vm280, %v2055
      %2088 = vst.msk [vmem:[%s368 + $0x49] sm:$0xff] %vm280, %v2056
      %2089 = vst.msk [vmem:[%s368 + $0x51] sm:$0xff] %vm280, %v2057
      %2090 = vst.msk [vmem:[%s368 + $0x61] sm:$0xff] %vm280, %v2058
      %2091 = vst.msk [vmem:[%s368 + $0x69] sm:$0xff] %vm280, %v2059
      %2092 = vst.msk [vmem:[%s368 + $0x79] sm:$0xff] %vm280, %v2060
      %2093 = vst.msk [vmem:[%s368 + $0x81] sm:$0xff] %vm280, %v2061
      %2094 = vst.msk [vmem:[%s368 + $0x91] sm:$0xff] %vm280, %v2062
      %2095 = vst.msk [vmem:[%s368 + $0x99] sm:$0xff] %vm280, %v2063
      %2096 = vst.msk [vmem:[%s368 + $0xa9] sm:$0xff] %vm280, %v2064
      %2097 = vst.msk [vmem:[%s368 + $0xb1] sm:$0xff] %vm280, %v2065
      %2098 = vst.msk [vmem:[%s368 + $0xc1] sm:$0xff] %vm280, %v2066
      %2099 = vst.msk [vmem:[%s368 + $0xc9] sm:$0xff] %vm280, %v2067
      %2100 = vst.msk [vmem:[%s368 + $0xd9] sm:$0xff] %vm280, %v2068
      %2101 = vst.msk [vmem:[%s368 + $0xe1] sm:$0xff] %vm280, %v2069
      %2102 = vst.msk [vmem:[%s368 + $0xf1] sm:$0xff] %vm280, %v2070
      %2103 = vst.msk [vmem:[%s368 + $0xf9] sm:$0xff] %vm280, %v2071
      %2104 = vst.msk [vmem:[%s368 + $0x109] sm:$0xff] %vm280, %v2072
      %2105 = vst.msk [vmem:[%s368 + $0x111] sm:$0xff] %vm280, %v2073
      %2106 = vst.msk [vmem:[%s368 + $0x121] sm:$0xff] %vm280, %v2074
      %2107 = vst.msk [vmem:[%s368 + $0x129] sm:$0xff] %vm280, %v2075
      %2108 = vst.msk [vmem:[%s368 + $0x139] sm:$0xff] %vm280, %v2076
      %2109 = vst.msk [vmem:[%s368 + $0x141] sm:$0xff] %vm280, %v2077
      %2110 = vst.msk [vmem:[%s368 + $0x151] sm:$0xff] %vm280, %v2078
      %2111 = vst.msk [vmem:[%s368 + $0x159] sm:$0xff] %vm280, %v2079
      %2112 = vst.msk [vmem:[%s368 + $0x169] sm:$0xff] %vm280, %v2080
      %2113 = vst.msk [vmem:[%s368 + $0x171] sm:$0xff] %vm280, %v2081
      %v2114 = vld [vmem:[#allocation2] sm:$0xff]
      %v2115 = vld [vmem:[#allocation2 + $0x8] sm:$0xff]
      %v2116 = vld [vmem:[#allocation2 + $0x10] sm:$0x3]
      %v2117 = vld [vmem:[#allocation2 + $0x18] sm:$0xff]
      %v2118 = vld [vmem:[#allocation2 + $0x20] sm:$0xff]
      %v2119 = vld [vmem:[#allocation2 + $0x28] sm:$0x3]
      %v2120 = vld [vmem:[#allocation2 + $0x30] sm:$0xff]
      %v2121 = vld [vmem:[#allocation2 + $0x38] sm:$0xff]
      %v2122 = vld [vmem:[#allocation2 + $0x40] sm:$0x3]
      %v2123 = vld [vmem:[#allocation2 + $0x48] sm:$0xff]
      %v2124 = vld [vmem:[#allocation2 + $0x50] sm:$0xff]
      %v2125 = vld [vmem:[#allocation2 + $0x58] sm:$0x3]
      %v2126 = vld [vmem:[#allocation2 + $0x60] sm:$0xff]
      %v2127 = vld [vmem:[#allocation2 + $0x68] sm:$0xff]
      %v2128 = vld [vmem:[#allocation2 + $0x70] sm:$0x3]
      %v2129 = vld [vmem:[#allocation2 + $0x78] sm:$0xff]
      %v2130 = vld [vmem:[#allocation2 + $0x80] sm:$0xff]
      %v2131 = vld [vmem:[#allocation2 + $0x88] sm:$0x3]
      %v2132 = vld [vmem:[#allocation2 + $0x90] sm:$0xff]
      %v2133 = vld [vmem:[#allocation2 + $0x98] sm:$0xff]
      %v2134 = vld [vmem:[#allocation2 + $0xa0] sm:$0x3]
      %v2135 = vld [vmem:[#allocation2 + $0xa8] sm:$0xff]
      %v2136 = vld [vmem:[#allocation2 + $0xb0] sm:$0xff]
      %v2137 = vld [vmem:[#allocation2 + $0xb8] sm:$0x3]
      %v2138 = vld [vmem:[#allocation2 + $0xc0] sm:$0xff]
      %v2139 = vld [vmem:[#allocation2 + $0xc8] sm:$0xff]
      %v2140 = vld [vmem:[#allocation2 + $0xd0] sm:$0x3]
      %v2141 = vld [vmem:[#allocation2 + $0xd8] sm:$0xff]
      %v2142 = vld [vmem:[#allocation2 + $0xe0] sm:$0xff]
      %v2143 = vld [vmem:[#allocation2 + $0xe8] sm:$0x3]
      %v2144 = vld [vmem:[#allocation2 + $0xf0] sm:$0xff]
      %v2145 = vld [vmem:[#allocation2 + $0xf8] sm:$0xff]
      %v2146 = vld [vmem:[#allocation2 + $0x100] sm:$0x3]
      %v2147 = vld [vmem:[#allocation2 + $0x108] sm:$0xff]
      %v2148 = vld [vmem:[#allocation2 + $0x110] sm:$0xff]
      %v2149 = vld [vmem:[#allocation2 + $0x118] sm:$0x3]
      %v2150 = vld [vmem:[#allocation2 + $0x120] sm:$0xff]
      %v2151 = vld [vmem:[#allocation2 + $0x128] sm:$0xff]
      %v2152 = vld [vmem:[#allocation2 + $0x130] sm:$0x3]
      %v2153 = vld [vmem:[#allocation2 + $0x138] sm:$0xff]
      %v2154 = vld [vmem:[#allocation2 + $0x140] sm:$0xff]
      %v2155 = vld [vmem:[#allocation2 + $0x148] sm:$0x3]
      %v2156 = vld [vmem:[#allocation2 + $0x150] sm:$0xff]
      %v2157 = vld [vmem:[#allocation2 + $0x158] sm:$0xff]
      %v2158 = vld [vmem:[#allocation2 + $0x160] sm:$0x3]
      %v2159 = vld [vmem:[#allocation2 + $0x168] sm:$0xff]
      %v2160 = vld [vmem:[#allocation2 + $0x170] sm:$0xff]
      %v2161 = vld [vmem:[#allocation2 + $0x178] sm:$0x3]
      %v2162 = vld [vmem:[#allocation2 + $0x180] sm:$0xff]
      %v2163 = vld [vmem:[#allocation2 + $0x188] sm:$0xff]
      %v2164 = vld [vmem:[#allocation2 + $0x190] sm:$0x3]
      %v2165 = vld [vmem:[#allocation2 + $0x198] sm:$0xff]
      %v2166 = vld [vmem:[#allocation2 + $0x1a0] sm:$0xff]
      %v2167 = vld [vmem:[#allocation2 + $0x1a8] sm:$0x3]
      %v2216 = vrot.slane %v2114, 1
      %v2217 = vrot.slane %v2115, 1
      %v2218 = vsel %vm503, %v2216, %v2217
      %v2219 = vrot.slane %v2116, 1
      %v2220 = vsel %vm503, %v2217, %v2219
      %v2221 = vrot.slane %v2117, 1
      %v2222 = vrot.slane %v2118, 1
      %v2223 = vsel %vm503, %v2221, %v2222
      %v2224 = vrot.slane %v2119, 1
      %v2225 = vsel %vm503, %v2222, %v2224
      %v2226 = vrot.slane %v2120, 1
      %v2227 = vrot.slane %v2121, 1
      %v2228 = vsel %vm503, %v2226, %v2227
      %v2229 = vrot.slane %v2122, 1
      %v2230 = vsel %vm503, %v2227, %v2229
      %v2231 = vrot.slane %v2123, 1
      %v2232 = vrot.slane %v2124, 1
      %v2233 = vsel %vm503, %v2231, %v2232
      %v2234 = vrot.slane %v2125, 1
      %v2235 = vsel %vm503, %v2232, %v2234
      %v2236 = vrot.slane %v2126, 1
      %v2237 = vrot.slane %v2127, 1
      %v2238 = vsel %vm503, %v2236, %v2237
      %v2239 = vrot.slane %v2128, 1
      %v2240 = vsel %vm503, %v2237, %v2239
      %v2241 = vrot.slane %v2129, 1
      %v2242 = vrot.slane %v2130, 1
      %v2243 = vsel %vm503, %v2241, %v2242
      %v2244 = vrot.slane %v2131, 1
      %v2245 = vsel %vm503, %v2242, %v2244
      %v2246 = vrot.slane %v2132, 1
      %v2247 = vrot.slane %v2133, 1
      %v2248 = vsel %vm503, %v2246, %v2247
      %v2249 = vrot.slane %v2134, 1
      %v2250 = vsel %vm503, %v2247, %v2249
      %v2251 = vrot.slane %v2135, 1
      %v2252 = vrot.slane %v2136, 1
      %v2253 = vsel %vm503, %v2251, %v2252
      %v2254 = vrot.slane %v2137, 1
      %v2255 = vsel %vm503, %v2252, %v2254
      %v2256 = vrot.slane %v2138, 1
      %v2257 = vrot.slane %v2139, 1
      %v2258 = vsel %vm503, %v2256, %v2257
      %v2259 = vrot.slane %v2140, 1
      %v2260 = vsel %vm503, %v2257, %v2259
      %v2261 = vrot.slane %v2141, 1
      %v2262 = vrot.slane %v2142, 1
      %v2263 = vsel %vm503, %v2261, %v2262
      %v2264 = vrot.slane %v2143, 1
      %v2265 = vsel %vm503, %v2262, %v2264
      %v2266 = vrot.slane %v2144, 1
      %v2267 = vrot.slane %v2145, 1
      %v2268 = vsel %vm503, %v2266, %v2267
      %v2269 = vrot.slane %v2146, 1
      %v2270 = vsel %vm503, %v2267, %v2269
      %v2271 = vrot.slane %v2147, 1
      %v2272 = vrot.slane %v2148, 1
      %v2273 = vsel %vm503, %v2271, %v2272
      %v2274 = vrot.slane %v2149, 1
      %v2275 = vsel %vm503, %v2272, %v2274
      %v2276 = vrot.slane %v2150, 1
      %v2277 = vrot.slane %v2151, 1
      %v2278 = vsel %vm503, %v2276, %v2277
      %v2279 = vrot.slane %v2152, 1
      %v2280 = vsel %vm503, %v2277, %v2279
      %v2281 = vrot.slane %v2153, 1
      %v2282 = vrot.slane %v2154, 1
      %v2283 = vsel %vm503, %v2281, %v2282
      %v2284 = vrot.slane %v2155, 1
      %v2285 = vsel %vm503, %v2282, %v2284
      %v2286 = vrot.slane %v2156, 1
      %v2287 = vrot.slane %v2157, 1
      %v2288 = vsel %vm503, %v2286, %v2287
      %v2289 = vrot.slane %v2158, 1
      %v2290 = vsel %vm503, %v2287, %v2289
      %v2291 = vrot.slane %v2159, 1
      %v2292 = vrot.slane %v2160, 1
      %v2293 = vsel %vm503, %v2291, %v2292
      %v2294 = vrot.slane %v2161, 1
      %v2295 = vsel %vm503, %v2292, %v2294
      %2296 = vrot.lane.b32.xlu0 %v2218, 4
      %v2297 = vpop.permute.xlu0 %2296
      %2298 = vrot.lane.b32.xlu0 %v2220, 4
      %v2299 = vpop.permute.xlu0 %2298
      %2300 = vrot.lane.b32.xlu0 %v2223, 4
      %v2301 = vpop.permute.xlu0 %2300
      %2302 = vrot.lane.b32.xlu0 %v2225, 4
      %v2303 = vpop.permute.xlu0 %2302
      %2304 = vrot.lane.b32.xlu0 %v2228, 4
      %v2305 = vpop.permute.xlu0 %2304
      %2306 = vrot.lane.b32.xlu0 %v2230, 4
      %v2307 = vpop.permute.xlu0 %2306
      %2308 = vrot.lane.b32.xlu0 %v2233, 4
      %v2309 = vpop.permute.xlu0 %2308
      %2310 = vrot.lane.b32.xlu0 %v2235, 4
      %v2311 = vpop.permute.xlu0 %2310
      %2312 = vrot.lane.b32.xlu0 %v2238, 4
      %v2313 = vpop.permute.xlu0 %2312
      %2314 = vrot.lane.b32.xlu0 %v2240, 4
      %v2315 = vpop.permute.xlu0 %2314
      %2316 = vrot.lane.b32.xlu0 %v2243, 4
      %v2317 = vpop.permute.xlu0 %2316
      %2318 = vrot.lane.b32.xlu0 %v2245, 4
      %v2319 = vpop.permute.xlu0 %2318
      %2320 = vrot.lane.b32.xlu0 %v2248, 4
      %v2321 = vpop.permute.xlu0 %2320
      %2322 = vrot.lane.b32.xlu0 %v2250, 4
      %v2323 = vpop.permute.xlu0 %2322
      %2324 = vrot.lane.b32.xlu0 %v2253, 4
      %v2325 = vpop.permute.xlu0 %2324
      %2326 = vrot.lane.b32.xlu0 %v2255, 4
      %v2327 = vpop.permute.xlu0 %2326
      %2328 = vrot.lane.b32.xlu0 %v2258, 4
      %v2329 = vpop.permute.xlu0 %2328
      %2330 = vrot.lane.b32.xlu0 %v2260, 4
      %v2331 = vpop.permute.xlu0 %2330
      %2332 = vrot.lane.b32.xlu0 %v2263, 4
      %v2333 = vpop.permute.xlu0 %2332
      %2334 = vrot.lane.b32.xlu0 %v2265, 4
      %v2335 = vpop.permute.xlu0 %2334
      %2336 = vrot.lane.b32.xlu0 %v2268, 4
      %v2337 = vpop.permute.xlu0 %2336
      %2338 = vrot.lane.b32.xlu0 %v2270, 4
      %v2339 = vpop.permute.xlu0 %2338
      %2340 = vrot.lane.b32.xlu0 %v2273, 4
      %v2341 = vpop.permute.xlu0 %2340
      %2342 = vrot.lane.b32.xlu0 %v2275, 4
      %v2343 = vpop.permute.xlu0 %2342
      %2344 = vrot.lane.b32.xlu0 %v2278, 4
      %v2345 = vpop.permute.xlu0 %2344
      %2346 = vrot.lane.b32.xlu0 %v2280, 4
      %v2347 = vpop.permute.xlu0 %2346
      %2348 = vrot.lane.b32.xlu0 %v2283, 4
      %v2349 = vpop.permute.xlu0 %2348
      %2350 = vrot.lane.b32.xlu0 %v2285, 4
      %v2351 = vpop.permute.xlu0 %2350
      %2352 = vrot.lane.b32.xlu0 %v2288, 4
      %v2353 = vpop.permute.xlu0 %2352
      %2354 = vrot.lane.b32.xlu0 %v2290, 4
      %v2355 = vpop.permute.xlu0 %2354
      %2356 = vrot.lane.b32.xlu0 %v2293, 4
      %v2357 = vpop.permute.xlu0 %2356
      %2358 = vrot.lane.b32.xlu0 %v2295, 4
      %v2359 = vpop.permute.xlu0 %2358
      %v2392 = vrot.slane %v2114, 2
      %v2393 = vrot.slane %v2115, 2
      %v2394 = vsel %vm680, %v2392, %v2393
      %v2395 = vrot.slane %v2116, 2
      %v2396 = vsel %vm680, %v2393, %v2395
      %v2397 = vrot.slane %v2117, 2
      %v2398 = vrot.slane %v2118, 2
      %v2399 = vsel %vm680, %v2397, %v2398
      %v2400 = vrot.slane %v2119, 2
      %v2401 = vsel %vm680, %v2398, %v2400
      %v2402 = vrot.slane %v2120, 2
      %v2403 = vrot.slane %v2121, 2
      %v2404 = vsel %vm680, %v2402, %v2403
      %v2405 = vrot.slane %v2122, 2
      %v2406 = vsel %vm680, %v2403, %v2405
      %v2407 = vrot.slane %v2123, 2
      %v2408 = vrot.slane %v2124, 2
      %v2409 = vsel %vm680, %v2407, %v2408
      %v2410 = vrot.slane %v2125, 2
      %v2411 = vsel %vm680, %v2408, %v2410
      %v2412 = vrot.slane %v2126, 2
      %v2413 = vrot.slane %v2127, 2
      %v2414 = vsel %vm680, %v2412, %v2413
      %v2415 = vrot.slane %v2128, 2
      %v2416 = vsel %vm680, %v2413, %v2415
      %v2417 = vrot.slane %v2129, 2
      %v2418 = vrot.slane %v2130, 2
      %v2419 = vsel %vm680, %v2417, %v2418
      %v2420 = vrot.slane %v2131, 2
      %v2421 = vsel %vm680, %v2418, %v2420
      %v2422 = vrot.slane %v2132, 2
      %v2423 = vrot.slane %v2133, 2
      %v2424 = vsel %vm680, %v2422, %v2423
      %v2425 = vrot.slane %v2134, 2
      %v2426 = vsel %vm680, %v2423, %v2425
      %v2427 = vrot.slane %v2135, 2
      %v2428 = vrot.slane %v2136, 2
      %v2429 = vsel %vm680, %v2427, %v2428
      %v2430 = vrot.slane %v2137, 2
      %v2431 = vsel %vm680, %v2428, %v2430
      %v2432 = vrot.slane %v2138, 2
      %v2433 = vrot.slane %v2139, 2
      %v2434 = vsel %vm680, %v2432, %v2433
      %v2435 = vrot.slane %v2140, 2
      %v2436 = vsel %vm680, %v2433, %v2435
      %v2437 = vrot.slane %v2141, 2
      %v2438 = vrot.slane %v2142, 2
      %v2439 = vsel %vm680, %v2437, %v2438
      %v2440 = vrot.slane %v2143, 2
      %v2441 = vsel %vm680, %v2438, %v2440
      %v2442 = vrot.slane %v2144, 2
      %v2443 = vrot.slane %v2145, 2
      %v2444 = vsel %vm680, %v2442, %v2443
      %v2445 = vrot.slane %v2146, 2
      %v2446 = vsel %vm680, %v2443, %v2445
      %v2447 = vrot.slane %v2147, 2
      %v2448 = vrot.slane %v2148, 2
      %v2449 = vsel %vm680, %v2447, %v2448
      %v2450 = vrot.slane %v2149, 2
      %v2451 = vsel %vm680, %v2448, %v2450
      %v2452 = vrot.slane %v2150, 2
      %v2453 = vrot.slane %v2151, 2
      %v2454 = vsel %vm680, %v2452, %v2453
      %v2455 = vrot.slane %v2152, 2
      %v2456 = vsel %vm680, %v2453, %v2455
      %v2457 = vrot.slane %v2153, 2
      %v2458 = vrot.slane %v2154, 2
      %v2459 = vsel %vm680, %v2457, %v2458
      %v2460 = vrot.slane %v2155, 2
      %v2461 = vsel %vm680, %v2458, %v2460
      %v2462 = vrot.slane %v2156, 2
      %v2463 = vrot.slane %v2157, 2
      %v2464 = vsel %vm680, %v2462, %v2463
      %v2465 = vrot.slane %v2158, 2
      %v2466 = vsel %vm680, %v2463, %v2465
      %v2467 = vrot.slane %v2159, 2
      %v2468 = vrot.slane %v2160, 2
      %v2469 = vsel %vm680, %v2467, %v2468
      %v2470 = vrot.slane %v2161, 2
      %v2471 = vsel %vm680, %v2468, %v2470
      %2472 = vrot.lane.b32.xlu0 %v2394, 8
      %v2473 = vpop.permute.xlu0 %2472
      %2474 = vrot.lane.b32.xlu0 %v2396, 8
      %v2475 = vpop.permute.xlu0 %2474
      %2476 = vrot.lane.b32.xlu0 %v2399, 8
      %v2477 = vpop.permute.xlu0 %2476
      %2478 = vrot.lane.b32.xlu0 %v2401, 8
      %v2479 = vpop.permute.xlu0 %2478
      %2480 = vrot.lane.b32.xlu0 %v2404, 8
      %v2481 = vpop.permute.xlu0 %2480
      %2482 = vrot.lane.b32.xlu0 %v2406, 8
      %v2483 = vpop.permute.xlu0 %2482
      %2484 = vrot.lane.b32.xlu0 %v2409, 8
      %v2485 = vpop.permute.xlu0 %2484
      %2486 = vrot.lane.b32.xlu0 %v2411, 8
      %v2487 = vpop.permute.xlu0 %2486
      %2488 = vrot.lane.b32.xlu0 %v2414, 8
      %v2489 = vpop.permute.xlu0 %2488
      %2490 = vrot.lane.b32.xlu0 %v2416, 8
      %v2491 = vpop.permute.xlu0 %2490
      %2492 = vrot.lane.b32.xlu0 %v2419, 8
      %v2493 = vpop.permute.xlu0 %2492
      %2494 = vrot.lane.b32.xlu0 %v2421, 8
      %v2495 = vpop.permute.xlu0 %2494
      %2496 = vrot.lane.b32.xlu0 %v2424, 8
      %v2497 = vpop.permute.xlu0 %2496
      %2498 = vrot.lane.b32.xlu0 %v2426, 8
      %v2499 = vpop.permute.xlu0 %2498
      %2500 = vrot.lane.b32.xlu0 %v2429, 8
      %v2501 = vpop.permute.xlu0 %2500
      %2502 = vrot.lane.b32.xlu0 %v2431, 8
      %v2503 = vpop.permute.xlu0 %2502
      %2504 = vrot.lane.b32.xlu0 %v2434, 8
      %v2505 = vpop.permute.xlu0 %2504
      %2506 = vrot.lane.b32.xlu0 %v2436, 8
      %v2507 = vpop.permute.xlu0 %2506
      %2508 = vrot.lane.b32.xlu0 %v2439, 8
      %v2509 = vpop.permute.xlu0 %2508
      %2510 = vrot.lane.b32.xlu0 %v2441, 8
      %v2511 = vpop.permute.xlu0 %2510
      %2512 = vrot.lane.b32.xlu0 %v2444, 8
      %v2513 = vpop.permute.xlu0 %2512
      %2514 = vrot.lane.b32.xlu0 %v2446, 8
      %v2515 = vpop.permute.xlu0 %2514
      %2516 = vrot.lane.b32.xlu0 %v2449, 8
      %v2517 = vpop.permute.xlu0 %2516
      %2518 = vrot.lane.b32.xlu0 %v2451, 8
      %v2519 = vpop.permute.xlu0 %2518
      %2520 = vrot.lane.b32.xlu0 %v2454, 8
      %v2521 = vpop.permute.xlu0 %2520
      %2522 = vrot.lane.b32.xlu0 %v2456, 8
      %v2523 = vpop.permute.xlu0 %2522
      %2524 = vrot.lane.b32.xlu0 %v2459, 8
      %v2525 = vpop.permute.xlu0 %2524
      %2526 = vrot.lane.b32.xlu0 %v2461, 8
      %v2527 = vpop.permute.xlu0 %2526
      %2528 = vrot.lane.b32.xlu0 %v2464, 8
      %v2529 = vpop.permute.xlu0 %2528
      %2530 = vrot.lane.b32.xlu0 %v2466, 8
      %v2531 = vpop.permute.xlu0 %2530
      %2532 = vrot.lane.b32.xlu0 %v2469, 8
      %v2533 = vpop.permute.xlu0 %2532
      %2534 = vrot.lane.b32.xlu0 %v2471, 8
      %v2535 = vpop.permute.xlu0 %2534
      %2570 = vrot.lane.b32.xlu0 %v2117, 12
      %v2571 = vpop.permute.xlu0 %2570
      %2572 = vrot.lane.b32.xlu0 %v2118, 12
      %v2573 = vpop.permute.xlu0 %2572
      %2574 = vrot.lane.b32.xlu0 %v2120, 12
      %v2575 = vpop.permute.xlu0 %2574
      %2576 = vrot.lane.b32.xlu0 %v2121, 12
      %v2577 = vpop.permute.xlu0 %2576
      %2578 = vrot.lane.b32.xlu0 %v2123, 12
      %v2579 = vpop.permute.xlu0 %2578
      %2580 = vrot.lane.b32.xlu0 %v2124, 12
      %v2581 = vpop.permute.xlu0 %2580
      %2582 = vrot.lane.b32.xlu0 %v2126, 12
      %v2583 = vpop.permute.xlu0 %2582
      %2584 = vrot.lane.b32.xlu0 %v2127, 12
      %v2585 = vpop.permute.xlu0 %2584
      %2586 = vrot.lane.b32.xlu0 %v2129, 12
      %v2587 = vpop.permute.xlu0 %2586
      %2588 = vrot.lane.b32.xlu0 %v2130, 12
      %v2589 = vpop.permute.xlu0 %2588
      %2590 = vrot.lane.b32.xlu0 %v2132, 12
      %v2591 = vpop.permute.xlu0 %2590
      %2592 = vrot.lane.b32.xlu0 %v2133, 12
      %v2593 = vpop.permute.xlu0 %2592
      %2594 = vrot.lane.b32.xlu0 %v2135, 12
      %v2595 = vpop.permute.xlu0 %2594
      %2596 = vrot.lane.b32.xlu0 %v2136, 12
      %v2597 = vpop.permute.xlu0 %2596
      %2598 = vrot.lane.b32.xlu0 %v2138, 12
      %v2599 = vpop.permute.xlu0 %2598
      %2600 = vrot.lane.b32.xlu0 %v2139, 12
      %v2601 = vpop.permute.xlu0 %2600
      %2602 = vrot.lane.b32.xlu0 %v2141, 12
      %v2603 = vpop.permute.xlu0 %2602
      %2604 = vrot.lane.b32.xlu0 %v2142, 12
      %v2605 = vpop.permute.xlu0 %2604
      %2606 = vrot.lane.b32.xlu0 %v2144, 12
      %v2607 = vpop.permute.xlu0 %2606
      %2608 = vrot.lane.b32.xlu0 %v2145, 12
      %v2609 = vpop.permute.xlu0 %2608
      %2610 = vrot.lane.b32.xlu0 %v2147, 12
      %v2611 = vpop.permute.xlu0 %2610
      %2612 = vrot.lane.b32.xlu0 %v2148, 12
      %v2613 = vpop.permute.xlu0 %2612
      %2614 = vrot.lane.b32.xlu0 %v2150, 12
      %v2615 = vpop.permute.xlu0 %2614
      %2616 = vrot.lane.b32.xlu0 %v2151, 12
      %v2617 = vpop.permute.xlu0 %2616
      %2618 = vrot.lane.b32.xlu0 %v2153, 12
      %v2619 = vpop.permute.xlu0 %2618
      %2620 = vrot.lane.b32.xlu0 %v2154, 12
      %v2621 = vpop.permute.xlu0 %2620
      %2622 = vrot.lane.b32.xlu0 %v2156, 12
      %v2623 = vpop.permute.xlu0 %2622
      %2624 = vrot.lane.b32.xlu0 %v2157, 12
      %v2625 = vpop.permute.xlu0 %2624
      %2626 = vrot.lane.b32.xlu0 %v2159, 12
      %v2627 = vpop.permute.xlu0 %2626
      %2628 = vrot.lane.b32.xlu0 %v2160, 12
      %v2629 = vpop.permute.xlu0 %2628
      %2630 = vrot.lane.b32.xlu0 %v2162, 12
      %v2631 = vpop.permute.xlu0 %2630
      %2632 = vrot.lane.b32.xlu0 %v2163, 12
      %v2633 = vpop.permute.xlu0 %2632
      %v2667 = vrot.slane %v2162, 1
      %v2668 = vrot.slane %v2163, 1
      %v2669 = vsel %vm503, %v2667, %v2668
      %v2670 = vrot.slane %v2164, 1
      %v2671 = vsel %vm503, %v2668, %v2670
      %2672 = vrot.lane.b32.xlu0 %v2223, 16
      %v2673 = vpop.permute.xlu0 %2672
      %2674 = vrot.lane.b32.xlu0 %v2225, 16
      %v2675 = vpop.permute.xlu0 %2674
      %2676 = vrot.lane.b32.xlu0 %v2228, 16
      %v2677 = vpop.permute.xlu0 %2676
      %2678 = vrot.lane.b32.xlu0 %v2230, 16
      %v2679 = vpop.permute.xlu0 %2678
      %2680 = vrot.lane.b32.xlu0 %v2233, 16
      %v2681 = vpop.permute.xlu0 %2680
      %2682 = vrot.lane.b32.xlu0 %v2235, 16
      %v2683 = vpop.permute.xlu0 %2682
      %2684 = vrot.lane.b32.xlu0 %v2238, 16
      %v2685 = vpop.permute.xlu0 %2684
      %2686 = vrot.lane.b32.xlu0 %v2240, 16
      %v2687 = vpop.permute.xlu0 %2686
      %2688 = vrot.lane.b32.xlu0 %v2243, 16
      %v2689 = vpop.permute.xlu0 %2688
      %2690 = vrot.lane.b32.xlu0 %v2245, 16
      %v2691 = vpop.permute.xlu0 %2690
      %2692 = vrot.lane.b32.xlu0 %v2248, 16
      %v2693 = vpop.permute.xlu0 %2692
      %2694 = vrot.lane.b32.xlu0 %v2250, 16
      %v2695 = vpop.permute.xlu0 %2694
      %2696 = vrot.lane.b32.xlu0 %v2253, 16
      %v2697 = vpop.permute.xlu0 %2696
      %2698 = vrot.lane.b32.xlu0 %v2255, 16
      %v2699 = vpop.permute.xlu0 %2698
      %2700 = vrot.lane.b32.xlu0 %v2258, 16
      %v2701 = vpop.permute.xlu0 %2700
      %2702 = vrot.lane.b32.xlu0 %v2260, 16
      %v2703 = vpop.permute.xlu0 %2702
      %2704 = vrot.lane.b32.xlu0 %v2263, 16
      %v2705 = vpop.permute.xlu0 %2704
      %2706 = vrot.lane.b32.xlu0 %v2265, 16
      %v2707 = vpop.permute.xlu0 %2706
      %2708 = vrot.lane.b32.xlu0 %v2268, 16
      %v2709 = vpop.permute.xlu0 %2708
      %2710 = vrot.lane.b32.xlu0 %v2270, 16
      %v2711 = vpop.permute.xlu0 %2710
      %2712 = vrot.lane.b32.xlu0 %v2273, 16
      %v2713 = vpop.permute.xlu0 %2712
      %2714 = vrot.lane.b32.xlu0 %v2275, 16
      %v2715 = vpop.permute.xlu0 %2714
      %2716 = vrot.lane.b32.xlu0 %v2278, 16
      %v2717 = vpop.permute.xlu0 %2716
      %2718 = vrot.lane.b32.xlu0 %v2280, 16
      %v2719 = vpop.permute.xlu0 %2718
      %2720 = vrot.lane.b32.xlu0 %v2283, 16
      %v2721 = vpop.permute.xlu0 %2720
      %2722 = vrot.lane.b32.xlu0 %v2285, 16
      %v2723 = vpop.permute.xlu0 %2722
      %2724 = vrot.lane.b32.xlu0 %v2288, 16
      %v2725 = vpop.permute.xlu0 %2724
      %2726 = vrot.lane.b32.xlu0 %v2290, 16
      %v2727 = vpop.permute.xlu0 %2726
      %2728 = vrot.lane.b32.xlu0 %v2293, 16
      %v2729 = vpop.permute.xlu0 %2728
      %2730 = vrot.lane.b32.xlu0 %v2295, 16
      %v2731 = vpop.permute.xlu0 %2730
      %2732 = vrot.lane.b32.xlu0 %v2669, 16
      %v2733 = vpop.permute.xlu0 %2732
      %2734 = vrot.lane.b32.xlu0 %v2671, 16
      %v2735 = vpop.permute.xlu0 %2734
      %v2768 = vrot.slane %v2162, 2
      %v2769 = vrot.slane %v2163, 2
      %v2770 = vsel %vm680, %v2768, %v2769
      %v2771 = vrot.slane %v2164, 2
      %v2772 = vsel %vm680, %v2769, %v2771
      %2773 = vrot.lane.b32.xlu0 %v2399, 20
      %v2774 = vpop.permute.xlu0 %2773
      %2775 = vrot.lane.b32.xlu0 %v2401, 20
      %v2776 = vpop.permute.xlu0 %2775
      %2777 = vrot.lane.b32.xlu0 %v2404, 20
      %v2778 = vpop.permute.xlu0 %2777
      %2779 = vrot.lane.b32.xlu0 %v2406, 20
      %v2780 = vpop.permute.xlu0 %2779
      %2781 = vrot.lane.b32.xlu0 %v2409, 20
      %v2782 = vpop.permute.xlu0 %2781
      %2783 = vrot.lane.b32.xlu0 %v2411, 20
      %v2784 = vpop.permute.xlu0 %2783
      %2785 = vrot.lane.b32.xlu0 %v2414, 20
      %v2786 = vpop.permute.xlu0 %2785
      %2787 = vrot.lane.b32.xlu0 %v2416, 20
      %v2788 = vpop.permute.xlu0 %2787
      %2789 = vrot.lane.b32.xlu0 %v2419, 20
      %v2790 = vpop.permute.xlu0 %2789
      %2791 = vrot.lane.b32.xlu0 %v2421, 20
      %v2792 = vpop.permute.xlu0 %2791
      %2793 = vrot.lane.b32.xlu0 %v2424, 20
      %v2794 = vpop.permute.xlu0 %2793
      %2795 = vrot.lane.b32.xlu0 %v2426, 20
      %v2796 = vpop.permute.xlu0 %2795
      %2797 = vrot.lane.b32.xlu0 %v2429, 20
      %v2798 = vpop.permute.xlu0 %2797
      %2799 = vrot.lane.b32.xlu0 %v2431, 20
      %v2800 = vpop.permute.xlu0 %2799
      %2801 = vrot.lane.b32.xlu0 %v2434, 20
      %v2802 = vpop.permute.xlu0 %2801
      %2803 = vrot.lane.b32.xlu0 %v2436, 20
      %v2804 = vpop.permute.xlu0 %2803
      %2805 = vrot.lane.b32.xlu0 %v2439, 20
      %v2806 = vpop.permute.xlu0 %2805
      %2807 = vrot.lane.b32.xlu0 %v2441, 20
      %v2808 = vpop.permute.xlu0 %2807
      %2809 = vrot.lane.b32.xlu0 %v2444, 20
      %v2810 = vpop.permute.xlu0 %2809
      %2811 = vrot.lane.b32.xlu0 %v2446, 20
      %v2812 = vpop.permute.xlu0 %2811
      %2813 = vrot.lane.b32.xlu0 %v2449, 20
      %v2814 = vpop.permute.xlu0 %2813
      %2815 = vrot.lane.b32.xlu0 %v2451, 20
      %v2816 = vpop.permute.xlu0 %2815
      %2817 = vrot.lane.b32.xlu0 %v2454, 20
      %v2818 = vpop.permute.xlu0 %2817
      %2819 = vrot.lane.b32.xlu0 %v2456, 20
      %v2820 = vpop.permute.xlu0 %2819
      %2821 = vrot.lane.b32.xlu0 %v2459, 20
      %v2822 = vpop.permute.xlu0 %2821
      %2823 = vrot.lane.b32.xlu0 %v2461, 20
      %v2824 = vpop.permute.xlu0 %2823
      %2825 = vrot.lane.b32.xlu0 %v2464, 20
      %v2826 = vpop.permute.xlu0 %2825
      %2827 = vrot.lane.b32.xlu0 %v2466, 20
      %v2828 = vpop.permute.xlu0 %2827
      %2829 = vrot.lane.b32.xlu0 %v2469, 20
      %v2830 = vpop.permute.xlu0 %2829
      %2831 = vrot.lane.b32.xlu0 %v2471, 20
      %v2832 = vpop.permute.xlu0 %2831
      %2833 = vrot.lane.b32.xlu0 %v2770, 20
      %v2834 = vpop.permute.xlu0 %2833
      %2835 = vrot.lane.b32.xlu0 %v2772, 20
      %v2836 = vpop.permute.xlu0 %2835
      %2871 = vrot.lane.b32.xlu0 %v2120, 24
      %v2872 = vpop.permute.xlu0 %2871
      %2873 = vrot.lane.b32.xlu0 %v2121, 24
      %v2874 = vpop.permute.xlu0 %2873
      %2875 = vrot.lane.b32.xlu0 %v2123, 24
      %v2876 = vpop.permute.xlu0 %2875
      %2877 = vrot.lane.b32.xlu0 %v2124, 24
      %v2878 = vpop.permute.xlu0 %2877
      %2879 = vrot.lane.b32.xlu0 %v2126, 24
      %v2880 = vpop.permute.xlu0 %2879
      %2881 = vrot.lane.b32.xlu0 %v2127, 24
      %v2882 = vpop.permute.xlu0 %2881
      %2883 = vrot.lane.b32.xlu0 %v2129, 24
      %v2884 = vpop.permute.xlu0 %2883
      %2885 = vrot.lane.b32.xlu0 %v2130, 24
      %v2886 = vpop.permute.xlu0 %2885
      %2887 = vrot.lane.b32.xlu0 %v2132, 24
      %v2888 = vpop.permute.xlu0 %2887
      %2889 = vrot.lane.b32.xlu0 %v2133, 24
      %v2890 = vpop.permute.xlu0 %2889
      %2891 = vrot.lane.b32.xlu0 %v2135, 24
      %v2892 = vpop.permute.xlu0 %2891
      %2893 = vrot.lane.b32.xlu0 %v2136, 24
      %v2894 = vpop.permute.xlu0 %2893
      %2895 = vrot.lane.b32.xlu0 %v2138, 24
      %v2896 = vpop.permute.xlu0 %2895
      %2897 = vrot.lane.b32.xlu0 %v2139, 24
      %v2898 = vpop.permute.xlu0 %2897
      %2899 = vrot.lane.b32.xlu0 %v2141, 24
      %v2900 = vpop.permute.xlu0 %2899
      %2901 = vrot.lane.b32.xlu0 %v2142, 24
      %v2902 = vpop.permute.xlu0 %2901
      %2903 = vrot.lane.b32.xlu0 %v2144, 24
      %v2904 = vpop.permute.xlu0 %2903
      %2905 = vrot.lane.b32.xlu0 %v2145, 24
      %v2906 = vpop.permute.xlu0 %2905
      %2907 = vrot.lane.b32.xlu0 %v2147, 24
      %v2908 = vpop.permute.xlu0 %2907
      %2909 = vrot.lane.b32.xlu0 %v2148, 24
      %v2910 = vpop.permute.xlu0 %2909
      %2911 = vrot.lane.b32.xlu0 %v2150, 24
      %v2912 = vpop.permute.xlu0 %2911
      %2913 = vrot.lane.b32.xlu0 %v2151, 24
      %v2914 = vpop.permute.xlu0 %2913
      %2915 = vrot.lane.b32.xlu0 %v2153, 24
      %v2916 = vpop.permute.xlu0 %2915
      %2917 = vrot.lane.b32.xlu0 %v2154, 24
      %v2918 = vpop.permute.xlu0 %2917
      %2919 = vrot.lane.b32.xlu0 %v2156, 24
      %v2920 = vpop.permute.xlu0 %2919
      %2921 = vrot.lane.b32.xlu0 %v2157, 24
      %v2922 = vpop.permute.xlu0 %2921
      %2923 = vrot.lane.b32.xlu0 %v2159, 24
      %v2924 = vpop.permute.xlu0 %2923
      %2925 = vrot.lane.b32.xlu0 %v2160, 24
      %v2926 = vpop.permute.xlu0 %2925
      %2927 = vrot.lane.b32.xlu0 %v2162, 24
      %v2928 = vpop.permute.xlu0 %2927
      %2929 = vrot.lane.b32.xlu0 %v2163, 24
      %v2930 = vpop.permute.xlu0 %2929
      %2931 = vrot.lane.b32.xlu0 %v2165, 24
      %v2932 = vpop.permute.xlu0 %2931
      %2933 = vrot.lane.b32.xlu0 %v2166, 24
      %v2934 = vpop.permute.xlu0 %2933
      %v2968 = vrot.slane %v2165, 1
      %v2969 = vrot.slane %v2166, 1
      %v2970 = vsel %vm503, %v2968, %v2969
      %v2971 = vrot.slane %v2167, 1
      %v2972 = vsel %vm503, %v2969, %v2971
      %2973 = vrot.lane.b32.xlu0 %v2228, 28
      %v2974 = vpop.permute.xlu0 %2973
      %2975 = vrot.lane.b32.xlu0 %v2230, 28
      %v2976 = vpop.permute.xlu0 %2975
      %2977 = vrot.lane.b32.xlu0 %v2233, 28
      %v2978 = vpop.permute.xlu0 %2977
      %2979 = vrot.lane.b32.xlu0 %v2235, 28
      %v2980 = vpop.permute.xlu0 %2979
      %2981 = vrot.lane.b32.xlu0 %v2238, 28
      %v2982 = vpop.permute.xlu0 %2981
      %2983 = vrot.lane.b32.xlu0 %v2240, 28
      %v2984 = vpop.permute.xlu0 %2983
      %2985 = vrot.lane.b32.xlu0 %v2243, 28
      %v2986 = vpop.permute.xlu0 %2985
      %2987 = vrot.lane.b32.xlu0 %v2245, 28
      %v2988 = vpop.permute.xlu0 %2987
      %2989 = vrot.lane.b32.xlu0 %v2248, 28
      %v2990 = vpop.permute.xlu0 %2989
      %2991 = vrot.lane.b32.xlu0 %v2250, 28
      %v2992 = vpop.permute.xlu0 %2991
      %2993 = vrot.lane.b32.xlu0 %v2253, 28
      %v2994 = vpop.permute.xlu0 %2993
      %2995 = vrot.lane.b32.xlu0 %v2255, 28
      %v2996 = vpop.permute.xlu0 %2995
      %2997 = vrot.lane.b32.xlu0 %v2258, 28
      %v2998 = vpop.permute.xlu0 %2997
      %2999 = vrot.lane.b32.xlu0 %v2260, 28
      %v3000 = vpop.permute.xlu0 %2999
      %3001 = vrot.lane.b32.xlu0 %v2263, 28
      %v3002 = vpop.permute.xlu0 %3001
      %3003 = vrot.lane.b32.xlu0 %v2265, 28
      %v3004 = vpop.permute.xlu0 %3003
      %3005 = vrot.lane.b32.xlu0 %v2268, 28
      %v3006 = vpop.permute.xlu0 %3005
      %3007 = vrot.lane.b32.xlu0 %v2270, 28
      %v3008 = vpop.permute.xlu0 %3007
      %3009 = vrot.lane.b32.xlu0 %v2273, 28
      %v3010 = vpop.permute.xlu0 %3009
      %3011 = vrot.lane.b32.xlu0 %v2275, 28
      %v3012 = vpop.permute.xlu0 %3011
      %3013 = vrot.lane.b32.xlu0 %v2278, 28
      %v3014 = vpop.permute.xlu0 %3013
      %3015 = vrot.lane.b32.xlu0 %v2280, 28
      %v3016 = vpop.permute.xlu0 %3015
      %3017 = vrot.lane.b32.xlu0 %v2283, 28
      %v3018 = vpop.permute.xlu0 %3017
      %3019 = vrot.lane.b32.xlu0 %v2285, 28
      %v3020 = vpop.permute.xlu0 %3019
      %3021 = vrot.lane.b32.xlu0 %v2288, 28
      %v3022 = vpop.permute.xlu0 %3021
      %3023 = vrot.lane.b32.xlu0 %v2290, 28
      %v3024 = vpop.permute.xlu0 %3023
      %3025 = vrot.lane.b32.xlu0 %v2293, 28
      %v3026 = vpop.permute.xlu0 %3025
      %3027 = vrot.lane.b32.xlu0 %v2295, 28
      %v3028 = vpop.permute.xlu0 %3027
      %3029 = vrot.lane.b32.xlu0 %v2669, 28
      %v3030 = vpop.permute.xlu0 %3029
      %3031 = vrot.lane.b32.xlu0 %v2671, 28
      %v3032 = vpop.permute.xlu0 %3031
      %3033 = vrot.lane.b32.xlu0 %v2970, 28
      %v3034 = vpop.permute.xlu0 %3033
      %3035 = vrot.lane.b32.xlu0 %v2972, 28
      %v3036 = vpop.permute.xlu0 %3035
      %v3069 = vrot.slane %v2165, 2
      %v3070 = vrot.slane %v2166, 2
      %v3071 = vsel %vm680, %v3069, %v3070
      %v3072 = vrot.slane %v2167, 2
      %v3073 = vsel %vm680, %v3070, %v3072
      %3074 = vrot.lane.b32.xlu0 %v2404, 32
      %v3075 = vpop.permute.xlu0 %3074
      %3076 = vrot.lane.b32.xlu0 %v2406, 32
      %v3077 = vpop.permute.xlu0 %3076
      %3078 = vrot.lane.b32.xlu0 %v2409, 32
      %v3079 = vpop.permute.xlu0 %3078
      %3080 = vrot.lane.b32.xlu0 %v2411, 32
      %v3081 = vpop.permute.xlu0 %3080
      %3082 = vrot.lane.b32.xlu0 %v2414, 32
      %v3083 = vpop.permute.xlu0 %3082
      %3084 = vrot.lane.b32.xlu0 %v2416, 32
      %v3085 = vpop.permute.xlu0 %3084
      %3086 = vrot.lane.b32.xlu0 %v2419, 32
      %v3087 = vpop.permute.xlu0 %3086
      %3088 = vrot.lane.b32.xlu0 %v2421, 32
      %v3089 = vpop.permute.xlu0 %3088
      %3090 = vrot.lane.b32.xlu0 %v2424, 32
      %v3091 = vpop.permute.xlu0 %3090
      %3092 = vrot.lane.b32.xlu0 %v2426, 32
      %v3093 = vpop.permute.xlu0 %3092
      %3094 = vrot.lane.b32.xlu0 %v2429, 32
      %v3095 = vpop.permute.xlu0 %3094
      %3096 = vrot.lane.b32.xlu0 %v2431, 32
      %v3097 = vpop.permute.xlu0 %3096
      %3098 = vrot.lane.b32.xlu0 %v2434, 32
      %v3099 = vpop.permute.xlu0 %3098
      %3100 = vrot.lane.b32.xlu0 %v2436, 32
      %v3101 = vpop.permute.xlu0 %3100
      %3102 = vrot.lane.b32.xlu0 %v2439, 32
      %v3103 = vpop.permute.xlu0 %3102
      %3104 = vrot.lane.b32.xlu0 %v2441, 32
      %v3105 = vpop.permute.xlu0 %3104
      %3106 = vrot.lane.b32.xlu0 %v2444, 32
      %v3107 = vpop.permute.xlu0 %3106
      %3108 = vrot.lane.b32.xlu0 %v2446, 32
      %v3109 = vpop.permute.xlu0 %3108
      %3110 = vrot.lane.b32.xlu0 %v2449, 32
      %v3111 = vpop.permute.xlu0 %3110
      %3112 = vrot.lane.b32.xlu0 %v2451, 32
      %v3113 = vpop.permute.xlu0 %3112
      %3114 = vrot.lane.b32.xlu0 %v2454, 32
      %v3115 = vpop.permute.xlu0 %3114
      %3116 = vrot.lane.b32.xlu0 %v2456, 32
      %v3117 = vpop.permute.xlu0 %3116
      %3118 = vrot.lane.b32.xlu0 %v2459, 32
      %v3119 = vpop.permute.xlu0 %3118
      %3120 = vrot.lane.b32.xlu0 %v2461, 32
      %v3121 = vpop.permute.xlu0 %3120
      %3122 = vrot.lane.b32.xlu0 %v2464, 32
      %v3123 = vpop.permute.xlu0 %3122
      %3124 = vrot.lane.b32.xlu0 %v2466, 32
      %v3125 = vpop.permute.xlu0 %3124
      %3126 = vrot.lane.b32.xlu0 %v2469, 32
      %v3127 = vpop.permute.xlu0 %3126
      %3128 = vrot.lane.b32.xlu0 %v2471, 32
      %v3129 = vpop.permute.xlu0 %3128
      %3130 = vrot.lane.b32.xlu0 %v2770, 32
      %v3131 = vpop.permute.xlu0 %3130
      %3132 = vrot.lane.b32.xlu0 %v2772, 32
      %v3133 = vpop.permute.xlu0 %3132
      %3134 = vrot.lane.b32.xlu0 %v3071, 32
      %v3135 = vpop.permute.xlu0 %3134
      %3136 = vrot.lane.b32.xlu0 %v3073, 32
      %v3137 = vpop.permute.xlu0 %3136
      %v3170 = vsel %vm280, %v2114, %v2297
      %v3171 = vsel %vm280, %v2115, %v2299
      %v3172 = vsel %vm280, %v2117, %v2301
      %v3173 = vsel %vm280, %v2118, %v2303
      %v3174 = vsel %vm280, %v2120, %v2305
      %v3175 = vsel %vm280, %v2121, %v2307
      %v3176 = vsel %vm280, %v2123, %v2309
      %v3177 = vsel %vm280, %v2124, %v2311
      %v3178 = vsel %vm280, %v2126, %v2313
      %v3179 = vsel %vm280, %v2127, %v2315
      %v3180 = vsel %vm280, %v2129, %v2317
      %v3181 = vsel %vm280, %v2130, %v2319
      %v3182 = vsel %vm280, %v2132, %v2321
      %v3183 = vsel %vm280, %v2133, %v2323
      %v3184 = vsel %vm280, %v2135, %v2325
      %v3185 = vsel %vm280, %v2136, %v2327
      %v3186 = vsel %vm280, %v2138, %v2329
      %v3187 = vsel %vm280, %v2139, %v2331
      %v3188 = vsel %vm280, %v2141, %v2333
      %v3189 = vsel %vm280, %v2142, %v2335
      %v3190 = vsel %vm280, %v2144, %v2337
      %v3191 = vsel %vm280, %v2145, %v2339
      %v3192 = vsel %vm280, %v2147, %v2341
      %v3193 = vsel %vm280, %v2148, %v2343
      %v3194 = vsel %vm280, %v2150, %v2345
      %v3195 = vsel %vm280, %v2151, %v2347
      %v3196 = vsel %vm280, %v2153, %v2349
      %v3197 = vsel %vm280, %v2154, %v2351
      %v3198 = vsel %vm280, %v2156, %v2353
      %v3199 = vsel %vm280, %v2157, %v2355
      %v3200 = vsel %vm280, %v2159, %v2357
      %v3201 = vsel %vm280, %v2160, %v2359
      %v3202 = vsel %vm1491, %v3170, %v2473
      %v3203 = vsel %vm1491, %v3171, %v2475
      %v3204 = vsel %vm1491, %v3172, %v2477
      %v3205 = vsel %vm1491, %v3173, %v2479
      %v3206 = vsel %vm1491, %v3174, %v2481
      %v3207 = vsel %vm1491, %v3175, %v2483
      %v3208 = vsel %vm1491, %v3176, %v2485
      %v3209 = vsel %vm1491, %v3177, %v2487
      %v3210 = vsel %vm1491, %v3178, %v2489
      %v3211 = vsel %vm1491, %v3179, %v2491
      %v3212 = vsel %vm1491, %v3180, %v2493
      %v3213 = vsel %vm1491, %v3181, %v2495
      %v3214 = vsel %vm1491, %v3182, %v2497
      %v3215 = vsel %vm1491, %v3183, %v2499
      %v3216 = vsel %vm1491, %v3184, %v2501
      %v3217 = vsel %vm1491, %v3185, %v2503
      %v3218 = vsel %vm1491, %v3186, %v2505
      %v3219 = vsel %vm1491, %v3187, %v2507
      %v3220 = vsel %vm1491, %v3188, %v2509
      %v3221 = vsel %vm1491, %v3189, %v2511
      %v3222 = vsel %vm1491, %v3190, %v2513
      %v3223 = vsel %vm1491, %v3191, %v2515
      %v3224 = vsel %vm1491, %v3192, %v2517
      %v3225 = vsel %vm1491, %v3193, %v2519
      %v3226 = vsel %vm1491, %v3194, %v2521
      %v3227 = vsel %vm1491, %v3195, %v2523
      %v3228 = vsel %vm1491, %v3196, %v2525
      %v3229 = vsel %vm1491, %v3197, %v2527
      %v3230 = vsel %vm1491, %v3198, %v2529
      %v3231 = vsel %vm1491, %v3199, %v2531
      %v3232 = vsel %vm1491, %v3200, %v2533
      %v3233 = vsel %vm1491, %v3201, %v2535
      %v3234 = vsel %vm1524, %v3202, %v2571
      %v3235 = vsel %vm1524, %v3203, %v2573
      %v3236 = vsel %vm1524, %v3204, %v2575
      %v3237 = vsel %vm1524, %v3205, %v2577
      %v3238 = vsel %vm1524, %v3206, %v2579
      %v3239 = vsel %vm1524, %v3207, %v2581
      %v3240 = vsel %vm1524, %v3208, %v2583
      %v3241 = vsel %vm1524, %v3209, %v2585
      %v3242 = vsel %vm1524, %v3210, %v2587
      %v3243 = vsel %vm1524, %v3211, %v2589
      %v3244 = vsel %vm1524, %v3212, %v2591
      %v3245 = vsel %vm1524, %v3213, %v2593
      %v3246 = vsel %vm1524, %v3214, %v2595
      %v3247 = vsel %vm1524, %v3215, %v2597
      %v3248 = vsel %vm1524, %v3216, %v2599
      %v3249 = vsel %vm1524, %v3217, %v2601
      %v3250 = vsel %vm1524, %v3218, %v2603
      %v3251 = vsel %vm1524, %v3219, %v2605
      %v3252 = vsel %vm1524, %v3220, %v2607
      %v3253 = vsel %vm1524, %v3221, %v2609
      %v3254 = vsel %vm1524, %v3222, %v2611
      %v3255 = vsel %vm1524, %v3223, %v2613
      %v3256 = vsel %vm1524, %v3224, %v2615
      %v3257 = vsel %vm1524, %v3225, %v2617
      %v3258 = vsel %vm1524, %v3226, %v2619
      %v3259 = vsel %vm1524, %v3227, %v2621
      %v3260 = vsel %vm1524, %v3228, %v2623
      %v3261 = vsel %vm1524, %v3229, %v2625
      %v3262 = vsel %vm1524, %v3230, %v2627
      %v3263 = vsel %vm1524, %v3231, %v2629
      %v3264 = vsel %vm1524, %v3232, %v2631
      %v3265 = vsel %vm1524, %v3233, %v2633
      %v3266 = vsel %vm1557, %v3234, %v2673
      %v3267 = vsel %vm1557, %v3235, %v2675
      %v3268 = vsel %vm1557, %v3236, %v2677
      %v3269 = vsel %vm1557, %v3237, %v2679
      %v3270 = vsel %vm1557, %v3238, %v2681
      %v3271 = vsel %vm1557, %v3239, %v2683
      %v3272 = vsel %vm1557, %v3240, %v2685
      %v3273 = vsel %vm1557, %v3241, %v2687
      %v3274 = vsel %vm1557, %v3242, %v2689
      %v3275 = vsel %vm1557, %v3243, %v2691
      %v3276 = vsel %vm1557, %v3244, %v2693
      %v3277 = vsel %vm1557, %v3245, %v2695
      %v3278 = vsel %vm1557, %v3246, %v2697
      %v3279 = vsel %vm1557, %v3247, %v2699
      %v3280 = vsel %vm1557, %v3248, %v2701
      %v3281 = vsel %vm1557, %v3249, %v2703
      %v3282 = vsel %vm1557, %v3250, %v2705
      %v3283 = vsel %vm1557, %v3251, %v2707
      %v3284 = vsel %vm1557, %v3252, %v2709
      %v3285 = vsel %vm1557, %v3253, %v2711
      %v3286 = vsel %vm1557, %v3254, %v2713
      %v3287 = vsel %vm1557, %v3255, %v2715
      %v3288 = vsel %vm1557, %v3256, %v2717
      %v3289 = vsel %vm1557, %v3257, %v2719
      %v3290 = vsel %vm1557, %v3258, %v2721
      %v3291 = vsel %vm1557, %v3259, %v2723
      %v3292 = vsel %vm1557, %v3260, %v2725
      %v3293 = vsel %vm1557, %v3261, %v2727
      %v3294 = vsel %vm1557, %v3262, %v2729
      %v3295 = vsel %vm1557, %v3263, %v2731
      %v3296 = vsel %vm1557, %v3264, %v2733
      %v3297 = vsel %vm1557, %v3265, %v2735
      %v3298 = vsel %vm1590, %v3266, %v2774
      %v3299 = vsel %vm1590, %v3267, %v2776
      %v3300 = vsel %vm1590, %v3268, %v2778
      %v3301 = vsel %vm1590, %v3269, %v2780
      %v3302 = vsel %vm1590, %v3270, %v2782
      %v3303 = vsel %vm1590, %v3271, %v2784
      %v3304 = vsel %vm1590, %v3272, %v2786
      %v3305 = vsel %vm1590, %v3273, %v2788
      %v3306 = vsel %vm1590, %v3274, %v2790
      %v3307 = vsel %vm1590, %v3275, %v2792
      %v3308 = vsel %vm1590, %v3276, %v2794
      %v3309 = vsel %vm1590, %v3277, %v2796
      %v3310 = vsel %vm1590, %v3278, %v2798
      %v3311 = vsel %vm1590, %v3279, %v2800
      %v3312 = vsel %vm1590, %v3280, %v2802
      %v3313 = vsel %vm1590, %v3281, %v2804
      %v3314 = vsel %vm1590, %v3282, %v2806
      %v3315 = vsel %vm1590, %v3283, %v2808
      %v3316 = vsel %vm1590, %v3284, %v2810
      %v3317 = vsel %vm1590, %v3285, %v2812
      %v3318 = vsel %vm1590, %v3286, %v2814
      %v3319 = vsel %vm1590, %v3287, %v2816
      %v3320 = vsel %vm1590, %v3288, %v2818
      %v3321 = vsel %vm1590, %v3289, %v2820
      %v3322 = vsel %vm1590, %v3290, %v2822
      %v3323 = vsel %vm1590, %v3291, %v2824
      %v3324 = vsel %vm1590, %v3292, %v2826
      %v3325 = vsel %vm1590, %v3293, %v2828
      %v3326 = vsel %vm1590, %v3294, %v2830
      %v3327 = vsel %vm1590, %v3295, %v2832
      %v3328 = vsel %vm1590, %v3296, %v2834
      %v3329 = vsel %vm1590, %v3297, %v2836
      %v3330 = vsel %vm1623, %v3298, %v2872
      %v3331 = vsel %vm1623, %v3299, %v2874
      %v3332 = vsel %vm1623, %v3300, %v2876
      %v3333 = vsel %vm1623, %v3301, %v2878
      %v3334 = vsel %vm1623, %v3302, %v2880
      %v3335 = vsel %vm1623, %v3303, %v2882
      %v3336 = vsel %vm1623, %v3304, %v2884
      %v3337 = vsel %vm1623, %v3305, %v2886
      %v3338 = vsel %vm1623, %v3306, %v2888
      %v3339 = vsel %vm1623, %v3307, %v2890
      %v3340 = vsel %vm1623, %v3308, %v2892
      %v3341 = vsel %vm1623, %v3309, %v2894
      %v3342 = vsel %vm1623, %v3310, %v2896
      %v3343 = vsel %vm1623, %v3311, %v2898
      %v3344 = vsel %vm1623, %v3312, %v2900
      %v3345 = vsel %vm1623, %v3313, %v2902
      %v3346 = vsel %vm1623, %v3314, %v2904
      %v3347 = vsel %vm1623, %v3315, %v2906
      %v3348 = vsel %vm1623, %v3316, %v2908
      %v3349 = vsel %vm1623, %v3317, %v2910
      %v3350 = vsel %vm1623, %v3318, %v2912
      %v3351 = vsel %vm1623, %v3319, %v2914
      %v3352 = vsel %vm1623, %v3320, %v2916
      %v3353 = vsel %vm1623, %v3321, %v2918
      %v3354 = vsel %vm1623, %v3322, %v2920
      %v3355 = vsel %vm1623, %v3323, %v2922
      %v3356 = vsel %vm1623, %v3324, %v2924
      %v3357 = vsel %vm1623, %v3325, %v2926
      %v3358 = vsel %vm1623, %v3326, %v2928
      %v3359 = vsel %vm1623, %v3327, %v2930
      %v3360 = vsel %vm1623, %v3328, %v2932
      %v3361 = vsel %vm1623, %v3329, %v2934
      %v3362 = vsel %vm1656, %v3330, %v2974
      %v3363 = vsel %vm1656, %v3331, %v2976
      %v3364 = vsel %vm1656, %v3332, %v2978
      %v3365 = vsel %vm1656, %v3333, %v2980
      %v3366 = vsel %vm1656, %v3334, %v2982
      %v3367 = vsel %vm1656, %v3335, %v2984
      %v3368 = vsel %vm1656, %v3336, %v2986
      %v3369 = vsel %vm1656, %v3337, %v2988
      %v3370 = vsel %vm1656, %v3338, %v2990
      %v3371 = vsel %vm1656, %v3339, %v2992
      %v3372 = vsel %vm1656, %v3340, %v2994
      %v3373 = vsel %vm1656, %v3341, %v2996
      %v3374 = vsel %vm1656, %v3342, %v2998
      %v3375 = vsel %vm1656, %v3343, %v3000
      %v3376 = vsel %vm1656, %v3344, %v3002
      %v3377 = vsel %vm1656, %v3345, %v3004
      %v3378 = vsel %vm1656, %v3346, %v3006
      %v3379 = vsel %vm1656, %v3347, %v3008
      %v3380 = vsel %vm1656, %v3348, %v3010
      %v3381 = vsel %vm1656, %v3349, %v3012
      %v3382 = vsel %vm1656, %v3350, %v3014
      %v3383 = vsel %vm1656, %v3351, %v3016
      %v3384 = vsel %vm1656, %v3352, %v3018
      %v3385 = vsel %vm1656, %v3353, %v3020
      %v3386 = vsel %vm1656, %v3354, %v3022
      %v3387 = vsel %vm1656, %v3355, %v3024
      %v3388 = vsel %vm1656, %v3356, %v3026
      %v3389 = vsel %vm1656, %v3357, %v3028
      %v3390 = vsel %vm1656, %v3358, %v3030
      %v3391 = vsel %vm1656, %v3359, %v3032
      %v3392 = vsel %vm1656, %v3360, %v3034
      %v3393 = vsel %vm1656, %v3361, %v3036
      %v3394 = vsel %vm1689, %v3362, %v3075
      %v3395 = vsel %vm1689, %v3363, %v3077
      %v3396 = vsel %vm1689, %v3364, %v3079
      %v3397 = vsel %vm1689, %v3365, %v3081
      %v3398 = vsel %vm1689, %v3366, %v3083
      %v3399 = vsel %vm1689, %v3367, %v3085
      %v3400 = vsel %vm1689, %v3368, %v3087
      %v3401 = vsel %vm1689, %v3369, %v3089
      %v3402 = vsel %vm1689, %v3370, %v3091
      %v3403 = vsel %vm1689, %v3371, %v3093
      %v3404 = vsel %vm1689, %v3372, %v3095
      %v3405 = vsel %vm1689, %v3373, %v3097
      %v3406 = vsel %vm1689, %v3374, %v3099
      %v3407 = vsel %vm1689, %v3375, %v3101
      %v3408 = vsel %vm1689, %v3376, %v3103
      %v3409 = vsel %vm1689, %v3377, %v3105
      %v3410 = vsel %vm1689, %v3378, %v3107
      %v3411 = vsel %vm1689, %v3379, %v3109
      %v3412 = vsel %vm1689, %v3380, %v3111
      %v3413 = vsel %vm1689, %v3381, %v3113
      %v3414 = vsel %vm1689, %v3382, %v3115
      %v3415 = vsel %vm1689, %v3383, %v3117
      %v3416 = vsel %vm1689, %v3384, %v3119
      %v3417 = vsel %vm1689, %v3385, %v3121
      %v3418 = vsel %vm1689, %v3386, %v3123
      %v3419 = vsel %vm1689, %v3387, %v3125
      %v3420 = vsel %vm1689, %v3388, %v3127
      %v3421 = vsel %vm1689, %v3389, %v3129
      %v3422 = vsel %vm1689, %v3390, %v3131
      %v3423 = vsel %vm1689, %v3391, %v3133
      %v3424 = vsel %vm1689, %v3392, %v3135
      %v3425 = vsel %vm1689, %v3393, %v3137
      %v3426 = vpack.c.bf16 %v3395, %v3394
      %v3427 = vpack.c.bf16 %v3397, %v3396
      %v3428 = vpack.c.bf16 %v3399, %v3398
      %v3429 = vpack.c.bf16 %v3401, %v3400
      %v3430 = vpack.c.bf16 %v3403, %v3402
      %v3431 = vpack.c.bf16 %v3405, %v3404
      %v3432 = vpack.c.bf16 %v3407, %v3406
      %v3433 = vpack.c.bf16 %v3409, %v3408
      %v3434 = vpack.c.bf16 %v3411, %v3410
      %v3435 = vpack.c.bf16 %v3413, %v3412
      %v3436 = vpack.c.bf16 %v3415, %v3414
      %v3437 = vpack.c.bf16 %v3417, %v3416
      %v3438 = vpack.c.bf16 %v3419, %v3418
      %v3439 = vpack.c.bf16 %v3421, %v3420
      %v3440 = vpack.c.bf16 %v3423, %v3422
      %v3441 = vpack.c.bf16 %v3425, %v3424
      %v3442 = vld [vmem:[%s4] sm:$0xf]
      %v3443 = vld [vmem:[%s4 + $0x4] sm:$0xf]
      %v3444 = vld [vmem:[%s4 + $0x8] sm:$0xf]
      %v3445 = vld [vmem:[%s4 + $0xc] sm:$0xf]
      %v3446 = vld [vmem:[%s4 + $0x10] sm:$0x3]
      %v3452 = vunpack.c.l.b16 %v3442
      %v3453 = vunpack.c.l.b16 %v3443
      %v3454 = vunpack.c.l.b16 %v3444
      %v3455 = vunpack.c.l.b16 %v3445
      %v3456 = vunpack.c.l.b16 %v3446
      %v3457 = vpack.c.b16 %v3453, %v3452
      %v3458 = vpack.c.b16 %v3455, %v3454
      %v3459 = vpack.c.b16 %v3456, %v3456
      %v3463 = vsel %vm1758, %v3426, 0
      %v3466 = vsel %vm1758, %v3427, 0
      %v3469 = vsel %vm1758, %v3428, 0
      %v3472 = vsel %vm1758, %v3429, 0
      %v3475 = vsel %vm1758, %v3430, 0
      %v3478 = vsel %vm1758, %v3431, 0
      %v3481 = vsel %vm1758, %v3432, 0
      %v3484 = vsel %vm1758, %v3433, 0
      %v3487 = vsel %vm1758, %v3434, 0
      %v3490 = vsel %vm1758, %v3435, 0
      %v3493 = vsel %vm1758, %v3436, 0
      %v3496 = vsel %vm1758, %v3437, 0
      %v3499 = vsel %vm1758, %v3438, 0
      %v3502 = vsel %vm1758, %v3439, 0
      %v3505 = vsel %vm1758, %v3440, 0
      %v3508 = vsel %vm1758, %v3441, 0
      %v3511 = vsel %vm1807, %v3459, 0
      %3513 = vmatprep.subr.bf16.mxu0 0
      %3514 = vmatpush1.bf16.msra.mxu0 %v3457
      %3515 = vmatprep.subr.bf16.mxu0 0
      %3516 = vmatpush1.bf16.msra.mxu0 %v3458
      %3517 = vmatprep.subr.bf16.mxu0 0
      %3518 = vmatpush1.bf16.msra.mxu0 %v3511
      %3519 = vmatprep.subr.bf16.mxu0 0
      %3520 = vmatpush1.bf16.msra.mxu0 0
      %3521 = vmatprep.subr.bf16.mxu0 0
      %3522 = vmatpush1.bf16.msra.mxu0 0
      %3523 = vmatprep.subr.bf16.mxu0 0
      %3524 = vmatpush1.bf16.msra.mxu0 0
      %3525 = vmatprep.subr.bf16.mxu0 0
      %3526 = vmatpush1.bf16.msra.mxu0 0
      %3527 = vmatprep.subr.bf16.mxu0 0
      %3528 = vmatpush1.bf16.msra.mxu0 0
      %3529 = vmatprep.subr.bf16.mxu0 0
      %3530 = vmatpush1.bf16.msra.mxu0 0
      %3531 = vmatprep.subr.bf16.mxu0 0
      %3532 = vmatpush1.bf16.msra.mxu0 0
      %3533 = vmatprep.subr.bf16.mxu0 0
      %3534 = vmatpush1.bf16.msra.mxu0 0
      %3535 = vmatprep.subr.bf16.mxu0 0
      %3536 = vmatpush1.bf16.msra.mxu0 0
      %3537 = vmatprep.subr.bf16.mxu0 0
      %3538 = vmatpush1.bf16.msra.mxu0 0
      %3539 = vmatprep.subr.bf16.mxu0 0
      %3540 = vmatpush1.bf16.msra.mxu0 0
      %3541 = vmatprep.subr.bf16.mxu0 0
      %3542 = vmatpush1.bf16.msra.mxu0 0
      %3543 = vmatprep.subr.bf16.mxu0 0
      %3544 = vmatpush1.bf16.msra.mxu0 0
      %3545 = vmatprep.mubr.bf16.mxu0 0
      %3546 = vmatmul.mubr.bf16.gmra.mrb[0].mxu0 %v3463
      %v3547 = vpop.f32.mrb[0].mxu0
      %v3548 = vadd.f32 0.0, %v3547
      %v3549 = vpop.f32.mrb[0].mxu0
      %v3550 = vpop.f32.mrb[0].mxu0
      %v3551 = vadd.f32 0.0, %v3550
      %v3552 = vpop.f32.mrb[0].mxu0
      %3553 = vmatprep.mubr.bf16.mxu0 0
      %3554 = vmatmul.mubr.bf16.gmra.mrb[0].mxu0 %v3466
      %v3555 = vpop.f32.mrb[0].mxu0
      %v3556 = vadd.f32 0.0, %v3555
      %v3557 = vpop.f32.mrb[0].mxu0
      %v3558 = vpop.f32.mrb[0].mxu0
      %v3559 = vadd.f32 0.0, %v3558
      %v3560 = vpop.f32.mrb[0].mxu0
      %3561 = vmatprep.mubr.bf16.mxu0 0
      %3562 = vmatmul.mubr.bf16.gmra.mrb[0].mxu0 %v3469
      %v3563 = vpop.f32.mrb[0].mxu0
      %v3564 = vadd.f32 0.0, %v3563
      %v3565 = vpop.f32.mrb[0].mxu0
      %v3566 = vpop.f32.mrb[0].mxu0
      %v3567 = vadd.f32 0.0, %v3566
      %v3568 = vpop.f32.mrb[0].mxu0
      %3569 = vmatprep.mubr.bf16.mxu0 0
      %3570 = vmatmul.mubr.bf16.gmra.mrb[0].mxu0 %v3472
      %v3571 = vpop.f32.mrb[0].mxu0
      %v3572 = vadd.f32 0.0, %v3571
      %v3573 = vpop.f32.mrb[0].mxu0
      %v3574 = vpop.f32.mrb[0].mxu0
      %v3575 = vadd.f32 0.0, %v3574
      %v3576 = vpop.f32.mrb[0].mxu0
      %3577 = vmatprep.mubr.bf16.mxu0 0
      %3578 = vmatmul.mubr.bf16.gmra.mrb[0].mxu0 %v3475
      %v3579 = vpop.f32.mrb[0].mxu0
      %v3580 = vadd.f32 0.0, %v3579
      %v3581 = vpop.f32.mrb[0].mxu0
      %v3582 = vpop.f32.mrb[0].mxu0
      %v3583 = vadd.f32 0.0, %v3582
      %v3584 = vpop.f32.mrb[0].mxu0
      %3585 = vmatprep.mubr.bf16.mxu0 0
      %3586 = vmatmul.mubr.bf16.gmra.mrb[0].mxu0 %v3478
      %v3587 = vpop.f32.mrb[0].mxu0
      %v3588 = vadd.f32 0.0, %v3587
      %v3589 = vpop.f32.mrb[0].mxu0
      %v3590 = vpop.f32.mrb[0].mxu0
      %v3591 = vadd.f32 0.0, %v3590
      %v3592 = vpop.f32.mrb[0].mxu0
      %3593 = vmatprep.mubr.bf16.mxu0 0
      %3594 = vmatmul.mubr.bf16.gmra.mrb[0].mxu0 %v3481
      %v3595 = vpop.f32.mrb[0].mxu0
      %v3596 = vadd.f32 0.0, %v3595
      %v3597 = vpop.f32.mrb[0].mxu0
      %v3598 = vpop.f32.mrb[0].mxu0
      %v3599 = vadd.f32 0.0, %v3598
      %v3600 = vpop.f32.mrb[0].mxu0
      %3601 = vmatprep.mubr.bf16.mxu0 0
      %3602 = vmatmul.mubr.bf16.gmra.mrb[0].mxu0 %v3484
      %v3603 = vpop.f32.mrb[0].mxu0
      %v3604 = vadd.f32 0.0, %v3603
      %v3605 = vpop.f32.mrb[0].mxu0
      %v3606 = vpop.f32.mrb[0].mxu0
      %v3607 = vadd.f32 0.0, %v3606
      %v3608 = vpop.f32.mrb[0].mxu0
      %3609 = vmatprep.mubr.bf16.mxu0 0
      %3610 = vmatmul.mubr.bf16.gmra.mrb[0].mxu0 %v3487
      %v3611 = vpop.f32.mrb[0].mxu0
      %v3612 = vadd.f32 0.0, %v3611
      %v3613 = vpop.f32.mrb[0].mxu0
      %v3614 = vpop.f32.mrb[0].mxu0
      %v3615 = vadd.f32 0.0, %v3614
      %v3616 = vpop.f32.mrb[0].mxu0
      %3617 = vmatprep.mubr.bf16.mxu0 0
      %3618 = vmatmul.mubr.bf16.gmra.mrb[0].mxu0 %v3490
      %v3619 = vpop.f32.mrb[0].mxu0
      %v3620 = vadd.f32 0.0, %v3619
      %v3621 = vpop.f32.mrb[0].mxu0
      %v3622 = vpop.f32.mrb[0].mxu0
      %v3623 = vadd.f32 0.0, %v3622
      %v3624 = vpop.f32.mrb[0].mxu0
      %3625 = vmatprep.mubr.bf16.mxu0 0
      %3626 = vmatmul.mubr.bf16.gmra.mrb[0].mxu0 %v3493
      %v3627 = vpop.f32.mrb[0].mxu0
      %v3628 = vadd.f32 0.0, %v3627
      %v3629 = vpop.f32.mrb[0].mxu0
      %v3630 = vpop.f32.mrb[0].mxu0
      %v3631 = vadd.f32 0.0, %v3630
      %v3632 = vpop.f32.mrb[0].mxu0
      %3633 = vmatprep.mubr.bf16.mxu0 0
      %3634 = vmatmul.mubr.bf16.gmra.mrb[0].mxu0 %v3496
      %v3635 = vpop.f32.mrb[0].mxu0
      %v3636 = vadd.f32 0.0, %v3635
      %v3637 = vpop.f32.mrb[0].mxu0
      %v3638 = vpop.f32.mrb[0].mxu0
      %v3639 = vadd.f32 0.0, %v3638
      %v3640 = vpop.f32.mrb[0].mxu0
      %3641 = vmatprep.mubr.bf16.mxu0 0
      %3642 = vmatmul.mubr.bf16.gmra.mrb[0].mxu0 %v3499
      %v3643 = vpop.f32.mrb[0].mxu0
      %v3644 = vadd.f32 0.0, %v3643
      %v3645 = vpop.f32.mrb[0].mxu0
      %v3646 = vpop.f32.mrb[0].mxu0
      %v3647 = vadd.f32 0.0, %v3646
      %v3648 = vpop.f32.mrb[0].mxu0
      %3649 = vmatprep.mubr.bf16.mxu0 0
      %3650 = vmatmul.mubr.bf16.gmra.mrb[0].mxu0 %v3502
      %v3651 = vpop.f32.mrb[0].mxu0
      %v3652 = vadd.f32 0.0, %v3651
      %v3653 = vpop.f32.mrb[0].mxu0
      %v3654 = vpop.f32.mrb[0].mxu0
      %v3655 = vadd.f32 0.0, %v3654
      %v3656 = vpop.f32.mrb[0].mxu0
      %3657 = vmatprep.mubr.bf16.mxu0 0
      %3658 = vmatmul.mubr.bf16.gmra.mrb[0].mxu0 %v3505
      %v3659 = vpop.f32.mrb[0].mxu0
      %v3660 = vadd.f32 0.0, %v3659
      %v3661 = vpop.f32.mrb[0].mxu0
      %v3662 = vpop.f32.mrb[0].mxu0
      %v3663 = vadd.f32 0.0, %v3662
      %v3664 = vpop.f32.mrb[0].mxu0
      %3665 = vmatprep.mubr.bf16.mxu0 0
      %3666 = vmatmul.mubr.bf16.gmra.mrb[0].mxu0 %v3508
      %v3667 = vpop.f32.mrb[0].mxu0
      %v3668 = vadd.f32 0.0, %v3667
      %v3669 = vpop.f32.mrb[0].mxu0
      %v3670 = vpop.f32.mrb[0].mxu0
      %v3671 = vadd.f32 0.0, %v3670
      %v3672 = vpop.f32.mrb[0].mxu0
      %3673 = vdwg.mxu0
      %v3674 = vld [vmem:[%s5] sm:$0x1]
      %v3676 = vlaneseq
      %v3677 = vshrl.u32 %v3676, 7
      %v3678 = vsub.s32 0, %v3677
      %v3679 = vrot.slane %v3674, %v3678
      %v3681 = vmul.f32 %v3548, %v3679
      %v3682 = vmul.f32 %v3551, %v3679
      %v3683 = vmul.f32 %v3556, %v3679
      %v3684 = vmul.f32 %v3559, %v3679
      %v3685 = vmul.f32 %v3564, %v3679
      %v3686 = vmul.f32 %v3567, %v3679
      %v3687 = vmul.f32 %v3572, %v3679
      %v3688 = vmul.f32 %v3575, %v3679
      %v3689 = vmul.f32 %v3580, %v3679
      %v3690 = vmul.f32 %v3583, %v3679
      %v3691 = vmul.f32 %v3588, %v3679
      %v3692 = vmul.f32 %v3591, %v3679
      %v3693 = vmul.f32 %v3596, %v3679
      %v3694 = vmul.f32 %v3599, %v3679
      %v3695 = vmul.f32 %v3604, %v3679
      %v3696 = vmul.f32 %v3607, %v3679
      %v3697 = vmul.f32 %v3612, %v3679
      %v3698 = vmul.f32 %v3615, %v3679
      %v3699 = vmul.f32 %v3620, %v3679
      %v3700 = vmul.f32 %v3623, %v3679
      %v3701 = vmul.f32 %v3628, %v3679
      %v3702 = vmul.f32 %v3631, %v3679
      %v3703 = vmul.f32 %v3636, %v3679
      %v3704 = vmul.f32 %v3639, %v3679
      %v3705 = vmul.f32 %v3644, %v3679
      %v3706 = vmul.f32 %v3647, %v3679
      %v3707 = vmul.f32 %v3652, %v3679
      %v3708 = vmul.f32 %v3655, %v3679
      %v3709 = vmul.f32 %v3660, %v3679
      %v3710 = vmul.f32 %v3663, %v3679
      %v3711 = vmul.f32 %v3668, %v3679
      %v3712 = vmul.f32 %v3671, %v3679
      %v3713 = vld [vmem:[%s6] sm:$0x1]
      %v3715 = vlaneseq
      %v3716 = vshrl.u32 %v3715, 7
      %v3717 = vsub.s32 0, %v3716
      %v3718 = vrot.slane %v3713, %v3717
      %v3720 = vadd.f32 %v3681, %v3718
      %v3721 = vadd.f32 %v3682, %v3718
      %v3722 = vadd.f32 %v3683, %v3718
      %v3723 = vadd.f32 %v3684, %v3718
      %v3724 = vadd.f32 %v3685, %v3718
      %v3725 = vadd.f32 %v3686, %v3718
      %v3726 = vadd.f32 %v3687, %v3718
      %v3727 = vadd.f32 %v3688, %v3718
      %v3728 = vadd.f32 %v3689, %v3718
      %v3729 = vadd.f32 %v3690, %v3718
      %v3730 = vadd.f32 %v3691, %v3718
      %v3731 = vadd.f32 %v3692, %v3718
      %v3732 = vadd.f32 %v3693, %v3718
      %v3733 = vadd.f32 %v3694, %v3718
      %v3734 = vadd.f32 %v3695, %v3718
      %v3735 = vadd.f32 %v3696, %v3718
      %v3736 = vadd.f32 %v3697, %v3718
      %v3737 = vadd.f32 %v3698, %v3718
      %v3738 = vadd.f32 %v3699, %v3718
      %v3739 = vadd.f32 %v3700, %v3718
      %v3740 = vadd.f32 %v3701, %v3718
      %v3741 = vadd.f32 %v3702, %v3718
      %v3742 = vadd.f32 %v3703, %v3718
      %v3743 = vadd.f32 %v3704, %v3718
      %v3744 = vadd.f32 %v3705, %v3718
      %v3745 = vadd.f32 %v3706, %v3718
      %v3746 = vadd.f32 %v3707, %v3718
      %v3747 = vadd.f32 %v3708, %v3718
      %v3748 = vadd.f32 %v3709, %v3718
      %v3749 = vadd.f32 %v3710, %v3718
      %v3750 = vadd.f32 %v3711, %v3718
      %v3751 = vadd.f32 %v3712, %v3718
      %3752 = vst.msk [vmem:[%s278] sm:$0xff] %vm280, %v3720
      %3753 = vst.msk [vmem:[%s278 + $0x8] sm:$0xff] %vm280, %v3721
      %3754 = vst.msk [vmem:[%s278 + $0x10] sm:$0xff] %vm280, %v3722
      %3755 = vst.msk [vmem:[%s278 + $0x18] sm:$0xff] %vm280, %v3723
      %3756 = vst.msk [vmem:[%s278 + $0x20] sm:$0xff] %vm280, %v3724
      %3757 = vst.msk [vmem:[%s278 + $0x28] sm:$0xff] %vm280, %v3725
      %3758 = vst.msk [vmem:[%s278 + $0x30] sm:$0xff] %vm280, %v3726
      %3759 = vst.msk [vmem:[%s278 + $0x38] sm:$0xff] %vm280, %v3727
      %3760 = vst.msk [vmem:[%s278 + $0x40] sm:$0xff] %vm280, %v3728
      %3761 = vst.msk [vmem:[%s278 + $0x48] sm:$0xff] %vm280, %v3729
      %3762 = vst.msk [vmem:[%s278 + $0x50] sm:$0xff] %vm280, %v3730
      %3763 = vst.msk [vmem:[%s278 + $0x58] sm:$0xff] %vm280, %v3731
      %3764 = vst.msk [vmem:[%s278 + $0x60] sm:$0xff] %vm280, %v3732
      %3765 = vst.msk [vmem:[%s278 + $0x68] sm:$0xff] %vm280, %v3733
      %3766 = vst.msk [vmem:[%s278 + $0x70] sm:$0xff] %vm280, %v3734
      %3767 = vst.msk [vmem:[%s278 + $0x78] sm:$0xff] %vm280, %v3735
      %3768 = vst.msk [vmem:[%s278 + $0x80] sm:$0xff] %vm280, %v3736
      %3769 = vst.msk [vmem:[%s278 + $0x88] sm:$0xff] %vm280, %v3737
      %3770 = vst.msk [vmem:[%s278 + $0x90] sm:$0xff] %vm280, %v3738
      %3771 = vst.msk [vmem:[%s278 + $0x98] sm:$0xff] %vm280, %v3739
      %3772 = vst.msk [vmem:[%s278 + $0xa0] sm:$0xff] %vm280, %v3740
      %3773 = vst.msk [vmem:[%s278 + $0xa8] sm:$0xff] %vm280, %v3741
      %3774 = vst.msk [vmem:[%s278 + $0xb0] sm:$0xff] %vm280, %v3742
      %3775 = vst.msk [vmem:[%s278 + $0xb8] sm:$0xff] %vm280, %v3743
      %3776 = vst.msk [vmem:[%s278 + $0xc0] sm:$0xff] %vm280, %v3744
      %3777 = vst.msk [vmem:[%s278 + $0xc8] sm:$0xff] %vm280, %v3745
      %3778 = vst.msk [vmem:[%s278 + $0xd0] sm:$0xff] %vm280, %v3746
      %3779 = vst.msk [vmem:[%s278 + $0xd8] sm:$0xff] %vm280, %v3747
      %3780 = vst.msk [vmem:[%s278 + $0xe0] sm:$0xff] %vm280, %v3748
      %3781 = vst.msk [vmem:[%s278 + $0xe8] sm:$0xff] %vm280, %v3749
      %3782 = vst.msk [vmem:[%s278 + $0xf0] sm:$0xff] %vm280, %v3750
      %3783 = vst.msk [vmem:[%s278 + $0xf8] sm:$0xff] %vm280, %v3751
      %p3784 = scmp.lt.s32.totalorder %s18, 1
      %s3785 = scalar_select %p3784, %s18, 1
      %s3786 = smul.addr %s3785, 32
      %s3787 = smul.addr %s3786, 8
      %s3788 = scalar_lea.vmem %s7, %s3787
      // Predicated region
      $region49: #{tpu_custom_call.1} parent=47 // pred_check
        %p3789 = pneg %p188
      $region50: #{tpu_custom_call.1} parent=47 // pred_check_branch
        %3791 = sbr.rel (%p3789) target = $region52
      $region51: #{tpu_custom_call.1} parent=47 // pred_region
        _
      $region52: #{tpu_custom_call.1} parent=47 // pred_fallthru
        _
    $region48: #{tpu_custom_call.1} parent=5 // pred_fallthru
      _
    %p3792 = scmp.le.s32.totalorder 2, %s13
    // Predicated region
    $region53: #{tpu_custom_call.1} parent=5 // pred_check
      %p3793 = pneg %p3792
    $region54: #{tpu_custom_call.1} parent=5 // pred_check_branch
      %3795 = sbr.rel (%p3793) target = $region56
    $region55: #{tpu_custom_call.1} parent=5 // pred_region
      %s3796 = ssub.s32 %s13, 2
      // Predicated region
      $region57: #{tpu_custom_call.1} parent=55 // pred_check
        %p3797 = pneg %p194
      $region58: #{tpu_custom_call.1} parent=55 // pred_check_branch
        %3799 = sbr.rel (%p3797) target = $region60
      $region59: #{tpu_custom_call.1} parent=55 // pred_region
        %p3800 = scmp.lt.s32.totalorder %s19, 1
        %s3801 = scalar_select %p3800, %s19, 1
        %s3802 = smul.addr %s3801, 32
        %s3803 = smul.addr %s3802, 8
        %s3804 = scalar_lea.vmem %s7, %s3803
      $region60: #{tpu_custom_call.1} parent=55 // pred_fallthru
        _
    $region56: #{tpu_custom_call.1} parent=5 // pred_fallthru
      _
  $region6: #{tpu_custom_call.1} parent=0 // loop_footer
    %s17 = sadd.s32 1, %s13
  $region7: #{tpu_custom_call.1} parent=0 // loop_footer_branch
    %12 = sbr.rel target = $region3
  $region8: #{tpu_custom_call.1} parent=0 // loop_exit
    _

</llo_original>
